<compile_context>
chip_gen: v7x
topology: tpu7x:2x2x1
jax: 0.10.0
libtpu: 0.0.40
codegen_flags: <defaults>
</compile_context>

<pallas_src>
import math

import jax
import jax.numpy as jnp
from jax import lax
from jax.experimental import pallas as pl
from jax.experimental.pallas import tpu as pltpu

EPS = 1e-15
MU = 0.01          # rewiring gradient step (reference value)
LAMBDA_REG = 2.0   # final value of lambdaReg in dense_mincut_rewiring


# ----------------------------------------------------------------------------
# Pallas kernel: full GAPNet forward for a dense batch of graphs.
# ----------------------------------------------------------------------------
def gapnet_kernel(
    x_ref, adj_ref, adjt_ref, mask_ref,
    w_lin1, b_lin1,
    w_pool1, b_pool1,
    w1_rel, b1_rel, w1_root,
    w_pool2, b_pool2,
    w2_rel, b2_rel, w2_root,
    w_lin2, b_lin2,
    w_lin3, b_lin3,
    logits_ref, mincut_ref, ortho_ref,
):
    f32 = jnp.float32
    bf16 = jnp.bfloat16
    B, N, _ = adj_ref.shape
    K = w_pool2.shape[1]
    H = w_lin1.shape[1]

    def eye(n):
        return (lax.broadcasted_iota(jnp.int32, (n, n), 0)
                == lax.broadcasted_iota(jnp.int32, (n, n), 1)).astype(f32)

    eye_n = eye(N)
    eye_k = eye(K)
    inv_sqrt_n = 1.0 / math.sqrt(N)
    inv_norm_ik = 1.0 / math.sqrt(K)   # 1 / ||I_K||_F
    sqrt2 = math.sqrt(2.0)

    # --- bf16 MXU matmul helpers (f32 accumulation) --------------------------
    def mm(a, w):      # activation @ weight (weight already bf16)
        return jnp.dot(a.astype(bf16), w, preferred_element_type=f32)

    def amm(a, b):     # activation @ activation
        return jnp.dot(a.astype(bf16), b.astype(bf16), preferred_element_type=f32)

    def att(a, b):     # a^T @ b, contracting the node axis (axis 0 of both)
        return lax.dot_general(a.astype(bf16), b.astype(bf16),
                               (((0,), (0,)), ((), ())),
                               preferred_element_type=f32)

    def softmax_rows(z):
        z = z - jnp.max(z, axis=-1, keepdims=True)
        e = jnp.exp(z)
        return e * pl.reciprocal(jnp.sum(e, axis=-1, keepdims=True), approx=True)

    def softmax_cols(z):
        z = z - jnp.max(z, axis=0, keepdims=True)
        e = jnp.exp(z)
        return e * pl.reciprocal(jnp.sum(e, axis=0, keepdims=True), approx=True)

    # --- hoisted node-wise projections: fat matmuls over all B*N nodes -------
    h_all = mm(x_ref[...], w_lin1[...]) + b_lin1[...]             # lin1        (B*N, H)
    s1_all = softmax_rows(mm(h_all, w_pool1[...]) + b_pool1[...])  # pool1 softmax (B*N, 2)
    hrel_all = mm(h_all, w1_rel[...])                             # conv1 rel    (B*N, H)
    hroot_all = mm(h_all, w1_root[...])                           # conv1 root   (B*N, H)

    # hoisted approximate Fiedler vector: +1/sqrt(N) if argmax cluster 0 else -1/sqrt(N)
    # [+1, -1] lane selector avoids width-1 lane slices.
    sign2 = jnp.where(lax.broadcasted_iota(jnp.int32, (1, 2), 1) == 0,
                      1.0, -1.0).astype(f32)
    diff_all = jnp.sum(s1_all * sign2, axis=-1, keepdims=True)    # s[:,0]-s[:,1] (B*N,1)
    f_all = jnp.where(diff_all >= 0.0, inv_sqrt_n, -inv_sqrt_n).astype(f32)

    row_iota = lax.broadcasted_iota(jnp.int32, (B, 1), 0)
    mincut_acc = jnp.zeros((1, 1), f32)
    ortho_acc = jnp.zeros((1, 1), f32)
    xs_acc = jnp.zeros((B, H), f32)   # per-graph readout rows; head applied after loop

    # B is tiny -> static unroll; every op below is clean 2-D tile math.
    for b in range(B):
        sl = slice(b * N, (b + 1) * N)
        adjb = adj_ref[b]                    # (N, N) original dense adjacency
        adjbt = adjt_ref[b]                  # (N, N) its transpose (from wrapper)
        mb = mask_ref[b]                     # (N, 1) float node mask
        s1 = s1_all[sl, :]                   # (N, 2) softmaxed pool1 assignments
        f_col = f_all[sl, :]                 # (N, 1) approximate Fiedler vector

        # ============ dense_mincut_rewiring (derivative='laplacian') =========
        # TODO(synk): only the 'laplacian' derivative branch is implemented; the
        # 'normalized'/'normalizedv2' variants of the reference are not ported.
        f_row = jnp.sum(eye_n * f_col, axis=0, keepdims=True)      # (1,N), no transpose op
        outer = f_col * f_row                                      # f f^T   (N,N)
        fsq_col = f_col * f_col
        fsq_row = f_row * f_row
        der = fsq_col - outer                                      # d lambda2 / dA
        der_t = fsq_row - outer                                    # its transpose

        # fiedler value: N * | f^T L f / (f^T L_complete f + EPS) |
        d_flat = jnp.sum(adjb, axis=1, keepdims=True)              # (N,1) degrees
        num = (jnp.sum(d_flat * fsq_col, keepdims=True)
               - jnp.sum(adjb * outer, keepdims=True))
        sum_f = jnp.sum(f_col, keepdims=True)
        sum_f2 = jnp.sum(fsq_col, keepdims=True)
        den = N * sum_f2 - sum_f * sum_f
        fval = N * jnp.abs(num / (den + EPS))                      # (1,1)
        c = 2.0 * LAMBDA_REG * fval

        # 5 projected-gradient rewiring steps. dJ is symmetric, so Ac^T is
        # carried alongside Ac (column softmax) -> no in-kernel transposes.
        ac = adjb
        act = adjbt
        for _ in range(5):
            p = 2.0 * (ac - adjb) + c * der
            pt = 2.0 * (act - adjbt) + c * der_t
            dj = p + pt - p * eye_n
            ac = softmax_rows(ac - MU * dj) * adjb
            act = softmax_cols(act - MU * dj) * adjbt

        # rewiring losses (k=2 clusters, unmasked s1, original adjacency)
        as1 = amm(adjb, s1)                                        # (N,2)
        mincut_num1 = jnp.sum(as1 * s1, keepdims=True)             # tr(s^T A s)
        mincut_den1 = jnp.sum(d_flat * jnp.sum(s1 * s1, axis=1, keepdims=True),
                              keepdims=True)                       # tr(s^T D s)
        mincut_acc = mincut_acc - mincut_num1 / mincut_den1

        ss1 = att(s1, s1)                                          # (2,2)
        tr1 = jnp.sum(s1 * s1, keepdims=True)                      # tr(s^T s)
        # ||ss/||ss|| - I_2/sqrt(2)||_F^2 == 2 - sqrt(2)*tr(ss)/||ss||_F
        ortho1_sq = 2.0 - sqrt2 * tr1 * lax.rsqrt(jnp.sum(ss1 * ss1, keepdims=True))
        ortho_acc = ortho_acc + jnp.sqrt(jnp.maximum(ortho1_sq, 0.0))

        # ============ conv1 (DenseGraphConv, aggr='add') on rewired adjacency
        h1 = amm(ac, hrel_all[sl, :]) + hroot_all[sl, :] + b1_rel[...]   # (N,H)

        # ============ pool2 + dense_mincut_pool ===============================
        s2 = softmax_rows(mm(h1, w_pool2[...]) + b_pool2[...])     # (N,K)
        xm = h1 * mb
        sm = s2 * mb

        out = att(sm, xm)                                          # (K,H)  s^T x
        sa = att(sm, ac)                                           # (K,N)  s^T A
        out_adj = amm(sa, sm)                                      # (K,K)  s^T A s

        mincut_num2 = jnp.sum(out_adj * eye_k, keepdims=True)
        d_flat2 = jnp.sum(ac, axis=1, keepdims=True) + EPS         # (N,1)
        mincut_den2 = jnp.sum(d_flat2 * jnp.sum(sm * sm, axis=1, keepdims=True),
                              keepdims=True)
        mincut_acc = mincut_acc - mincut_num2 / mincut_den2

        ss2 = att(sm, sm)                                          # (K,K)
        diff2 = (ss2 * lax.rsqrt(jnp.sum(ss2 * ss2, keepdims=True))
                 - eye_k * inv_norm_ik)
        ortho_acc = ortho_acc + jnp.sqrt(jnp.sum(diff2 * diff2, keepdims=True))

        # zero diagonal + symmetric degree normalization of pooled adjacency,
        # with the D^-1/2 scalings folded into conv2's aggregation matmul.
        oa = out_adj * (1.0 - eye_k)
        inv_d = lax.rsqrt(jnp.sum(oa, axis=1, keepdims=True) + EPS)   # (K,1)

        # ============ conv2 ===================================================
        orel = mm(out, w2_rel[...])                                # (K,H)
        oroot = mm(out, w2_root[...])                              # (K,H)
        h2 = amm(oa * inv_d, orel * inv_d) + oroot + b2_rel[...]   # (K,H)

        # ============ readout (sum over clusters) =============================
        xs = jnp.sum(h2, axis=0, keepdims=True)                    # (1,H)
        xs_acc = xs_acc + jnp.where(row_iota == b, xs, 0.0)

    # ============ MLP head + log_softmax, once for the whole batch ============
    z2 = jnp.maximum(mm(xs_acc, w_lin2[...]) + b_lin2[...], 0.0)   # (B,H)
    z3 = mm(z2, w_lin3[...]) + b_lin3[...]                         # (B,O)
    z3 = z3 - jnp.max(z3, axis=-1, keepdims=True)
    logits_ref[...] = z3 - jnp.log(jnp.sum(jnp.exp(z3), axis=-1, keepdims=True))
    mincut_ref[...] = mincut_acc * (1.0 / B)
    ortho_ref[...] = ortho_acc * (1.0 / B)


# ----------------------------------------------------------------------------
# Plain-JAX glue: to_dense_batch / to_dense_adj equivalents (scatter only).
# ----------------------------------------------------------------------------
def to_dense_inputs(x, edge_index, batch, num_graphs, max_nodes):
    n = x.shape[0]
    counts = jnp.zeros((num_graphs,), jnp.int32).at[batch].add(1)
    starts = jnp.concatenate(
        [jnp.zeros((1,), jnp.int32), jnp.cumsum(counts)[:-1]]).astype(jnp.int32)
    pos = jnp.arange(n, dtype=jnp.int32) - starts[batch]

    x_dense = jnp.zeros((num_graphs, max_nodes, x.shape[1]), x.dtype).at[batch, pos].set(x)
    mask = jnp.zeros((num_graphs, max_nodes), jnp.float32).at[batch, pos].set(1.0)

    src, dst = edge_index[0], edge_index[1]
    adj = jnp.zeros((num_graphs, max_nodes, max_nodes), x.dtype).at[
        batch[src], pos[src], pos[dst]].add(1.0)
    return x_dense, adj, mask


def init_params(key, in_channels, hidden, out_channels, num_centers1=2, num_centers2=16):
    ks = jax.random.split(key, 16)

    def w(k, shape, scale=0.1):
        return (scale * jax.random.normal(k, shape)).astype(jnp.float32)

    return dict(
        w_lin1=w(ks[0], (in_channels, hidden)), b_lin1=w(ks[1], (1, hidden), 0.01),
        w_pool1=w(ks[2], (hidden, num_centers1)), b_pool1=w(ks[3], (1, num_centers1), 0.01),
        w1_rel=w(ks[4], (hidden, hidden)), b1_rel=w(ks[5], (1, hidden), 0.01),
        w1_root=w(ks[6], (hidden, hidden)),
        w_pool2=w(ks[7], (hidden, num_centers2)), b_pool2=w(ks[8], (1, num_centers2), 0.01),
        w2_rel=w(ks[9], (hidden, hidden)), b2_rel=w(ks[10], (1, hidden), 0.01),
        w2_root=w(ks[11], (hidden, hidden)),
        w_lin2=w(ks[12], (hidden, hidden)), b_lin2=w(ks[13], (1, hidden), 0.01),
        w_lin3=w(ks[14], (hidden, out_channels)), b_lin3=w(ks[15], (1, out_channels), 0.01),
    )


def gapnet_forward(x_dense, adj, mask, params):
    B, N, Fin = x_dense.shape
    O = params["w_lin3"].shape[1]
    f32, bf16 = jnp.float32, jnp.bfloat16

    inputs = [
        x_dense.reshape(B * N, Fin).astype(bf16),        # flattened node features
        adj.astype(f32),
        jnp.swapaxes(adj, 1, 2).astype(f32),             # adj^T keeps kernel transpose-free
        mask[..., None].astype(f32),
        params["w_lin1"].astype(bf16), params["b_lin1"],
        params["w_pool1"].astype(bf16), params["b_pool1"],
        params["w1_rel"].astype(bf16), params["b1_rel"], params["w1_root"].astype(bf16),
        params["w_pool2"].astype(bf16), params["b_pool2"],
        params["w2_rel"].astype(bf16), params["b2_rel"], params["w2_root"].astype(bf16),
        params["w_lin2"].astype(bf16), params["b_lin2"],
        params["w_lin3"].astype(bf16), params["b_lin3"],
    ]

    vmem = pl.BlockSpec(memory_space=pltpu.MemorySpace.VMEM)
    logits, mc, orth = pl.pallas_call(
        gapnet_kernel,
        out_shape=(
            jax.ShapeDtypeStruct((B, O), jnp.float32),
            jax.ShapeDtypeStruct((1, 1), jnp.float32),
            jax.ShapeDtypeStruct((1, 1), jnp.float32),
        ),
        in_specs=[vmem] * len(inputs),
        out_specs=(vmem, vmem, vmem),
    )(*inputs)

    # GAPNet.forward returns (log_softmax(x), mincut_loss1+2, ortho_loss1+2)
    return logits, mc[0, 0], orth[0, 0]


if __name__ == "__main__":
    in_channels, hidden, out_channels = 4, 32, 8
    num_graphs, max_nodes = 2, 16
    n0, n1 = 12, 16  # nodes per graph (unequal -> exercises the mask)

    key = jax.random.PRNGKey(0)
    k_x, k_p = jax.random.split(key)

    num_nodes = n0 + n1
    x = jax.random.normal(k_x, (num_nodes, in_channels), jnp.float32)
    batch = jnp.concatenate(
        [jnp.zeros((n0,), jnp.int32), jnp.ones((n1,), jnp.int32)])

    # deterministic ring graphs (bidirectional edges)
    def ring_edges(start, n):
        src = jnp.arange(n, dtype=jnp.int32) + start
        dst = (jnp.arange(n, dtype=jnp.int32) + 1) % n + start
        return jnp.concatenate([src, dst]), jnp.concatenate([dst, src])

    s0, d0 = ring_edges(0, n0)
    s1, d1 = ring_edges(n0, n1)
    edge_index = jnp.stack(
        [jnp.concatenate([s0, s1]), jnp.concatenate([d0, d1])]).astype(jnp.int32)

    params = init_params(k_p, in_channels, hidden, out_channels)
    x_dense, adj, mask = to_dense_inputs(x, edge_index, batch, num_graphs, max_nodes)

    log_probs, mincut_loss, ortho_loss = gapnet_forward(x_dense, adj, mask, params)
    jax.block_until_ready((log_probs, mincut_loss, ortho_loss))
    print("KERNEL_OK")
</pallas_src>

<mosaic_0001>
module attributes {stable_mosaic.version = 11 : i64} {
  func.func @gapnet_kernel(%arg0: memref<32x4xbf16, #tpu.memory_space<vmem>>, %arg1: memref<2x16x16xf32, #tpu.memory_space<vmem>>, %arg2: memref<2x16x16xf32, #tpu.memory_space<vmem>>, %arg3: memref<2x16x1xf32, #tpu.memory_space<vmem>>, %arg4: memref<4x32xbf16, #tpu.memory_space<vmem>>, %arg5: memref<1x32xf32, #tpu.memory_space<vmem>>, %arg6: memref<32x2xbf16, #tpu.memory_space<vmem>>, %arg7: memref<1x2xf32, #tpu.memory_space<vmem>>, %arg8: memref<32x32xbf16, #tpu.memory_space<vmem>>, %arg9: memref<1x32xf32, #tpu.memory_space<vmem>>, %arg10: memref<32x32xbf16, #tpu.memory_space<vmem>>, %arg11: memref<32x16xbf16, #tpu.memory_space<vmem>>, %arg12: memref<1x16xf32, #tpu.memory_space<vmem>>, %arg13: memref<32x32xbf16, #tpu.memory_space<vmem>>, %arg14: memref<1x32xf32, #tpu.memory_space<vmem>>, %arg15: memref<32x32xbf16, #tpu.memory_space<vmem>>, %arg16: memref<32x32xbf16, #tpu.memory_space<vmem>>, %arg17: memref<1x32xf32, #tpu.memory_space<vmem>>, %arg18: memref<32x8xbf16, #tpu.memory_space<vmem>>, %arg19: memref<1x8xf32, #tpu.memory_space<vmem>>, %arg20: memref<2x8xf32, #tpu.memory_space<vmem>>, %arg21: memref<1x1xf32, #tpu.memory_space<vmem>>, %arg22: memref<1x1xf32, #tpu.memory_space<vmem>>) attributes {dimension_semantics = [], scalar_prefetch = 0 : i64, scratch_operands = 0 : i64, tpu.core_type = #tpu.core_type<tc>} {
    %0 = tpu.iota {dimensions = array<i32: 0>} : vector<16x16xi32>
    %1 = tpu.iota {dimensions = array<i32: 1>} : vector<16x16xi32>
    %2 = arith.cmpi eq, %0, %1 : vector<16x16xi32>
    %3 = arith.extui %2 : vector<16x16xi1> to vector<16x16xi32>
    %4 = arith.sitofp %3 : vector<16x16xi32> to vector<16x16xf32>
    %5 = tpu.iota {dimensions = array<i32: 0>} : vector<16x16xi32>
    %6 = tpu.iota {dimensions = array<i32: 1>} : vector<16x16xi32>
    %7 = arith.cmpi eq, %5, %6 : vector<16x16xi32>
    %8 = arith.extui %7 : vector<16x16xi1> to vector<16x16xi32>
    %9 = arith.sitofp %8 : vector<16x16xi32> to vector<16x16xf32>
    %c0 = arith.constant 0 : index
    %c0_0 = arith.constant 0 : index
    %10 = vector.load %arg0[%c0, %c0_0] : memref<32x4xbf16, #tpu.memory_space<vmem>>, vector<32x4xbf16>
    %c0_1 = arith.constant 0 : index
    %c0_2 = arith.constant 0 : index
    %11 = vector.load %arg4[%c0_1, %c0_2] : memref<4x32xbf16, #tpu.memory_space<vmem>>, vector<4x32xbf16>
    %cst = arith.constant dense<0.000000e+00> : vector<32x32xf32>
    %12 = tpu.matmul %10, %11, %cst {dimension_numbers = #tpu.dot_dimension_numbers<[1], [0], [0], [1], [0, 0, 1, 1], [], []>} : vector<32x4xbf16>, vector<4x32xbf16>, vector<32x32xf32> -> vector<32x32xf32>
    %c0_3 = arith.constant 0 : index
    %c0_4 = arith.constant 0 : index
    %13 = vector.load %arg5[%c0_3, %c0_4] : memref<1x32xf32, #tpu.memory_space<vmem>>, vector<1x32xf32>
    %14 = vector.broadcast %13 : vector<1x32xf32> to vector<32x32xf32>
    %15 = arith.addf %12, %14 : vector<32x32xf32>
    %c0_5 = arith.constant 0 : index
    %c0_6 = arith.constant 0 : index
    %16 = vector.load %arg6[%c0_5, %c0_6] : memref<32x2xbf16, #tpu.memory_space<vmem>>, vector<32x2xbf16>
    %17 = arith.truncf %15 : vector<32x32xf32> to vector<32x32xbf16>
    %cst_7 = arith.constant dense<0.000000e+00> : vector<32x2xf32>
    %18 = tpu.matmul %17, %16, %cst_7 {dimension_numbers = #tpu.dot_dimension_numbers<[1], [0], [0], [1], [0, 0, 1, 1], [], []>} : vector<32x32xbf16>, vector<32x2xbf16>, vector<32x2xf32> -> vector<32x2xf32>
    %c0_8 = arith.constant 0 : index
    %c0_9 = arith.constant 0 : index
    %19 = vector.load %arg7[%c0_8, %c0_9] : memref<1x2xf32, #tpu.memory_space<vmem>>, vector<1x2xf32>
    %20 = vector.broadcast %19 : vector<1x2xf32> to vector<32x2xf32>
    %21 = arith.addf %18, %20 : vector<32x2xf32>
    %cst_10 = arith.constant dense<0xFF800000> : vector<32xf32>
    %22 = vector.multi_reduction <maximumf>, %21, %cst_10 [1] : vector<32x2xf32> to vector<32xf32>
    %23 = vector.shape_cast %22 : vector<32xf32> to vector<32x1xf32>
    %24 = vector.broadcast %23 : vector<32x1xf32> to vector<32x2xf32>
    %25 = arith.subf %21, %24 : vector<32x2xf32>
    %26 = math.exp %25 : vector<32x2xf32>
    %cst_11 = arith.constant dense<0.000000e+00> : vector<32xf32>
    %27 = vector.multi_reduction <add>, %26, %cst_11 [1] : vector<32x2xf32> to vector<32xf32>
    %28 = vector.shape_cast %27 : vector<32xf32> to vector<32x1xf32>
    %29 = tpu.reciprocal %28 {approx = true} : vector<32x1xf32> -> vector<32x1xf32>
    %30 = vector.broadcast %29 : vector<32x1xf32> to vector<32x2xf32>
    %31 = arith.mulf %26, %30 : vector<32x2xf32>
    %c0_12 = arith.constant 0 : index
    %c0_13 = arith.constant 0 : index
    %32 = vector.load %arg8[%c0_12, %c0_13] : memref<32x32xbf16, #tpu.memory_space<vmem>>, vector<32x32xbf16>
    %33 = arith.truncf %15 : vector<32x32xf32> to vector<32x32xbf16>
    %cst_14 = arith.constant dense<0.000000e+00> : vector<32x32xf32>
    %34 = tpu.matmul %33, %32, %cst_14 {dimension_numbers = #tpu.dot_dimension_numbers<[1], [0], [0], [1], [0, 0, 1, 1], [], []>} : vector<32x32xbf16>, vector<32x32xbf16>, vector<32x32xf32> -> vector<32x32xf32>
    %c0_15 = arith.constant 0 : index
    %c0_16 = arith.constant 0 : index
    %35 = vector.load %arg10[%c0_15, %c0_16] : memref<32x32xbf16, #tpu.memory_space<vmem>>, vector<32x32xbf16>
    %36 = arith.truncf %15 : vector<32x32xf32> to vector<32x32xbf16>
    %cst_17 = arith.constant dense<0.000000e+00> : vector<32x32xf32>
    %37 = tpu.matmul %36, %35, %cst_17 {dimension_numbers = #tpu.dot_dimension_numbers<[1], [0], [0], [1], [0, 0, 1, 1], [], []>} : vector<32x32xbf16>, vector<32x32xbf16>, vector<32x32xf32> -> vector<32x32xf32>
    %38 = tpu.iota {dimensions = array<i32: 1>} : vector<1x2xi32>
    %c0_i32 = arith.constant 0 : i32
    %39 = vector.broadcast %c0_i32 : i32 to vector<1x2xi32>
    %40 = arith.cmpi eq, %38, %39 : vector<1x2xi32>
    %cst_18 = arith.constant 1.000000e+00 : f32
    %cst_19 = arith.constant -1.000000e+00 : f32
    %41 = vector.broadcast %cst_18 : f32 to vector<1x2xf32>
    %42 = vector.broadcast %cst_19 : f32 to vector<1x2xf32>
    %43 = arith.select %40, %41, %42 : vector<1x2xi1>, vector<1x2xf32>
    %44 = vector.broadcast %43 : vector<1x2xf32> to vector<32x2xf32>
    %45 = arith.mulf %31, %44 : vector<32x2xf32>
    %cst_20 = arith.constant dense<0.000000e+00> : vector<32xf32>
    %46 = vector.multi_reduction <add>, %45, %cst_20 [1] : vector<32x2xf32> to vector<32xf32>
    %47 = vector.shape_cast %46 : vector<32xf32> to vector<32x1xf32>
    %cst_21 = arith.constant 0.000000e+00 : f32
    %48 = vector.broadcast %cst_21 : f32 to vector<32x1xf32>
    %49 = arith.cmpf oge, %47, %48 : vector<32x1xf32>
    %cst_22 = arith.constant 2.500000e-01 : f32
    %cst_23 = arith.constant -2.500000e-01 : f32
    %50 = vector.broadcast %cst_22 : f32 to vector<32x1xf32>
    %51 = vector.broadcast %cst_23 : f32 to vector<32x1xf32>
    %52 = arith.select %49, %50, %51 : vector<32x1xi1>, vector<32x1xf32>
    %53 = tpu.iota {dimensions = array<i32: 0>} : vector<2x1xi32>
    %cst_24 = arith.constant 0.000000e+00 : f32
    %54 = vector.broadcast %cst_24 : f32 to vector<1x1xf32>
    %cst_25 = arith.constant 0.000000e+00 : f32
    %55 = vector.broadcast %cst_25 : f32 to vector<1x1xf32>
    %cst_26 = arith.constant 0.000000e+00 : f32
    %56 = vector.broadcast %cst_26 : f32 to vector<2x32xf32>
    %c0_27 = arith.constant 0 : index
    %c0_28 = arith.constant 0 : index
    %c0_29 = arith.constant 0 : index
    %57 = vector.load %arg1[%c0_27, %c0_28, %c0_29] : memref<2x16x16xf32, #tpu.memory_space<vmem>>, vector<1x16x16xf32>
    %58 = vector.shape_cast %57 : vector<1x16x16xf32> to vector<16x16xf32>
    %c0_30 = arith.constant 0 : index
    %c0_31 = arith.constant 0 : index
    %c0_32 = arith.constant 0 : index
    %59 = vector.load %arg2[%c0_30, %c0_31, %c0_32] : memref<2x16x16xf32, #tpu.memory_space<vmem>>, vector<1x16x16xf32>
    %60 = vector.shape_cast %59 : vector<1x16x16xf32> to vector<16x16xf32>
    %c0_33 = arith.constant 0 : index
    %c0_34 = arith.constant 0 : index
    %c0_35 = arith.constant 0 : index
    %61 = vector.load %arg3[%c0_33, %c0_34, %c0_35] : memref<2x16x1xf32, #tpu.memory_space<vmem>>, vector<1x16x1xf32>
    %62 = vector.shape_cast %61 : vector<1x16x1xf32> to vector<16x1xf32>
    %63 = vector.extract_strided_slice %31 {offsets = [0, 0], sizes = [16, 2], strides = [1, 1]} : vector<32x2xf32> to vector<16x2xf32>
    %64 = vector.extract_strided_slice %52 {offsets = [0, 0], sizes = [16, 1], strides = [1, 1]} : vector<32x1xf32> to vector<16x1xf32>
    %65 = vector.broadcast %64 : vector<16x1xf32> to vector<16x16xf32>
    %66 = arith.mulf %4, %65 : vector<16x16xf32>
    %cst_36 = arith.constant dense<0.000000e+00> : vector<16xf32>
    %67 = vector.multi_reduction <add>, %66, %cst_36 [0] : vector<16x16xf32> to vector<16xf32>
    %68 = vector.shape_cast %67 : vector<16xf32> to vector<1x16xf32>
    %69 = vector.broadcast %64 : vector<16x1xf32> to vector<16x16xf32>
    %70 = vector.broadcast %68 : vector<1x16xf32> to vector<16x16xf32>
    %71 = arith.mulf %69, %70 : vector<16x16xf32>
    %72 = arith.mulf %64, %64 : vector<16x1xf32>
    %73 = arith.mulf %68, %68 : vector<1x16xf32>
    %74 = vector.broadcast %72 : vector<16x1xf32> to vector<16x16xf32>
    %75 = arith.subf %74, %71 : vector<16x16xf32>
    %76 = vector.broadcast %73 : vector<1x16xf32> to vector<16x16xf32>
    %77 = arith.subf %76, %71 : vector<16x16xf32>
    %cst_37 = arith.constant dense<0.000000e+00> : vector<16xf32>
    %78 = vector.multi_reduction <add>, %58, %cst_37 [1] : vector<16x16xf32> to vector<16xf32>
    %79 = vector.shape_cast %78 : vector<16xf32> to vector<16x1xf32>
    %80 = arith.mulf %79, %72 : vector<16x1xf32>
    %81 = vector.shape_cast %80 : vector<16x1xf32> to vector<1x16x1xf32>
    %cst_38 = arith.constant dense<0.000000e+00> : vector<1xf32>
    %82 = vector.multi_reduction <add>, %81, %cst_38 [1, 2] : vector<1x16x1xf32> to vector<1xf32>
    %83 = vector.shape_cast %82 : vector<1xf32> to vector<1x1x1xf32>
    %84 = vector.extract %83[0, 0, 0] : f32 from vector<1x1x1xf32>
    %85 = vector.broadcast %84 : f32 to vector<1x1xf32>
    %86 = arith.mulf %58, %71 : vector<16x16xf32>
    %87 = vector.shape_cast %86 : vector<16x16xf32> to vector<1x16x16xf32>
    %cst_39 = arith.constant dense<0.000000e+00> : vector<1xf32>
    %88 = vector.multi_reduction <add>, %87, %cst_39 [1, 2] : vector<1x16x16xf32> to vector<1xf32>
    %89 = vector.shape_cast %88 : vector<1xf32> to vector<1x1x1xf32>
    %90 = vector.extract %89[0, 0, 0] : f32 from vector<1x1x1xf32>
    %91 = vector.broadcast %90 : f32 to vector<1x1xf32>
    %92 = arith.subf %85, %91 : vector<1x1xf32>
    %93 = vector.shape_cast %64 : vector<16x1xf32> to vector<1x16x1xf32>
    %cst_40 = arith.constant dense<0.000000e+00> : vector<1xf32>
    %94 = vector.multi_reduction <add>, %93, %cst_40 [1, 2] : vector<1x16x1xf32> to vector<1xf32>
    %95 = vector.shape_cast %94 : vector<1xf32> to vector<1x1x1xf32>
    %96 = vector.extract %95[0, 0, 0] : f32 from vector<1x1x1xf32>
    %97 = vector.broadcast %96 : f32 to vector<1x1xf32>
    %98 = vector.shape_cast %72 : vector<16x1xf32> to vector<1x16x1xf32>
    %cst_41 = arith.constant dense<0.000000e+00> : vector<1xf32>
    %99 = vector.multi_reduction <add>, %98, %cst_41 [1, 2] : vector<1x16x1xf32> to vector<1xf32>
    %100 = vector.shape_cast %99 : vector<1xf32> to vector<1x1x1xf32>
    %101 = vector.extract %100[0, 0, 0] : f32 from vector<1x1x1xf32>
    %102 = vector.broadcast %101 : f32 to vector<1x1xf32>
    %cst_42 = arith.constant 1.600000e+01 : f32
    %103 = vector.broadcast %cst_42 : f32 to vector<1x1xf32>
    %104 = arith.mulf %103, %102 : vector<1x1xf32>
    %105 = arith.mulf %97, %97 : vector<1x1xf32>
    %106 = arith.subf %104, %105 : vector<1x1xf32>
    %cst_43 = arith.constant 1.000000e-15 : f32
    %107 = vector.broadcast %cst_43 : f32 to vector<1x1xf32>
    %108 = arith.addf %106, %107 : vector<1x1xf32>
    %109 = arith.divf %92, %108 : vector<1x1xf32>
    %110 = math.absf %109 : vector<1x1xf32>
    %cst_44 = arith.constant 1.600000e+01 : f32
    %111 = vector.broadcast %cst_44 : f32 to vector<1x1xf32>
    %112 = arith.mulf %111, %110 : vector<1x1xf32>
    %cst_45 = arith.constant 4.000000e+00 : f32
    %113 = vector.broadcast %cst_45 : f32 to vector<1x1xf32>
    %114 = arith.mulf %113, %112 : vector<1x1xf32>
    %115 = arith.subf %58, %58 : vector<16x16xf32>
    %cst_46 = arith.constant 2.000000e+00 : f32
    %116 = vector.broadcast %cst_46 : f32 to vector<16x16xf32>
    %117 = arith.mulf %116, %115 : vector<16x16xf32>
    %118 = vector.broadcast %114 : vector<1x1xf32> to vector<16x16xf32>
    %119 = arith.mulf %118, %75 : vector<16x16xf32>
    %120 = arith.addf %117, %119 : vector<16x16xf32>
    %121 = arith.subf %60, %60 : vector<16x16xf32>
    %cst_47 = arith.constant 2.000000e+00 : f32
    %122 = vector.broadcast %cst_47 : f32 to vector<16x16xf32>
    %123 = arith.mulf %122, %121 : vector<16x16xf32>
    %124 = vector.broadcast %114 : vector<1x1xf32> to vector<16x16xf32>
    %125 = arith.mulf %124, %77 : vector<16x16xf32>
    %126 = arith.addf %123, %125 : vector<16x16xf32>
    %127 = arith.addf %120, %126 : vector<16x16xf32>
    %128 = arith.mulf %120, %4 : vector<16x16xf32>
    %129 = arith.subf %127, %128 : vector<16x16xf32>
    %cst_48 = arith.constant 0.00999999977 : f32
    %130 = vector.broadcast %cst_48 : f32 to vector<16x16xf32>
    %131 = arith.mulf %130, %129 : vector<16x16xf32>
    %132 = arith.subf %58, %131 : vector<16x16xf32>
    %cst_49 = arith.constant dense<0xFF800000> : vector<16xf32>
    %133 = vector.multi_reduction <maximumf>, %132, %cst_49 [1] : vector<16x16xf32> to vector<16xf32>
    %134 = vector.shape_cast %133 : vector<16xf32> to vector<16x1xf32>
    %135 = vector.broadcast %134 : vector<16x1xf32> to vector<16x16xf32>
    %136 = arith.subf %132, %135 : vector<16x16xf32>
    %137 = math.exp %136 : vector<16x16xf32>
    %cst_50 = arith.constant dense<0.000000e+00> : vector<16xf32>
    %138 = vector.multi_reduction <add>, %137, %cst_50 [1] : vector<16x16xf32> to vector<16xf32>
    %139 = vector.shape_cast %138 : vector<16xf32> to vector<16x1xf32>
    %140 = tpu.reciprocal %139 {approx = true} : vector<16x1xf32> -> vector<16x1xf32>
    %141 = vector.broadcast %140 : vector<16x1xf32> to vector<16x16xf32>
    %142 = arith.mulf %137, %141 : vector<16x16xf32>
    %143 = arith.mulf %142, %58 : vector<16x16xf32>
    %cst_51 = arith.constant 0.00999999977 : f32
    %144 = vector.broadcast %cst_51 : f32 to vector<16x16xf32>
    %145 = arith.mulf %144, %129 : vector<16x16xf32>
    %146 = arith.subf %60, %145 : vector<16x16xf32>
    %cst_52 = arith.constant dense<0xFF800000> : vector<16xf32>
    %147 = vector.multi_reduction <maximumf>, %146, %cst_52 [0] : vector<16x16xf32> to vector<16xf32>
    %148 = vector.shape_cast %147 : vector<16xf32> to vector<1x16xf32>
    %149 = vector.broadcast %148 : vector<1x16xf32> to vector<16x16xf32>
    %150 = arith.subf %146, %149 : vector<16x16xf32>
    %151 = math.exp %150 : vector<16x16xf32>
    %cst_53 = arith.constant dense<0.000000e+00> : vector<16xf32>
    %152 = vector.multi_reduction <add>, %151, %cst_53 [0] : vector<16x16xf32> to vector<16xf32>
    %153 = vector.shape_cast %152 : vector<16xf32> to vector<1x16xf32>
    %154 = tpu.reciprocal %153 {approx = true} : vector<1x16xf32> -> vector<1x16xf32>
    %155 = vector.broadcast %154 : vector<1x16xf32> to vector<16x16xf32>
    %156 = arith.mulf %151, %155 : vector<16x16xf32>
    %157 = arith.mulf %156, %60 : vector<16x16xf32>
    %158 = arith.subf %143, %58 : vector<16x16xf32>
    %cst_54 = arith.constant 2.000000e+00 : f32
    %159 = vector.broadcast %cst_54 : f32 to vector<16x16xf32>
    %160 = arith.mulf %159, %158 : vector<16x16xf32>
    %161 = vector.broadcast %114 : vector<1x1xf32> to vector<16x16xf32>
    %162 = arith.mulf %161, %75 : vector<16x16xf32>
    %163 = arith.addf %160, %162 : vector<16x16xf32>
    %164 = arith.subf %157, %60 : vector<16x16xf32>
    %cst_55 = arith.constant 2.000000e+00 : f32
    %165 = vector.broadcast %cst_55 : f32 to vector<16x16xf32>
    %166 = arith.mulf %165, %164 : vector<16x16xf32>
    %167 = vector.broadcast %114 : vector<1x1xf32> to vector<16x16xf32>
    %168 = arith.mulf %167, %77 : vector<16x16xf32>
    %169 = arith.addf %166, %168 : vector<16x16xf32>
    %170 = arith.addf %163, %169 : vector<16x16xf32>
    %171 = arith.mulf %163, %4 : vector<16x16xf32>
    %172 = arith.subf %170, %171 : vector<16x16xf32>
    %cst_56 = arith.constant 0.00999999977 : f32
    %173 = vector.broadcast %cst_56 : f32 to vector<16x16xf32>
    %174 = arith.mulf %173, %172 : vector<16x16xf32>
    %175 = arith.subf %143, %174 : vector<16x16xf32>
    %cst_57 = arith.constant dense<0xFF800000> : vector<16xf32>
    %176 = vector.multi_reduction <maximumf>, %175, %cst_57 [1] : vector<16x16xf32> to vector<16xf32>
    %177 = vector.shape_cast %176 : vector<16xf32> to vector<16x1xf32>
    %178 = vector.broadcast %177 : vector<16x1xf32> to vector<16x16xf32>
    %179 = arith.subf %175, %178 : vector<16x16xf32>
    %180 = math.exp %179 : vector<16x16xf32>
    %cst_58 = arith.constant dense<0.000000e+00> : vector<16xf32>
    %181 = vector.multi_reduction <add>, %180, %cst_58 [1] : vector<16x16xf32> to vector<16xf32>
    %182 = vector.shape_cast %181 : vector<16xf32> to vector<16x1xf32>
    %183 = tpu.reciprocal %182 {approx = true} : vector<16x1xf32> -> vector<16x1xf32>
    %184 = vector.broadcast %183 : vector<16x1xf32> to vector<16x16xf32>
    %185 = arith.mulf %180, %184 : vector<16x16xf32>
    %186 = arith.mulf %185, %58 : vector<16x16xf32>
    %cst_59 = arith.constant 0.00999999977 : f32
    %187 = vector.broadcast %cst_59 : f32 to vector<16x16xf32>
    %188 = arith.mulf %187, %172 : vector<16x16xf32>
    %189 = arith.subf %157, %188 : vector<16x16xf32>
    %cst_60 = arith.constant dense<0xFF800000> : vector<16xf32>
    %190 = vector.multi_reduction <maximumf>, %189, %cst_60 [0] : vector<16x16xf32> to vector<16xf32>
    %191 = vector.shape_cast %190 : vector<16xf32> to vector<1x16xf32>
    %192 = vector.broadcast %191 : vector<1x16xf32> to vector<16x16xf32>
    %193 = arith.subf %189, %192 : vector<16x16xf32>
    %194 = math.exp %193 : vector<16x16xf32>
    %cst_61 = arith.constant dense<0.000000e+00> : vector<16xf32>
    %195 = vector.multi_reduction <add>, %194, %cst_61 [0] : vector<16x16xf32> to vector<16xf32>
    %196 = vector.shape_cast %195 : vector<16xf32> to vector<1x16xf32>
    %197 = tpu.reciprocal %196 {approx = true} : vector<1x16xf32> -> vector<1x16xf32>
    %198 = vector.broadcast %197 : vector<1x16xf32> to vector<16x16xf32>
    %199 = arith.mulf %194, %198 : vector<16x16xf32>
    %200 = arith.mulf %199, %60 : vector<16x16xf32>
    %201 = arith.subf %186, %58 : vector<16x16xf32>
    %cst_62 = arith.constant 2.000000e+00 : f32
    %202 = vector.broadcast %cst_62 : f32 to vector<16x16xf32>
    %203 = arith.mulf %202, %201 : vector<16x16xf32>
    %204 = vector.broadcast %114 : vector<1x1xf32> to vector<16x16xf32>
    %205 = arith.mulf %204, %75 : vector<16x16xf32>
    %206 = arith.addf %203, %205 : vector<16x16xf32>
    %207 = arith.subf %200, %60 : vector<16x16xf32>
    %cst_63 = arith.constant 2.000000e+00 : f32
    %208 = vector.broadcast %cst_63 : f32 to vector<16x16xf32>
    %209 = arith.mulf %208, %207 : vector<16x16xf32>
    %210 = vector.broadcast %114 : vector<1x1xf32> to vector<16x16xf32>
    %211 = arith.mulf %210, %77 : vector<16x16xf32>
    %212 = arith.addf %209, %211 : vector<16x16xf32>
    %213 = arith.addf %206, %212 : vector<16x16xf32>
    %214 = arith.mulf %206, %4 : vector<16x16xf32>
    %215 = arith.subf %213, %214 : vector<16x16xf32>
    %cst_64 = arith.constant 0.00999999977 : f32
    %216 = vector.broadcast %cst_64 : f32 to vector<16x16xf32>
    %217 = arith.mulf %216, %215 : vector<16x16xf32>
    %218 = arith.subf %186, %217 : vector<16x16xf32>
    %cst_65 = arith.constant dense<0xFF800000> : vector<16xf32>
    %219 = vector.multi_reduction <maximumf>, %218, %cst_65 [1] : vector<16x16xf32> to vector<16xf32>
    %220 = vector.shape_cast %219 : vector<16xf32> to vector<16x1xf32>
    %221 = vector.broadcast %220 : vector<16x1xf32> to vector<16x16xf32>
    %222 = arith.subf %218, %221 : vector<16x16xf32>
    %223 = math.exp %222 : vector<16x16xf32>
    %cst_66 = arith.constant dense<0.000000e+00> : vector<16xf32>
    %224 = vector.multi_reduction <add>, %223, %cst_66 [1] : vector<16x16xf32> to vector<16xf32>
    %225 = vector.shape_cast %224 : vector<16xf32> to vector<16x1xf32>
    %226 = tpu.reciprocal %225 {approx = true} : vector<16x1xf32> -> vector<16x1xf32>
    %227 = vector.broadcast %226 : vector<16x1xf32> to vector<16x16xf32>
    %228 = arith.mulf %223, %227 : vector<16x16xf32>
    %229 = arith.mulf %228, %58 : vector<16x16xf32>
    %cst_67 = arith.constant 0.00999999977 : f32
    %230 = vector.broadcast %cst_67 : f32 to vector<16x16xf32>
    %231 = arith.mulf %230, %215 : vector<16x16xf32>
    %232 = arith.subf %200, %231 : vector<16x16xf32>
    %cst_68 = arith.constant dense<0xFF800000> : vector<16xf32>
    %233 = vector.multi_reduction <maximumf>, %232, %cst_68 [0] : vector<16x16xf32> to vector<16xf32>
    %234 = vector.shape_cast %233 : vector<16xf32> to vector<1x16xf32>
    %235 = vector.broadcast %234 : vector<1x16xf32> to vector<16x16xf32>
    %236 = arith.subf %232, %235 : vector<16x16xf32>
    %237 = math.exp %236 : vector<16x16xf32>
    %cst_69 = arith.constant dense<0.000000e+00> : vector<16xf32>
    %238 = vector.multi_reduction <add>, %237, %cst_69 [0] : vector<16x16xf32> to vector<16xf32>
    %239 = vector.shape_cast %238 : vector<16xf32> to vector<1x16xf32>
    %240 = tpu.reciprocal %239 {approx = true} : vector<1x16xf32> -> vector<1x16xf32>
    %241 = vector.broadcast %240 : vector<1x16xf32> to vector<16x16xf32>
    %242 = arith.mulf %237, %241 : vector<16x16xf32>
    %243 = arith.mulf %242, %60 : vector<16x16xf32>
    %244 = arith.subf %229, %58 : vector<16x16xf32>
    %cst_70 = arith.constant 2.000000e+00 : f32
    %245 = vector.broadcast %cst_70 : f32 to vector<16x16xf32>
    %246 = arith.mulf %245, %244 : vector<16x16xf32>
    %247 = vector.broadcast %114 : vector<1x1xf32> to vector<16x16xf32>
    %248 = arith.mulf %247, %75 : vector<16x16xf32>
    %249 = arith.addf %246, %248 : vector<16x16xf32>
    %250 = arith.subf %243, %60 : vector<16x16xf32>
    %cst_71 = arith.constant 2.000000e+00 : f32
    %251 = vector.broadcast %cst_71 : f32 to vector<16x16xf32>
    %252 = arith.mulf %251, %250 : vector<16x16xf32>
    %253 = vector.broadcast %114 : vector<1x1xf32> to vector<16x16xf32>
    %254 = arith.mulf %253, %77 : vector<16x16xf32>
    %255 = arith.addf %252, %254 : vector<16x16xf32>
    %256 = arith.addf %249, %255 : vector<16x16xf32>
    %257 = arith.mulf %249, %4 : vector<16x16xf32>
    %258 = arith.subf %256, %257 : vector<16x16xf32>
    %cst_72 = arith.constant 0.00999999977 : f32
    %259 = vector.broadcast %cst_72 : f32 to vector<16x16xf32>
    %260 = arith.mulf %259, %258 : vector<16x16xf32>
    %261 = arith.subf %229, %260 : vector<16x16xf32>
    %cst_73 = arith.constant dense<0xFF800000> : vector<16xf32>
    %262 = vector.multi_reduction <maximumf>, %261, %cst_73 [1] : vector<16x16xf32> to vector<16xf32>
    %263 = vector.shape_cast %262 : vector<16xf32> to vector<16x1xf32>
    %264 = vector.broadcast %263 : vector<16x1xf32> to vector<16x16xf32>
    %265 = arith.subf %261, %264 : vector<16x16xf32>
    %266 = math.exp %265 : vector<16x16xf32>
    %cst_74 = arith.constant dense<0.000000e+00> : vector<16xf32>
    %267 = vector.multi_reduction <add>, %266, %cst_74 [1] : vector<16x16xf32> to vector<16xf32>
    %268 = vector.shape_cast %267 : vector<16xf32> to vector<16x1xf32>
    %269 = tpu.reciprocal %268 {approx = true} : vector<16x1xf32> -> vector<16x1xf32>
    %270 = vector.broadcast %269 : vector<16x1xf32> to vector<16x16xf32>
    %271 = arith.mulf %266, %270 : vector<16x16xf32>
    %272 = arith.mulf %271, %58 : vector<16x16xf32>
    %cst_75 = arith.constant 0.00999999977 : f32
    %273 = vector.broadcast %cst_75 : f32 to vector<16x16xf32>
    %274 = arith.mulf %273, %258 : vector<16x16xf32>
    %275 = arith.subf %243, %274 : vector<16x16xf32>
    %cst_76 = arith.constant dense<0xFF800000> : vector<16xf32>
    %276 = vector.multi_reduction <maximumf>, %275, %cst_76 [0] : vector<16x16xf32> to vector<16xf32>
    %277 = vector.shape_cast %276 : vector<16xf32> to vector<1x16xf32>
    %278 = vector.broadcast %277 : vector<1x16xf32> to vector<16x16xf32>
    %279 = arith.subf %275, %278 : vector<16x16xf32>
    %280 = math.exp %279 : vector<16x16xf32>
    %cst_77 = arith.constant dense<0.000000e+00> : vector<16xf32>
    %281 = vector.multi_reduction <add>, %280, %cst_77 [0] : vector<16x16xf32> to vector<16xf32>
    %282 = vector.shape_cast %281 : vector<16xf32> to vector<1x16xf32>
    %283 = tpu.reciprocal %282 {approx = true} : vector<1x16xf32> -> vector<1x16xf32>
    %284 = vector.broadcast %283 : vector<1x16xf32> to vector<16x16xf32>
    %285 = arith.mulf %280, %284 : vector<16x16xf32>
    %286 = arith.mulf %285, %60 : vector<16x16xf32>
    %287 = arith.subf %272, %58 : vector<16x16xf32>
    %cst_78 = arith.constant 2.000000e+00 : f32
    %288 = vector.broadcast %cst_78 : f32 to vector<16x16xf32>
    %289 = arith.mulf %288, %287 : vector<16x16xf32>
    %290 = vector.broadcast %114 : vector<1x1xf32> to vector<16x16xf32>
    %291 = arith.mulf %290, %75 : vector<16x16xf32>
    %292 = arith.addf %289, %291 : vector<16x16xf32>
    %293 = arith.subf %286, %60 : vector<16x16xf32>
    %cst_79 = arith.constant 2.000000e+00 : f32
    %294 = vector.broadcast %cst_79 : f32 to vector<16x16xf32>
    %295 = arith.mulf %294, %293 : vector<16x16xf32>
    %296 = vector.broadcast %114 : vector<1x1xf32> to vector<16x16xf32>
    %297 = arith.mulf %296, %77 : vector<16x16xf32>
    %298 = arith.addf %295, %297 : vector<16x16xf32>
    %299 = arith.addf %292, %298 : vector<16x16xf32>
    %300 = arith.mulf %292, %4 : vector<16x16xf32>
    %301 = arith.subf %299, %300 : vector<16x16xf32>
    %cst_80 = arith.constant 0.00999999977 : f32
    %302 = vector.broadcast %cst_80 : f32 to vector<16x16xf32>
    %303 = arith.mulf %302, %301 : vector<16x16xf32>
    %304 = arith.subf %272, %303 : vector<16x16xf32>
    %cst_81 = arith.constant dense<0xFF800000> : vector<16xf32>
    %305 = vector.multi_reduction <maximumf>, %304, %cst_81 [1] : vector<16x16xf32> to vector<16xf32>
    %306 = vector.shape_cast %305 : vector<16xf32> to vector<16x1xf32>
    %307 = vector.broadcast %306 : vector<16x1xf32> to vector<16x16xf32>
    %308 = arith.subf %304, %307 : vector<16x16xf32>
    %309 = math.exp %308 : vector<16x16xf32>
    %cst_82 = arith.constant dense<0.000000e+00> : vector<16xf32>
    %310 = vector.multi_reduction <add>, %309, %cst_82 [1] : vector<16x16xf32> to vector<16xf32>
    %311 = vector.shape_cast %310 : vector<16xf32> to vector<16x1xf32>
    %312 = tpu.reciprocal %311 {approx = true} : vector<16x1xf32> -> vector<16x1xf32>
    %313 = vector.broadcast %312 : vector<16x1xf32> to vector<16x16xf32>
    %314 = arith.mulf %309, %313 : vector<16x16xf32>
    %315 = arith.mulf %314, %58 : vector<16x16xf32>
    %316 = arith.truncf %58 : vector<16x16xf32> to vector<16x16xbf16>
    %317 = arith.truncf %63 : vector<16x2xf32> to vector<16x2xbf16>
    %cst_83 = arith.constant dense<0.000000e+00> : vector<16x2xf32>
    %318 = tpu.matmul %316, %317, %cst_83 {dimension_numbers = #tpu.dot_dimension_numbers<[1], [0], [0], [1], [0, 0, 1, 1], [], []>} : vector<16x16xbf16>, vector<16x2xbf16>, vector<16x2xf32> -> vector<16x2xf32>
    %319 = arith.mulf %318, %63 : vector<16x2xf32>
    %320 = vector.shape_cast %319 : vector<16x2xf32> to vector<1x16x2xf32>
    %cst_84 = arith.constant dense<0.000000e+00> : vector<1xf32>
    %321 = vector.multi_reduction <add>, %320, %cst_84 [1, 2] : vector<1x16x2xf32> to vector<1xf32>
    %322 = vector.shape_cast %321 : vector<1xf32> to vector<1x1x1xf32>
    %323 = vector.extract %322[0, 0, 0] : f32 from vector<1x1x1xf32>
    %324 = vector.broadcast %323 : f32 to vector<1x1xf32>
    %325 = arith.mulf %63, %63 : vector<16x2xf32>
    %cst_85 = arith.constant dense<0.000000e+00> : vector<16xf32>
    %326 = vector.multi_reduction <add>, %325, %cst_85 [1] : vector<16x2xf32> to vector<16xf32>
    %327 = vector.shape_cast %326 : vector<16xf32> to vector<16x1xf32>
    %328 = arith.mulf %79, %327 : vector<16x1xf32>
    %329 = vector.shape_cast %328 : vector<16x1xf32> to vector<1x16x1xf32>
    %cst_86 = arith.constant dense<0.000000e+00> : vector<1xf32>
    %330 = vector.multi_reduction <add>, %329, %cst_86 [1, 2] : vector<1x16x1xf32> to vector<1xf32>
    %331 = vector.shape_cast %330 : vector<1xf32> to vector<1x1x1xf32>
    %332 = vector.extract %331[0, 0, 0] : f32 from vector<1x1x1xf32>
    %333 = vector.broadcast %332 : f32 to vector<1x1xf32>
    %334 = arith.divf %324, %333 : vector<1x1xf32>
    %335 = arith.subf %54, %334 : vector<1x1xf32>
    %336 = arith.truncf %63 : vector<16x2xf32> to vector<16x2xbf16>
    %337 = arith.truncf %63 : vector<16x2xf32> to vector<16x2xbf16>
    %cst_87 = arith.constant dense<0.000000e+00> : vector<2x2xf32>
    %338 = tpu.matmul %336, %337, %cst_87 {dimension_numbers = #tpu.dot_dimension_numbers<[0], [0], [1], [1], [0, 1, 1, 1], [], []>} : vector<16x2xbf16>, vector<16x2xbf16>, vector<2x2xf32> -> vector<2x2xf32>
    %339 = arith.mulf %63, %63 : vector<16x2xf32>
    %340 = vector.shape_cast %339 : vector<16x2xf32> to vector<1x16x2xf32>
    %cst_88 = arith.constant dense<0.000000e+00> : vector<1xf32>
    %341 = vector.multi_reduction <add>, %340, %cst_88 [1, 2] : vector<1x16x2xf32> to vector<1xf32>
    %342 = vector.shape_cast %341 : vector<1xf32> to vector<1x1x1xf32>
    %343 = vector.extract %342[0, 0, 0] : f32 from vector<1x1x1xf32>
    %344 = vector.broadcast %343 : f32 to vector<1x1xf32>
    %cst_89 = arith.constant 1.41421354 : f32
    %345 = vector.broadcast %cst_89 : f32 to vector<1x1xf32>
    %346 = arith.mulf %345, %344 : vector<1x1xf32>
    %347 = arith.mulf %338, %338 : vector<2x2xf32>
    %348 = vector.shape_cast %347 : vector<2x2xf32> to vector<1x2x2xf32>
    %cst_90 = arith.constant dense<0.000000e+00> : vector<1xf32>
    %349 = vector.multi_reduction <add>, %348, %cst_90 [1, 2] : vector<1x2x2xf32> to vector<1xf32>
    %350 = vector.shape_cast %349 : vector<1xf32> to vector<1x1x1xf32>
    %351 = vector.extract %350[0, 0, 0] : f32 from vector<1x1x1xf32>
    %352 = vector.broadcast %351 : f32 to vector<1x1xf32>
    %353 = math.rsqrt %352 : vector<1x1xf32>
    %354 = arith.mulf %346, %353 : vector<1x1xf32>
    %cst_91 = arith.constant 2.000000e+00 : f32
    %355 = vector.broadcast %cst_91 : f32 to vector<1x1xf32>
    %356 = arith.subf %355, %354 : vector<1x1xf32>
    %cst_92 = arith.constant 0.000000e+00 : f32
    %357 = vector.broadcast %cst_92 : f32 to vector<1x1xf32>
    %358 = arith.maximumf %356, %357 : vector<1x1xf32>
    %359 = math.sqrt %358 : vector<1x1xf32>
    %360 = arith.addf %55, %359 : vector<1x1xf32>
    %361 = vector.extract_strided_slice %34 {offsets = [0, 0], sizes = [16, 32], strides = [1, 1]} : vector<32x32xf32> to vector<16x32xf32>
    %362 = arith.truncf %315 : vector<16x16xf32> to vector<16x16xbf16>
    %363 = arith.truncf %361 : vector<16x32xf32> to vector<16x32xbf16>
    %cst_93 = arith.constant dense<0.000000e+00> : vector<16x32xf32>
    %364 = tpu.matmul %362, %363, %cst_93 {dimension_numbers = #tpu.dot_dimension_numbers<[1], [0], [0], [1], [0, 0, 1, 1], [], []>} : vector<16x16xbf16>, vector<16x32xbf16>, vector<16x32xf32> -> vector<16x32xf32>
    %365 = vector.extract_strided_slice %37 {offsets = [0, 0], sizes = [16, 32], strides = [1, 1]} : vector<32x32xf32> to vector<16x32xf32>
    %366 = arith.addf %364, %365 : vector<16x32xf32>
    %c0_94 = arith.constant 0 : index
    %c0_95 = arith.constant 0 : index
    %367 = vector.load %arg9[%c0_94, %c0_95] : memref<1x32xf32, #tpu.memory_space<vmem>>, vector<1x32xf32>
    %368 = vector.broadcast %367 : vector<1x32xf32> to vector<16x32xf32>
    %369 = arith.addf %366, %368 : vector<16x32xf32>
    %c0_96 = arith.constant 0 : index
    %c0_97 = arith.constant 0 : index
    %370 = vector.load %arg11[%c0_96, %c0_97] : memref<32x16xbf16, #tpu.memory_space<vmem>>, vector<32x16xbf16>
    %371 = arith.truncf %369 : vector<16x32xf32> to vector<16x32xbf16>
    %cst_98 = arith.constant dense<0.000000e+00> : vector<16x16xf32>
    %372 = tpu.matmul %371, %370, %cst_98 {dimension_numbers = #tpu.dot_dimension_numbers<[1], [0], [0], [1], [0, 0, 1, 1], [], []>} : vector<16x32xbf16>, vector<32x16xbf16>, vector<16x16xf32> -> vector<16x16xf32>
    %c0_99 = arith.constant 0 : index
    %c0_100 = arith.constant 0 : index
    %373 = vector.load %arg12[%c0_99, %c0_100] : memref<1x16xf32, #tpu.memory_space<vmem>>, vector<1x16xf32>
    %374 = vector.broadcast %373 : vector<1x16xf32> to vector<16x16xf32>
    %375 = arith.addf %372, %374 : vector<16x16xf32>
    %cst_101 = arith.constant dense<0xFF800000> : vector<16xf32>
    %376 = vector.multi_reduction <maximumf>, %375, %cst_101 [1] : vector<16x16xf32> to vector<16xf32>
    %377 = vector.shape_cast %376 : vector<16xf32> to vector<16x1xf32>
    %378 = vector.broadcast %377 : vector<16x1xf32> to vector<16x16xf32>
    %379 = arith.subf %375, %378 : vector<16x16xf32>
    %380 = math.exp %379 : vector<16x16xf32>
    %cst_102 = arith.constant dense<0.000000e+00> : vector<16xf32>
    %381 = vector.multi_reduction <add>, %380, %cst_102 [1] : vector<16x16xf32> to vector<16xf32>
    %382 = vector.shape_cast %381 : vector<16xf32> to vector<16x1xf32>
    %383 = tpu.reciprocal %382 {approx = true} : vector<16x1xf32> -> vector<16x1xf32>
    %384 = vector.broadcast %383 : vector<16x1xf32> to vector<16x16xf32>
    %385 = arith.mulf %380, %384 : vector<16x16xf32>
    %386 = vector.broadcast %62 : vector<16x1xf32> to vector<16x32xf32>
    %387 = arith.mulf %369, %386 : vector<16x32xf32>
    %388 = vector.broadcast %62 : vector<16x1xf32> to vector<16x16xf32>
    %389 = arith.mulf %385, %388 : vector<16x16xf32>
    %390 = arith.truncf %389 : vector<16x16xf32> to vector<16x16xbf16>
    %391 = arith.truncf %387 : vector<16x32xf32> to vector<16x32xbf16>
    %cst_103 = arith.constant dense<0.000000e+00> : vector<16x32xf32>
    %392 = tpu.matmul %390, %391, %cst_103 {dimension_numbers = #tpu.dot_dimension_numbers<[0], [0], [1], [1], [0, 1, 1, 1], [], []>} : vector<16x16xbf16>, vector<16x32xbf16>, vector<16x32xf32> -> vector<16x32xf32>
    %393 = arith.truncf %389 : vector<16x16xf32> to vector<16x16xbf16>
    %394 = arith.truncf %315 : vector<16x16xf32> to vector<16x16xbf16>
    %cst_104 = arith.constant dense<0.000000e+00> : vector<16x16xf32>
    %395 = tpu.matmul %393, %394, %cst_104 {dimension_numbers = #tpu.dot_dimension_numbers<[0], [0], [1], [1], [0, 1, 1, 1], [], []>} : vector<16x16xbf16>, vector<16x16xbf16>, vector<16x16xf32> -> vector<16x16xf32>
    %396 = arith.truncf %395 : vector<16x16xf32> to vector<16x16xbf16>
    %397 = arith.truncf %389 : vector<16x16xf32> to vector<16x16xbf16>
    %cst_105 = arith.constant dense<0.000000e+00> : vector<16x16xf32>
    %398 = tpu.matmul %396, %397, %cst_105 {dimension_numbers = #tpu.dot_dimension_numbers<[1], [0], [0], [1], [0, 0, 1, 1], [], []>} : vector<16x16xbf16>, vector<16x16xbf16>, vector<16x16xf32> -> vector<16x16xf32>
    %399 = arith.mulf %398, %9 : vector<16x16xf32>
    %400 = vector.shape_cast %399 : vector<16x16xf32> to vector<1x16x16xf32>
    %cst_106 = arith.constant dense<0.000000e+00> : vector<1xf32>
    %401 = vector.multi_reduction <add>, %400, %cst_106 [1, 2] : vector<1x16x16xf32> to vector<1xf32>
    %402 = vector.shape_cast %401 : vector<1xf32> to vector<1x1x1xf32>
    %403 = vector.extract %402[0, 0, 0] : f32 from vector<1x1x1xf32>
    %404 = vector.broadcast %403 : f32 to vector<1x1xf32>
    %cst_107 = arith.constant dense<0.000000e+00> : vector<16xf32>
    %405 = vector.multi_reduction <add>, %315, %cst_107 [1] : vector<16x16xf32> to vector<16xf32>
    %406 = vector.shape_cast %405 : vector<16xf32> to vector<16x1xf32>
    %cst_108 = arith.constant 1.000000e-15 : f32
    %407 = vector.broadcast %cst_108 : f32 to vector<16x1xf32>
    %408 = arith.addf %406, %407 : vector<16x1xf32>
    %409 = arith.mulf %389, %389 : vector<16x16xf32>
    %cst_109 = arith.constant dense<0.000000e+00> : vector<16xf32>
    %410 = vector.multi_reduction <add>, %409, %cst_109 [1] : vector<16x16xf32> to vector<16xf32>
    %411 = vector.shape_cast %410 : vector<16xf32> to vector<16x1xf32>
    %412 = arith.mulf %408, %411 : vector<16x1xf32>
    %413 = vector.shape_cast %412 : vector<16x1xf32> to vector<1x16x1xf32>
    %cst_110 = arith.constant dense<0.000000e+00> : vector<1xf32>
    %414 = vector.multi_reduction <add>, %413, %cst_110 [1, 2] : vector<1x16x1xf32> to vector<1xf32>
    %415 = vector.shape_cast %414 : vector<1xf32> to vector<1x1x1xf32>
    %416 = vector.extract %415[0, 0, 0] : f32 from vector<1x1x1xf32>
    %417 = vector.broadcast %416 : f32 to vector<1x1xf32>
    %418 = arith.divf %404, %417 : vector<1x1xf32>
    %419 = arith.subf %335, %418 : vector<1x1xf32>
    %420 = arith.truncf %389 : vector<16x16xf32> to vector<16x16xbf16>
    %421 = arith.truncf %389 : vector<16x16xf32> to vector<16x16xbf16>
    %cst_111 = arith.constant dense<0.000000e+00> : vector<16x16xf32>
    %422 = tpu.matmul %420, %421, %cst_111 {dimension_numbers = #tpu.dot_dimension_numbers<[0], [0], [1], [1], [0, 1, 1, 1], [], []>} : vector<16x16xbf16>, vector<16x16xbf16>, vector<16x16xf32> -> vector<16x16xf32>
    %423 = arith.mulf %422, %422 : vector<16x16xf32>
    %424 = vector.shape_cast %423 : vector<16x16xf32> to vector<1x16x16xf32>
    %cst_112 = arith.constant dense<0.000000e+00> : vector<1xf32>
    %425 = vector.multi_reduction <add>, %424, %cst_112 [1, 2] : vector<1x16x16xf32> to vector<1xf32>
    %426 = vector.shape_cast %425 : vector<1xf32> to vector<1x1x1xf32>
    %427 = vector.extract %426[0, 0, 0] : f32 from vector<1x1x1xf32>
    %428 = vector.broadcast %427 : f32 to vector<1x1xf32>
    %429 = math.rsqrt %428 : vector<1x1xf32>
    %430 = vector.broadcast %429 : vector<1x1xf32> to vector<16x16xf32>
    %431 = arith.mulf %422, %430 : vector<16x16xf32>
    %cst_113 = arith.constant 2.500000e-01 : f32
    %432 = vector.broadcast %cst_113 : f32 to vector<16x16xf32>
    %433 = arith.mulf %9, %432 : vector<16x16xf32>
    %434 = arith.subf %431, %433 : vector<16x16xf32>
    %435 = arith.mulf %434, %434 : vector<16x16xf32>
    %436 = vector.shape_cast %435 : vector<16x16xf32> to vector<1x16x16xf32>
    %cst_114 = arith.constant dense<0.000000e+00> : vector<1xf32>
    %437 = vector.multi_reduction <add>, %436, %cst_114 [1, 2] : vector<1x16x16xf32> to vector<1xf32>
    %438 = vector.shape_cast %437 : vector<1xf32> to vector<1x1x1xf32>
    %439 = vector.extract %438[0, 0, 0] : f32 from vector<1x1x1xf32>
    %440 = vector.broadcast %439 : f32 to vector<1x1xf32>
    %441 = math.sqrt %440 : vector<1x1xf32>
    %442 = arith.addf %360, %441 : vector<1x1xf32>
    %cst_115 = arith.constant 1.000000e+00 : f32
    %443 = vector.broadcast %cst_115 : f32 to vector<16x16xf32>
    %444 = arith.subf %443, %9 : vector<16x16xf32>
    %445 = arith.mulf %398, %444 : vector<16x16xf32>
    %cst_116 = arith.constant dense<0.000000e+00> : vector<16xf32>
    %446 = vector.multi_reduction <add>, %445, %cst_116 [1] : vector<16x16xf32> to vector<16xf32>
    %447 = vector.shape_cast %446 : vector<16xf32> to vector<16x1xf32>
    %cst_117 = arith.constant 1.000000e-15 : f32
    %448 = vector.broadcast %cst_117 : f32 to vector<16x1xf32>
    %449 = arith.addf %447, %448 : vector<16x1xf32>
    %450 = math.rsqrt %449 : vector<16x1xf32>
    %c0_118 = arith.constant 0 : index
    %c0_119 = arith.constant 0 : index
    %451 = vector.load %arg13[%c0_118, %c0_119] : memref<32x32xbf16, #tpu.memory_space<vmem>>, vector<32x32xbf16>
    %452 = arith.truncf %392 : vector<16x32xf32> to vector<16x32xbf16>
    %cst_120 = arith.constant dense<0.000000e+00> : vector<16x32xf32>
    %453 = tpu.matmul %452, %451, %cst_120 {dimension_numbers = #tpu.dot_dimension_numbers<[1], [0], [0], [1], [0, 0, 1, 1], [], []>} : vector<16x32xbf16>, vector<32x32xbf16>, vector<16x32xf32> -> vector<16x32xf32>
    %c0_121 = arith.constant 0 : index
    %c0_122 = arith.constant 0 : index
    %454 = vector.load %arg15[%c0_121, %c0_122] : memref<32x32xbf16, #tpu.memory_space<vmem>>, vector<32x32xbf16>
    %455 = arith.truncf %392 : vector<16x32xf32> to vector<16x32xbf16>
    %cst_123 = arith.constant dense<0.000000e+00> : vector<16x32xf32>
    %456 = tpu.matmul %455, %454, %cst_123 {dimension_numbers = #tpu.dot_dimension_numbers<[1], [0], [0], [1], [0, 0, 1, 1], [], []>} : vector<16x32xbf16>, vector<32x32xbf16>, vector<16x32xf32> -> vector<16x32xf32>
    %457 = vector.broadcast %450 : vector<16x1xf32> to vector<16x16xf32>
    %458 = arith.mulf %445, %457 : vector<16x16xf32>
    %459 = vector.broadcast %450 : vector<16x1xf32> to vector<16x32xf32>
    %460 = arith.mulf %453, %459 : vector<16x32xf32>
    %461 = arith.truncf %458 : vector<16x16xf32> to vector<16x16xbf16>
    %462 = arith.truncf %460 : vector<16x32xf32> to vector<16x32xbf16>
    %cst_124 = arith.constant dense<0.000000e+00> : vector<16x32xf32>
    %463 = tpu.matmul %461, %462, %cst_124 {dimension_numbers = #tpu.dot_dimension_numbers<[1], [0], [0], [1], [0, 0, 1, 1], [], []>} : vector<16x16xbf16>, vector<16x32xbf16>, vector<16x32xf32> -> vector<16x32xf32>
    %464 = arith.addf %463, %456 : vector<16x32xf32>
    %c0_125 = arith.constant 0 : index
    %c0_126 = arith.constant 0 : index
    %465 = vector.load %arg14[%c0_125, %c0_126] : memref<1x32xf32, #tpu.memory_space<vmem>>, vector<1x32xf32>
    %466 = vector.broadcast %465 : vector<1x32xf32> to vector<16x32xf32>
    %467 = arith.addf %464, %466 : vector<16x32xf32>
    %cst_127 = arith.constant dense<0.000000e+00> : vector<32xf32>
    %468 = vector.multi_reduction <add>, %467, %cst_127 [0] : vector<16x32xf32> to vector<32xf32>
    %469 = vector.shape_cast %468 : vector<32xf32> to vector<1x32xf32>
    %c0_i32_128 = arith.constant 0 : i32
    %470 = vector.broadcast %c0_i32_128 : i32 to vector<2x1xi32>
    %471 = arith.cmpi eq, %53, %470 : vector<2x1xi32>
    %cst_129 = arith.constant 0.000000e+00 : f32
    %472 = vector.shape_cast %471 : vector<2x1xi1> to vector<2x1xi1>
    %473 = vector.broadcast %472 : vector<2x1xi1> to vector<2x32xi1>
    %474 = vector.shape_cast %469 : vector<1x32xf32> to vector<1x32xf32>
    %475 = vector.broadcast %474 : vector<1x32xf32> to vector<2x32xf32>
    %476 = vector.broadcast %cst_129 : f32 to vector<2x32xf32>
    %477 = arith.select %473, %475, %476 : vector<2x32xi1>, vector<2x32xf32>
    %478 = arith.addf %56, %477 : vector<2x32xf32>
    %c1 = arith.constant 1 : index
    %c0_130 = arith.constant 0 : index
    %c0_131 = arith.constant 0 : index
    %479 = vector.load %arg1[%c1, %c0_130, %c0_131] : memref<2x16x16xf32, #tpu.memory_space<vmem>>, vector<1x16x16xf32>
    %480 = vector.shape_cast %479 : vector<1x16x16xf32> to vector<16x16xf32>
    %c1_132 = arith.constant 1 : index
    %c0_133 = arith.constant 0 : index
    %c0_134 = arith.constant 0 : index
    %481 = vector.load %arg2[%c1_132, %c0_133, %c0_134] : memref<2x16x16xf32, #tpu.memory_space<vmem>>, vector<1x16x16xf32>
    %482 = vector.shape_cast %481 : vector<1x16x16xf32> to vector<16x16xf32>
    %c1_135 = arith.constant 1 : index
    %c0_136 = arith.constant 0 : index
    %c0_137 = arith.constant 0 : index
    %483 = vector.load %arg3[%c1_135, %c0_136, %c0_137] : memref<2x16x1xf32, #tpu.memory_space<vmem>>, vector<1x16x1xf32>
    %484 = vector.shape_cast %483 : vector<1x16x1xf32> to vector<16x1xf32>
    %485 = vector.extract_strided_slice %31 {offsets = [16, 0], sizes = [16, 2], strides = [1, 1]} : vector<32x2xf32> to vector<16x2xf32>
    %486 = vector.extract_strided_slice %52 {offsets = [16, 0], sizes = [16, 1], strides = [1, 1]} : vector<32x1xf32> to vector<16x1xf32>
    %487 = vector.broadcast %486 : vector<16x1xf32> to vector<16x16xf32>
    %488 = arith.mulf %4, %487 : vector<16x16xf32>
    %cst_138 = arith.constant dense<0.000000e+00> : vector<16xf32>
    %489 = vector.multi_reduction <add>, %488, %cst_138 [0] : vector<16x16xf32> to vector<16xf32>
    %490 = vector.shape_cast %489 : vector<16xf32> to vector<1x16xf32>
    %491 = vector.broadcast %486 : vector<16x1xf32> to vector<16x16xf32>
    %492 = vector.broadcast %490 : vector<1x16xf32> to vector<16x16xf32>
    %493 = arith.mulf %491, %492 : vector<16x16xf32>
    %494 = arith.mulf %486, %486 : vector<16x1xf32>
    %495 = arith.mulf %490, %490 : vector<1x16xf32>
    %496 = vector.broadcast %494 : vector<16x1xf32> to vector<16x16xf32>
    %497 = arith.subf %496, %493 : vector<16x16xf32>
    %498 = vector.broadcast %495 : vector<1x16xf32> to vector<16x16xf32>
    %499 = arith.subf %498, %493 : vector<16x16xf32>
    %cst_139 = arith.constant dense<0.000000e+00> : vector<16xf32>
    %500 = vector.multi_reduction <add>, %480, %cst_139 [1] : vector<16x16xf32> to vector<16xf32>
    %501 = vector.shape_cast %500 : vector<16xf32> to vector<16x1xf32>
    %502 = arith.mulf %501, %494 : vector<16x1xf32>
    %503 = vector.shape_cast %502 : vector<16x1xf32> to vector<1x16x1xf32>
    %cst_140 = arith.constant dense<0.000000e+00> : vector<1xf32>
    %504 = vector.multi_reduction <add>, %503, %cst_140 [1, 2] : vector<1x16x1xf32> to vector<1xf32>
    %505 = vector.shape_cast %504 : vector<1xf32> to vector<1x1x1xf32>
    %506 = vector.extract %505[0, 0, 0] : f32 from vector<1x1x1xf32>
    %507 = vector.broadcast %506 : f32 to vector<1x1xf32>
    %508 = arith.mulf %480, %493 : vector<16x16xf32>
    %509 = vector.shape_cast %508 : vector<16x16xf32> to vector<1x16x16xf32>
    %cst_141 = arith.constant dense<0.000000e+00> : vector<1xf32>
    %510 = vector.multi_reduction <add>, %509, %cst_141 [1, 2] : vector<1x16x16xf32> to vector<1xf32>
    %511 = vector.shape_cast %510 : vector<1xf32> to vector<1x1x1xf32>
    %512 = vector.extract %511[0, 0, 0] : f32 from vector<1x1x1xf32>
    %513 = vector.broadcast %512 : f32 to vector<1x1xf32>
    %514 = arith.subf %507, %513 : vector<1x1xf32>
    %515 = vector.shape_cast %486 : vector<16x1xf32> to vector<1x16x1xf32>
    %cst_142 = arith.constant dense<0.000000e+00> : vector<1xf32>
    %516 = vector.multi_reduction <add>, %515, %cst_142 [1, 2] : vector<1x16x1xf32> to vector<1xf32>
    %517 = vector.shape_cast %516 : vector<1xf32> to vector<1x1x1xf32>
    %518 = vector.extract %517[0, 0, 0] : f32 from vector<1x1x1xf32>
    %519 = vector.broadcast %518 : f32 to vector<1x1xf32>
    %520 = vector.shape_cast %494 : vector<16x1xf32> to vector<1x16x1xf32>
    %cst_143 = arith.constant dense<0.000000e+00> : vector<1xf32>
    %521 = vector.multi_reduction <add>, %520, %cst_143 [1, 2] : vector<1x16x1xf32> to vector<1xf32>
    %522 = vector.shape_cast %521 : vector<1xf32> to vector<1x1x1xf32>
    %523 = vector.extract %522[0, 0, 0] : f32 from vector<1x1x1xf32>
    %524 = vector.broadcast %523 : f32 to vector<1x1xf32>
    %cst_144 = arith.constant 1.600000e+01 : f32
    %525 = vector.broadcast %cst_144 : f32 to vector<1x1xf32>
    %526 = arith.mulf %525, %524 : vector<1x1xf32>
    %527 = arith.mulf %519, %519 : vector<1x1xf32>
    %528 = arith.subf %526, %527 : vector<1x1xf32>
    %cst_145 = arith.constant 1.000000e-15 : f32
    %529 = vector.broadcast %cst_145 : f32 to vector<1x1xf32>
    %530 = arith.addf %528, %529 : vector<1x1xf32>
    %531 = arith.divf %514, %530 : vector<1x1xf32>
    %532 = math.absf %531 : vector<1x1xf32>
    %cst_146 = arith.constant 1.600000e+01 : f32
    %533 = vector.broadcast %cst_146 : f32 to vector<1x1xf32>
    %534 = arith.mulf %533, %532 : vector<1x1xf32>
    %cst_147 = arith.constant 4.000000e+00 : f32
    %535 = vector.broadcast %cst_147 : f32 to vector<1x1xf32>
    %536 = arith.mulf %535, %534 : vector<1x1xf32>
    %537 = arith.subf %480, %480 : vector<16x16xf32>
    %cst_148 = arith.constant 2.000000e+00 : f32
    %538 = vector.broadcast %cst_148 : f32 to vector<16x16xf32>
    %539 = arith.mulf %538, %537 : vector<16x16xf32>
    %540 = vector.broadcast %536 : vector<1x1xf32> to vector<16x16xf32>
    %541 = arith.mulf %540, %497 : vector<16x16xf32>
    %542 = arith.addf %539, %541 : vector<16x16xf32>
    %543 = arith.subf %482, %482 : vector<16x16xf32>
    %cst_149 = arith.constant 2.000000e+00 : f32
    %544 = vector.broadcast %cst_149 : f32 to vector<16x16xf32>
    %545 = arith.mulf %544, %543 : vector<16x16xf32>
    %546 = vector.broadcast %536 : vector<1x1xf32> to vector<16x16xf32>
    %547 = arith.mulf %546, %499 : vector<16x16xf32>
    %548 = arith.addf %545, %547 : vector<16x16xf32>
    %549 = arith.addf %542, %548 : vector<16x16xf32>
    %550 = arith.mulf %542, %4 : vector<16x16xf32>
    %551 = arith.subf %549, %550 : vector<16x16xf32>
    %cst_150 = arith.constant 0.00999999977 : f32
    %552 = vector.broadcast %cst_150 : f32 to vector<16x16xf32>
    %553 = arith.mulf %552, %551 : vector<16x16xf32>
    %554 = arith.subf %480, %553 : vector<16x16xf32>
    %cst_151 = arith.constant dense<0xFF800000> : vector<16xf32>
    %555 = vector.multi_reduction <maximumf>, %554, %cst_151 [1] : vector<16x16xf32> to vector<16xf32>
    %556 = vector.shape_cast %555 : vector<16xf32> to vector<16x1xf32>
    %557 = vector.broadcast %556 : vector<16x1xf32> to vector<16x16xf32>
    %558 = arith.subf %554, %557 : vector<16x16xf32>
    %559 = math.exp %558 : vector<16x16xf32>
    %cst_152 = arith.constant dense<0.000000e+00> : vector<16xf32>
    %560 = vector.multi_reduction <add>, %559, %cst_152 [1] : vector<16x16xf32> to vector<16xf32>
    %561 = vector.shape_cast %560 : vector<16xf32> to vector<16x1xf32>
    %562 = tpu.reciprocal %561 {approx = true} : vector<16x1xf32> -> vector<16x1xf32>
    %563 = vector.broadcast %562 : vector<16x1xf32> to vector<16x16xf32>
    %564 = arith.mulf %559, %563 : vector<16x16xf32>
    %565 = arith.mulf %564, %480 : vector<16x16xf32>
    %cst_153 = arith.constant 0.00999999977 : f32
    %566 = vector.broadcast %cst_153 : f32 to vector<16x16xf32>
    %567 = arith.mulf %566, %551 : vector<16x16xf32>
    %568 = arith.subf %482, %567 : vector<16x16xf32>
    %cst_154 = arith.constant dense<0xFF800000> : vector<16xf32>
    %569 = vector.multi_reduction <maximumf>, %568, %cst_154 [0] : vector<16x16xf32> to vector<16xf32>
    %570 = vector.shape_cast %569 : vector<16xf32> to vector<1x16xf32>
    %571 = vector.broadcast %570 : vector<1x16xf32> to vector<16x16xf32>
    %572 = arith.subf %568, %571 : vector<16x16xf32>
    %573 = math.exp %572 : vector<16x16xf32>
    %cst_155 = arith.constant dense<0.000000e+00> : vector<16xf32>
    %574 = vector.multi_reduction <add>, %573, %cst_155 [0] : vector<16x16xf32> to vector<16xf32>
    %575 = vector.shape_cast %574 : vector<16xf32> to vector<1x16xf32>
    %576 = tpu.reciprocal %575 {approx = true} : vector<1x16xf32> -> vector<1x16xf32>
    %577 = vector.broadcast %576 : vector<1x16xf32> to vector<16x16xf32>
    %578 = arith.mulf %573, %577 : vector<16x16xf32>
    %579 = arith.mulf %578, %482 : vector<16x16xf32>
    %580 = arith.subf %565, %480 : vector<16x16xf32>
    %cst_156 = arith.constant 2.000000e+00 : f32
    %581 = vector.broadcast %cst_156 : f32 to vector<16x16xf32>
    %582 = arith.mulf %581, %580 : vector<16x16xf32>
    %583 = vector.broadcast %536 : vector<1x1xf32> to vector<16x16xf32>
    %584 = arith.mulf %583, %497 : vector<16x16xf32>
    %585 = arith.addf %582, %584 : vector<16x16xf32>
    %586 = arith.subf %579, %482 : vector<16x16xf32>
    %cst_157 = arith.constant 2.000000e+00 : f32
    %587 = vector.broadcast %cst_157 : f32 to vector<16x16xf32>
    %588 = arith.mulf %587, %586 : vector<16x16xf32>
    %589 = vector.broadcast %536 : vector<1x1xf32> to vector<16x16xf32>
    %590 = arith.mulf %589, %499 : vector<16x16xf32>
    %591 = arith.addf %588, %590 : vector<16x16xf32>
    %592 = arith.addf %585, %591 : vector<16x16xf32>
    %593 = arith.mulf %585, %4 : vector<16x16xf32>
    %594 = arith.subf %592, %593 : vector<16x16xf32>
    %cst_158 = arith.constant 0.00999999977 : f32
    %595 = vector.broadcast %cst_158 : f32 to vector<16x16xf32>
    %596 = arith.mulf %595, %594 : vector<16x16xf32>
    %597 = arith.subf %565, %596 : vector<16x16xf32>
    %cst_159 = arith.constant dense<0xFF800000> : vector<16xf32>
    %598 = vector.multi_reduction <maximumf>, %597, %cst_159 [1] : vector<16x16xf32> to vector<16xf32>
    %599 = vector.shape_cast %598 : vector<16xf32> to vector<16x1xf32>
    %600 = vector.broadcast %599 : vector<16x1xf32> to vector<16x16xf32>
    %601 = arith.subf %597, %600 : vector<16x16xf32>
    %602 = math.exp %601 : vector<16x16xf32>
    %cst_160 = arith.constant dense<0.000000e+00> : vector<16xf32>
    %603 = vector.multi_reduction <add>, %602, %cst_160 [1] : vector<16x16xf32> to vector<16xf32>
    %604 = vector.shape_cast %603 : vector<16xf32> to vector<16x1xf32>
    %605 = tpu.reciprocal %604 {approx = true} : vector<16x1xf32> -> vector<16x1xf32>
    %606 = vector.broadcast %605 : vector<16x1xf32> to vector<16x16xf32>
    %607 = arith.mulf %602, %606 : vector<16x16xf32>
    %608 = arith.mulf %607, %480 : vector<16x16xf32>
    %cst_161 = arith.constant 0.00999999977 : f32
    %609 = vector.broadcast %cst_161 : f32 to vector<16x16xf32>
    %610 = arith.mulf %609, %594 : vector<16x16xf32>
    %611 = arith.subf %579, %610 : vector<16x16xf32>
    %cst_162 = arith.constant dense<0xFF800000> : vector<16xf32>
    %612 = vector.multi_reduction <maximumf>, %611, %cst_162 [0] : vector<16x16xf32> to vector<16xf32>
    %613 = vector.shape_cast %612 : vector<16xf32> to vector<1x16xf32>
    %614 = vector.broadcast %613 : vector<1x16xf32> to vector<16x16xf32>
    %615 = arith.subf %611, %614 : vector<16x16xf32>
    %616 = math.exp %615 : vector<16x16xf32>
    %cst_163 = arith.constant dense<0.000000e+00> : vector<16xf32>
    %617 = vector.multi_reduction <add>, %616, %cst_163 [0] : vector<16x16xf32> to vector<16xf32>
    %618 = vector.shape_cast %617 : vector<16xf32> to vector<1x16xf32>
    %619 = tpu.reciprocal %618 {approx = true} : vector<1x16xf32> -> vector<1x16xf32>
    %620 = vector.broadcast %619 : vector<1x16xf32> to vector<16x16xf32>
    %621 = arith.mulf %616, %620 : vector<16x16xf32>
    %622 = arith.mulf %621, %482 : vector<16x16xf32>
    %623 = arith.subf %608, %480 : vector<16x16xf32>
    %cst_164 = arith.constant 2.000000e+00 : f32
    %624 = vector.broadcast %cst_164 : f32 to vector<16x16xf32>
    %625 = arith.mulf %624, %623 : vector<16x16xf32>
    %626 = vector.broadcast %536 : vector<1x1xf32> to vector<16x16xf32>
    %627 = arith.mulf %626, %497 : vector<16x16xf32>
    %628 = arith.addf %625, %627 : vector<16x16xf32>
    %629 = arith.subf %622, %482 : vector<16x16xf32>
    %cst_165 = arith.constant 2.000000e+00 : f32
    %630 = vector.broadcast %cst_165 : f32 to vector<16x16xf32>
    %631 = arith.mulf %630, %629 : vector<16x16xf32>
    %632 = vector.broadcast %536 : vector<1x1xf32> to vector<16x16xf32>
    %633 = arith.mulf %632, %499 : vector<16x16xf32>
    %634 = arith.addf %631, %633 : vector<16x16xf32>
    %635 = arith.addf %628, %634 : vector<16x16xf32>
    %636 = arith.mulf %628, %4 : vector<16x16xf32>
    %637 = arith.subf %635, %636 : vector<16x16xf32>
    %cst_166 = arith.constant 0.00999999977 : f32
    %638 = vector.broadcast %cst_166 : f32 to vector<16x16xf32>
    %639 = arith.mulf %638, %637 : vector<16x16xf32>
    %640 = arith.subf %608, %639 : vector<16x16xf32>
    %cst_167 = arith.constant dense<0xFF800000> : vector<16xf32>
    %641 = vector.multi_reduction <maximumf>, %640, %cst_167 [1] : vector<16x16xf32> to vector<16xf32>
    %642 = vector.shape_cast %641 : vector<16xf32> to vector<16x1xf32>
    %643 = vector.broadcast %642 : vector<16x1xf32> to vector<16x16xf32>
    %644 = arith.subf %640, %643 : vector<16x16xf32>
    %645 = math.exp %644 : vector<16x16xf32>
    %cst_168 = arith.constant dense<0.000000e+00> : vector<16xf32>
    %646 = vector.multi_reduction <add>, %645, %cst_168 [1] : vector<16x16xf32> to vector<16xf32>
    %647 = vector.shape_cast %646 : vector<16xf32> to vector<16x1xf32>
    %648 = tpu.reciprocal %647 {approx = true} : vector<16x1xf32> -> vector<16x1xf32>
    %649 = vector.broadcast %648 : vector<16x1xf32> to vector<16x16xf32>
    %650 = arith.mulf %645, %649 : vector<16x16xf32>
    %651 = arith.mulf %650, %480 : vector<16x16xf32>
    %cst_169 = arith.constant 0.00999999977 : f32
    %652 = vector.broadcast %cst_169 : f32 to vector<16x16xf32>
    %653 = arith.mulf %652, %637 : vector<16x16xf32>
    %654 = arith.subf %622, %653 : vector<16x16xf32>
    %cst_170 = arith.constant dense<0xFF800000> : vector<16xf32>
    %655 = vector.multi_reduction <maximumf>, %654, %cst_170 [0] : vector<16x16xf32> to vector<16xf32>
    %656 = vector.shape_cast %655 : vector<16xf32> to vector<1x16xf32>
    %657 = vector.broadcast %656 : vector<1x16xf32> to vector<16x16xf32>
    %658 = arith.subf %654, %657 : vector<16x16xf32>
    %659 = math.exp %658 : vector<16x16xf32>
    %cst_171 = arith.constant dense<0.000000e+00> : vector<16xf32>
    %660 = vector.multi_reduction <add>, %659, %cst_171 [0] : vector<16x16xf32> to vector<16xf32>
    %661 = vector.shape_cast %660 : vector<16xf32> to vector<1x16xf32>
    %662 = tpu.reciprocal %661 {approx = true} : vector<1x16xf32> -> vector<1x16xf32>
    %663 = vector.broadcast %662 : vector<1x16xf32> to vector<16x16xf32>
    %664 = arith.mulf %659, %663 : vector<16x16xf32>
    %665 = arith.mulf %664, %482 : vector<16x16xf32>
    %666 = arith.subf %651, %480 : vector<16x16xf32>
    %cst_172 = arith.constant 2.000000e+00 : f32
    %667 = vector.broadcast %cst_172 : f32 to vector<16x16xf32>
    %668 = arith.mulf %667, %666 : vector<16x16xf32>
    %669 = vector.broadcast %536 : vector<1x1xf32> to vector<16x16xf32>
    %670 = arith.mulf %669, %497 : vector<16x16xf32>
    %671 = arith.addf %668, %670 : vector<16x16xf32>
    %672 = arith.subf %665, %482 : vector<16x16xf32>
    %cst_173 = arith.constant 2.000000e+00 : f32
    %673 = vector.broadcast %cst_173 : f32 to vector<16x16xf32>
    %674 = arith.mulf %673, %672 : vector<16x16xf32>
    %675 = vector.broadcast %536 : vector<1x1xf32> to vector<16x16xf32>
    %676 = arith.mulf %675, %499 : vector<16x16xf32>
    %677 = arith.addf %674, %676 : vector<16x16xf32>
    %678 = arith.addf %671, %677 : vector<16x16xf32>
    %679 = arith.mulf %671, %4 : vector<16x16xf32>
    %680 = arith.subf %678, %679 : vector<16x16xf32>
    %cst_174 = arith.constant 0.00999999977 : f32
    %681 = vector.broadcast %cst_174 : f32 to vector<16x16xf32>
    %682 = arith.mulf %681, %680 : vector<16x16xf32>
    %683 = arith.subf %651, %682 : vector<16x16xf32>
    %cst_175 = arith.constant dense<0xFF800000> : vector<16xf32>
    %684 = vector.multi_reduction <maximumf>, %683, %cst_175 [1] : vector<16x16xf32> to vector<16xf32>
    %685 = vector.shape_cast %684 : vector<16xf32> to vector<16x1xf32>
    %686 = vector.broadcast %685 : vector<16x1xf32> to vector<16x16xf32>
    %687 = arith.subf %683, %686 : vector<16x16xf32>
    %688 = math.exp %687 : vector<16x16xf32>
    %cst_176 = arith.constant dense<0.000000e+00> : vector<16xf32>
    %689 = vector.multi_reduction <add>, %688, %cst_176 [1] : vector<16x16xf32> to vector<16xf32>
    %690 = vector.shape_cast %689 : vector<16xf32> to vector<16x1xf32>
    %691 = tpu.reciprocal %690 {approx = true} : vector<16x1xf32> -> vector<16x1xf32>
    %692 = vector.broadcast %691 : vector<16x1xf32> to vector<16x16xf32>
    %693 = arith.mulf %688, %692 : vector<16x16xf32>
    %694 = arith.mulf %693, %480 : vector<16x16xf32>
    %cst_177 = arith.constant 0.00999999977 : f32
    %695 = vector.broadcast %cst_177 : f32 to vector<16x16xf32>
    %696 = arith.mulf %695, %680 : vector<16x16xf32>
    %697 = arith.subf %665, %696 : vector<16x16xf32>
    %cst_178 = arith.constant dense<0xFF800000> : vector<16xf32>
    %698 = vector.multi_reduction <maximumf>, %697, %cst_178 [0] : vector<16x16xf32> to vector<16xf32>
    %699 = vector.shape_cast %698 : vector<16xf32> to vector<1x16xf32>
    %700 = vector.broadcast %699 : vector<1x16xf32> to vector<16x16xf32>
    %701 = arith.subf %697, %700 : vector<16x16xf32>
    %702 = math.exp %701 : vector<16x16xf32>
    %cst_179 = arith.constant dense<0.000000e+00> : vector<16xf32>
    %703 = vector.multi_reduction <add>, %702, %cst_179 [0] : vector<16x16xf32> to vector<16xf32>
    %704 = vector.shape_cast %703 : vector<16xf32> to vector<1x16xf32>
    %705 = tpu.reciprocal %704 {approx = true} : vector<1x16xf32> -> vector<1x16xf32>
    %706 = vector.broadcast %705 : vector<1x16xf32> to vector<16x16xf32>
    %707 = arith.mulf %702, %706 : vector<16x16xf32>
    %708 = arith.mulf %707, %482 : vector<16x16xf32>
    %709 = arith.subf %694, %480 : vector<16x16xf32>
    %cst_180 = arith.constant 2.000000e+00 : f32
    %710 = vector.broadcast %cst_180 : f32 to vector<16x16xf32>
    %711 = arith.mulf %710, %709 : vector<16x16xf32>
    %712 = vector.broadcast %536 : vector<1x1xf32> to vector<16x16xf32>
    %713 = arith.mulf %712, %497 : vector<16x16xf32>
    %714 = arith.addf %711, %713 : vector<16x16xf32>
    %715 = arith.subf %708, %482 : vector<16x16xf32>
    %cst_181 = arith.constant 2.000000e+00 : f32
    %716 = vector.broadcast %cst_181 : f32 to vector<16x16xf32>
    %717 = arith.mulf %716, %715 : vector<16x16xf32>
    %718 = vector.broadcast %536 : vector<1x1xf32> to vector<16x16xf32>
    %719 = arith.mulf %718, %499 : vector<16x16xf32>
    %720 = arith.addf %717, %719 : vector<16x16xf32>
    %721 = arith.addf %714, %720 : vector<16x16xf32>
    %722 = arith.mulf %714, %4 : vector<16x16xf32>
    %723 = arith.subf %721, %722 : vector<16x16xf32>
    %cst_182 = arith.constant 0.00999999977 : f32
    %724 = vector.broadcast %cst_182 : f32 to vector<16x16xf32>
    %725 = arith.mulf %724, %723 : vector<16x16xf32>
    %726 = arith.subf %694, %725 : vector<16x16xf32>
    %cst_183 = arith.constant dense<0xFF800000> : vector<16xf32>
    %727 = vector.multi_reduction <maximumf>, %726, %cst_183 [1] : vector<16x16xf32> to vector<16xf32>
    %728 = vector.shape_cast %727 : vector<16xf32> to vector<16x1xf32>
    %729 = vector.broadcast %728 : vector<16x1xf32> to vector<16x16xf32>
    %730 = arith.subf %726, %729 : vector<16x16xf32>
    %731 = math.exp %730 : vector<16x16xf32>
    %cst_184 = arith.constant dense<0.000000e+00> : vector<16xf32>
    %732 = vector.multi_reduction <add>, %731, %cst_184 [1] : vector<16x16xf32> to vector<16xf32>
    %733 = vector.shape_cast %732 : vector<16xf32> to vector<16x1xf32>
    %734 = tpu.reciprocal %733 {approx = true} : vector<16x1xf32> -> vector<16x1xf32>
    %735 = vector.broadcast %734 : vector<16x1xf32> to vector<16x16xf32>
    %736 = arith.mulf %731, %735 : vector<16x16xf32>
    %737 = arith.mulf %736, %480 : vector<16x16xf32>
    %738 = arith.truncf %480 : vector<16x16xf32> to vector<16x16xbf16>
    %739 = arith.truncf %485 : vector<16x2xf32> to vector<16x2xbf16>
    %cst_185 = arith.constant dense<0.000000e+00> : vector<16x2xf32>
    %740 = tpu.matmul %738, %739, %cst_185 {dimension_numbers = #tpu.dot_dimension_numbers<[1], [0], [0], [1], [0, 0, 1, 1], [], []>} : vector<16x16xbf16>, vector<16x2xbf16>, vector<16x2xf32> -> vector<16x2xf32>
    %741 = arith.mulf %740, %485 : vector<16x2xf32>
    %742 = vector.shape_cast %741 : vector<16x2xf32> to vector<1x16x2xf32>
    %cst_186 = arith.constant dense<0.000000e+00> : vector<1xf32>
    %743 = vector.multi_reduction <add>, %742, %cst_186 [1, 2] : vector<1x16x2xf32> to vector<1xf32>
    %744 = vector.shape_cast %743 : vector<1xf32> to vector<1x1x1xf32>
    %745 = vector.extract %744[0, 0, 0] : f32 from vector<1x1x1xf32>
    %746 = vector.broadcast %745 : f32 to vector<1x1xf32>
    %747 = arith.mulf %485, %485 : vector<16x2xf32>
    %cst_187 = arith.constant dense<0.000000e+00> : vector<16xf32>
    %748 = vector.multi_reduction <add>, %747, %cst_187 [1] : vector<16x2xf32> to vector<16xf32>
    %749 = vector.shape_cast %748 : vector<16xf32> to vector<16x1xf32>
    %750 = arith.mulf %501, %749 : vector<16x1xf32>
    %751 = vector.shape_cast %750 : vector<16x1xf32> to vector<1x16x1xf32>
    %cst_188 = arith.constant dense<0.000000e+00> : vector<1xf32>
    %752 = vector.multi_reduction <add>, %751, %cst_188 [1, 2] : vector<1x16x1xf32> to vector<1xf32>
    %753 = vector.shape_cast %752 : vector<1xf32> to vector<1x1x1xf32>
    %754 = vector.extract %753[0, 0, 0] : f32 from vector<1x1x1xf32>
    %755 = vector.broadcast %754 : f32 to vector<1x1xf32>
    %756 = arith.divf %746, %755 : vector<1x1xf32>
    %757 = arith.subf %419, %756 : vector<1x1xf32>
    %758 = arith.truncf %485 : vector<16x2xf32> to vector<16x2xbf16>
    %759 = arith.truncf %485 : vector<16x2xf32> to vector<16x2xbf16>
    %cst_189 = arith.constant dense<0.000000e+00> : vector<2x2xf32>
    %760 = tpu.matmul %758, %759, %cst_189 {dimension_numbers = #tpu.dot_dimension_numbers<[0], [0], [1], [1], [0, 1, 1, 1], [], []>} : vector<16x2xbf16>, vector<16x2xbf16>, vector<2x2xf32> -> vector<2x2xf32>
    %761 = arith.mulf %485, %485 : vector<16x2xf32>
    %762 = vector.shape_cast %761 : vector<16x2xf32> to vector<1x16x2xf32>
    %cst_190 = arith.constant dense<0.000000e+00> : vector<1xf32>
    %763 = vector.multi_reduction <add>, %762, %cst_190 [1, 2] : vector<1x16x2xf32> to vector<1xf32>
    %764 = vector.shape_cast %763 : vector<1xf32> to vector<1x1x1xf32>
    %765 = vector.extract %764[0, 0, 0] : f32 from vector<1x1x1xf32>
    %766 = vector.broadcast %765 : f32 to vector<1x1xf32>
    %cst_191 = arith.constant 1.41421354 : f32
    %767 = vector.broadcast %cst_191 : f32 to vector<1x1xf32>
    %768 = arith.mulf %767, %766 : vector<1x1xf32>
    %769 = arith.mulf %760, %760 : vector<2x2xf32>
    %770 = vector.shape_cast %769 : vector<2x2xf32> to vector<1x2x2xf32>
    %cst_192 = arith.constant dense<0.000000e+00> : vector<1xf32>
    %771 = vector.multi_reduction <add>, %770, %cst_192 [1, 2] : vector<1x2x2xf32> to vector<1xf32>
    %772 = vector.shape_cast %771 : vector<1xf32> to vector<1x1x1xf32>
    %773 = vector.extract %772[0, 0, 0] : f32 from vector<1x1x1xf32>
    %774 = vector.broadcast %773 : f32 to vector<1x1xf32>
    %775 = math.rsqrt %774 : vector<1x1xf32>
    %776 = arith.mulf %768, %775 : vector<1x1xf32>
    %cst_193 = arith.constant 2.000000e+00 : f32
    %777 = vector.broadcast %cst_193 : f32 to vector<1x1xf32>
    %778 = arith.subf %777, %776 : vector<1x1xf32>
    %cst_194 = arith.constant 0.000000e+00 : f32
    %779 = vector.broadcast %cst_194 : f32 to vector<1x1xf32>
    %780 = arith.maximumf %778, %779 : vector<1x1xf32>
    %781 = math.sqrt %780 : vector<1x1xf32>
    %782 = arith.addf %442, %781 : vector<1x1xf32>
    %783 = vector.extract_strided_slice %34 {offsets = [16, 0], sizes = [16, 32], strides = [1, 1]} : vector<32x32xf32> to vector<16x32xf32>
    %784 = arith.truncf %737 : vector<16x16xf32> to vector<16x16xbf16>
    %785 = arith.truncf %783 : vector<16x32xf32> to vector<16x32xbf16>
    %cst_195 = arith.constant dense<0.000000e+00> : vector<16x32xf32>
    %786 = tpu.matmul %784, %785, %cst_195 {dimension_numbers = #tpu.dot_dimension_numbers<[1], [0], [0], [1], [0, 0, 1, 1], [], []>} : vector<16x16xbf16>, vector<16x32xbf16>, vector<16x32xf32> -> vector<16x32xf32>
    %787 = vector.extract_strided_slice %37 {offsets = [16, 0], sizes = [16, 32], strides = [1, 1]} : vector<32x32xf32> to vector<16x32xf32>
    %788 = arith.addf %786, %787 : vector<16x32xf32>
    %c0_196 = arith.constant 0 : index
    %c0_197 = arith.constant 0 : index
    %789 = vector.load %arg9[%c0_196, %c0_197] : memref<1x32xf32, #tpu.memory_space<vmem>>, vector<1x32xf32>
    %790 = vector.broadcast %789 : vector<1x32xf32> to vector<16x32xf32>
    %791 = arith.addf %788, %790 : vector<16x32xf32>
    %c0_198 = arith.constant 0 : index
    %c0_199 = arith.constant 0 : index
    %792 = vector.load %arg11[%c0_198, %c0_199] : memref<32x16xbf16, #tpu.memory_space<vmem>>, vector<32x16xbf16>
    %793 = arith.truncf %791 : vector<16x32xf32> to vector<16x32xbf16>
    %cst_200 = arith.constant dense<0.000000e+00> : vector<16x16xf32>
    %794 = tpu.matmul %793, %792, %cst_200 {dimension_numbers = #tpu.dot_dimension_numbers<[1], [0], [0], [1], [0, 0, 1, 1], [], []>} : vector<16x32xbf16>, vector<32x16xbf16>, vector<16x16xf32> -> vector<16x16xf32>
    %c0_201 = arith.constant 0 : index
    %c0_202 = arith.constant 0 : index
    %795 = vector.load %arg12[%c0_201, %c0_202] : memref<1x16xf32, #tpu.memory_space<vmem>>, vector<1x16xf32>
    %796 = vector.broadcast %795 : vector<1x16xf32> to vector<16x16xf32>
    %797 = arith.addf %794, %796 : vector<16x16xf32>
    %cst_203 = arith.constant dense<0xFF800000> : vector<16xf32>
    %798 = vector.multi_reduction <maximumf>, %797, %cst_203 [1] : vector<16x16xf32> to vector<16xf32>
    %799 = vector.shape_cast %798 : vector<16xf32> to vector<16x1xf32>
    %800 = vector.broadcast %799 : vector<16x1xf32> to vector<16x16xf32>
    %801 = arith.subf %797, %800 : vector<16x16xf32>
    %802 = math.exp %801 : vector<16x16xf32>
    %cst_204 = arith.constant dense<0.000000e+00> : vector<16xf32>
    %803 = vector.multi_reduction <add>, %802, %cst_204 [1] : vector<16x16xf32> to vector<16xf32>
    %804 = vector.shape_cast %803 : vector<16xf32> to vector<16x1xf32>
    %805 = tpu.reciprocal %804 {approx = true} : vector<16x1xf32> -> vector<16x1xf32>
    %806 = vector.broadcast %805 : vector<16x1xf32> to vector<16x16xf32>
    %807 = arith.mulf %802, %806 : vector<16x16xf32>
    %808 = vector.broadcast %484 : vector<16x1xf32> to vector<16x32xf32>
    %809 = arith.mulf %791, %808 : vector<16x32xf32>
    %810 = vector.broadcast %484 : vector<16x1xf32> to vector<16x16xf32>
    %811 = arith.mulf %807, %810 : vector<16x16xf32>
    %812 = arith.truncf %811 : vector<16x16xf32> to vector<16x16xbf16>
    %813 = arith.truncf %809 : vector<16x32xf32> to vector<16x32xbf16>
    %cst_205 = arith.constant dense<0.000000e+00> : vector<16x32xf32>
    %814 = tpu.matmul %812, %813, %cst_205 {dimension_numbers = #tpu.dot_dimension_numbers<[0], [0], [1], [1], [0, 1, 1, 1], [], []>} : vector<16x16xbf16>, vector<16x32xbf16>, vector<16x32xf32> -> vector<16x32xf32>
    %815 = arith.truncf %811 : vector<16x16xf32> to vector<16x16xbf16>
    %816 = arith.truncf %737 : vector<16x16xf32> to vector<16x16xbf16>
    %cst_206 = arith.constant dense<0.000000e+00> : vector<16x16xf32>
    %817 = tpu.matmul %815, %816, %cst_206 {dimension_numbers = #tpu.dot_dimension_numbers<[0], [0], [1], [1], [0, 1, 1, 1], [], []>} : vector<16x16xbf16>, vector<16x16xbf16>, vector<16x16xf32> -> vector<16x16xf32>
    %818 = arith.truncf %817 : vector<16x16xf32> to vector<16x16xbf16>
    %819 = arith.truncf %811 : vector<16x16xf32> to vector<16x16xbf16>
    %cst_207 = arith.constant dense<0.000000e+00> : vector<16x16xf32>
    %820 = tpu.matmul %818, %819, %cst_207 {dimension_numbers = #tpu.dot_dimension_numbers<[1], [0], [0], [1], [0, 0, 1, 1], [], []>} : vector<16x16xbf16>, vector<16x16xbf16>, vector<16x16xf32> -> vector<16x16xf32>
    %821 = arith.mulf %820, %9 : vector<16x16xf32>
    %822 = vector.shape_cast %821 : vector<16x16xf32> to vector<1x16x16xf32>
    %cst_208 = arith.constant dense<0.000000e+00> : vector<1xf32>
    %823 = vector.multi_reduction <add>, %822, %cst_208 [1, 2] : vector<1x16x16xf32> to vector<1xf32>
    %824 = vector.shape_cast %823 : vector<1xf32> to vector<1x1x1xf32>
    %825 = vector.extract %824[0, 0, 0] : f32 from vector<1x1x1xf32>
    %826 = vector.broadcast %825 : f32 to vector<1x1xf32>
    %cst_209 = arith.constant dense<0.000000e+00> : vector<16xf32>
    %827 = vector.multi_reduction <add>, %737, %cst_209 [1] : vector<16x16xf32> to vector<16xf32>
    %828 = vector.shape_cast %827 : vector<16xf32> to vector<16x1xf32>
    %cst_210 = arith.constant 1.000000e-15 : f32
    %829 = vector.broadcast %cst_210 : f32 to vector<16x1xf32>
    %830 = arith.addf %828, %829 : vector<16x1xf32>
    %831 = arith.mulf %811, %811 : vector<16x16xf32>
    %cst_211 = arith.constant dense<0.000000e+00> : vector<16xf32>
    %832 = vector.multi_reduction <add>, %831, %cst_211 [1] : vector<16x16xf32> to vector<16xf32>
    %833 = vector.shape_cast %832 : vector<16xf32> to vector<16x1xf32>
    %834 = arith.mulf %830, %833 : vector<16x1xf32>
    %835 = vector.shape_cast %834 : vector<16x1xf32> to vector<1x16x1xf32>
    %cst_212 = arith.constant dense<0.000000e+00> : vector<1xf32>
    %836 = vector.multi_reduction <add>, %835, %cst_212 [1, 2] : vector<1x16x1xf32> to vector<1xf32>
    %837 = vector.shape_cast %836 : vector<1xf32> to vector<1x1x1xf32>
    %838 = vector.extract %837[0, 0, 0] : f32 from vector<1x1x1xf32>
    %839 = vector.broadcast %838 : f32 to vector<1x1xf32>
    %840 = arith.divf %826, %839 : vector<1x1xf32>
    %841 = arith.subf %757, %840 : vector<1x1xf32>
    %842 = arith.truncf %811 : vector<16x16xf32> to vector<16x16xbf16>
    %843 = arith.truncf %811 : vector<16x16xf32> to vector<16x16xbf16>
    %cst_213 = arith.constant dense<0.000000e+00> : vector<16x16xf32>
    %844 = tpu.matmul %842, %843, %cst_213 {dimension_numbers = #tpu.dot_dimension_numbers<[0], [0], [1], [1], [0, 1, 1, 1], [], []>} : vector<16x16xbf16>, vector<16x16xbf16>, vector<16x16xf32> -> vector<16x16xf32>
    %845 = arith.mulf %844, %844 : vector<16x16xf32>
    %846 = vector.shape_cast %845 : vector<16x16xf32> to vector<1x16x16xf32>
    %cst_214 = arith.constant dense<0.000000e+00> : vector<1xf32>
    %847 = vector.multi_reduction <add>, %846, %cst_214 [1, 2] : vector<1x16x16xf32> to vector<1xf32>
    %848 = vector.shape_cast %847 : vector<1xf32> to vector<1x1x1xf32>
    %849 = vector.extract %848[0, 0, 0] : f32 from vector<1x1x1xf32>
    %850 = vector.broadcast %849 : f32 to vector<1x1xf32>
    %851 = math.rsqrt %850 : vector<1x1xf32>
    %852 = vector.broadcast %851 : vector<1x1xf32> to vector<16x16xf32>
    %853 = arith.mulf %844, %852 : vector<16x16xf32>
    %cst_215 = arith.constant 2.500000e-01 : f32
    %854 = vector.broadcast %cst_215 : f32 to vector<16x16xf32>
    %855 = arith.mulf %9, %854 : vector<16x16xf32>
    %856 = arith.subf %853, %855 : vector<16x16xf32>
    %857 = arith.mulf %856, %856 : vector<16x16xf32>
    %858 = vector.shape_cast %857 : vector<16x16xf32> to vector<1x16x16xf32>
    %cst_216 = arith.constant dense<0.000000e+00> : vector<1xf32>
    %859 = vector.multi_reduction <add>, %858, %cst_216 [1, 2] : vector<1x16x16xf32> to vector<1xf32>
    %860 = vector.shape_cast %859 : vector<1xf32> to vector<1x1x1xf32>
    %861 = vector.extract %860[0, 0, 0] : f32 from vector<1x1x1xf32>
    %862 = vector.broadcast %861 : f32 to vector<1x1xf32>
    %863 = math.sqrt %862 : vector<1x1xf32>
    %864 = arith.addf %782, %863 : vector<1x1xf32>
    %cst_217 = arith.constant 1.000000e+00 : f32
    %865 = vector.broadcast %cst_217 : f32 to vector<16x16xf32>
    %866 = arith.subf %865, %9 : vector<16x16xf32>
    %867 = arith.mulf %820, %866 : vector<16x16xf32>
    %cst_218 = arith.constant dense<0.000000e+00> : vector<16xf32>
    %868 = vector.multi_reduction <add>, %867, %cst_218 [1] : vector<16x16xf32> to vector<16xf32>
    %869 = vector.shape_cast %868 : vector<16xf32> to vector<16x1xf32>
    %cst_219 = arith.constant 1.000000e-15 : f32
    %870 = vector.broadcast %cst_219 : f32 to vector<16x1xf32>
    %871 = arith.addf %869, %870 : vector<16x1xf32>
    %872 = math.rsqrt %871 : vector<16x1xf32>
    %c0_220 = arith.constant 0 : index
    %c0_221 = arith.constant 0 : index
    %873 = vector.load %arg13[%c0_220, %c0_221] : memref<32x32xbf16, #tpu.memory_space<vmem>>, vector<32x32xbf16>
    %874 = arith.truncf %814 : vector<16x32xf32> to vector<16x32xbf16>
    %cst_222 = arith.constant dense<0.000000e+00> : vector<16x32xf32>
    %875 = tpu.matmul %874, %873, %cst_222 {dimension_numbers = #tpu.dot_dimension_numbers<[1], [0], [0], [1], [0, 0, 1, 1], [], []>} : vector<16x32xbf16>, vector<32x32xbf16>, vector<16x32xf32> -> vector<16x32xf32>
    %c0_223 = arith.constant 0 : index
    %c0_224 = arith.constant 0 : index
    %876 = vector.load %arg15[%c0_223, %c0_224] : memref<32x32xbf16, #tpu.memory_space<vmem>>, vector<32x32xbf16>
    %877 = arith.truncf %814 : vector<16x32xf32> to vector<16x32xbf16>
    %cst_225 = arith.constant dense<0.000000e+00> : vector<16x32xf32>
    %878 = tpu.matmul %877, %876, %cst_225 {dimension_numbers = #tpu.dot_dimension_numbers<[1], [0], [0], [1], [0, 0, 1, 1], [], []>} : vector<16x32xbf16>, vector<32x32xbf16>, vector<16x32xf32> -> vector<16x32xf32>
    %879 = vector.broadcast %872 : vector<16x1xf32> to vector<16x16xf32>
    %880 = arith.mulf %867, %879 : vector<16x16xf32>
    %881 = vector.broadcast %872 : vector<16x1xf32> to vector<16x32xf32>
    %882 = arith.mulf %875, %881 : vector<16x32xf32>
    %883 = arith.truncf %880 : vector<16x16xf32> to vector<16x16xbf16>
    %884 = arith.truncf %882 : vector<16x32xf32> to vector<16x32xbf16>
    %cst_226 = arith.constant dense<0.000000e+00> : vector<16x32xf32>
    %885 = tpu.matmul %883, %884, %cst_226 {dimension_numbers = #tpu.dot_dimension_numbers<[1], [0], [0], [1], [0, 0, 1, 1], [], []>} : vector<16x16xbf16>, vector<16x32xbf16>, vector<16x32xf32> -> vector<16x32xf32>
    %886 = arith.addf %885, %878 : vector<16x32xf32>
    %c0_227 = arith.constant 0 : index
    %c0_228 = arith.constant 0 : index
    %887 = vector.load %arg14[%c0_227, %c0_228] : memref<1x32xf32, #tpu.memory_space<vmem>>, vector<1x32xf32>
    %888 = vector.broadcast %887 : vector<1x32xf32> to vector<16x32xf32>
    %889 = arith.addf %886, %888 : vector<16x32xf32>
    %cst_229 = arith.constant dense<0.000000e+00> : vector<32xf32>
    %890 = vector.multi_reduction <add>, %889, %cst_229 [0] : vector<16x32xf32> to vector<32xf32>
    %891 = vector.shape_cast %890 : vector<32xf32> to vector<1x32xf32>
    %c1_i32 = arith.constant 1 : i32
    %892 = vector.broadcast %c1_i32 : i32 to vector<2x1xi32>
    %893 = arith.cmpi eq, %53, %892 : vector<2x1xi32>
    %cst_230 = arith.constant 0.000000e+00 : f32
    %894 = vector.shape_cast %893 : vector<2x1xi1> to vector<2x1xi1>
    %895 = vector.broadcast %894 : vector<2x1xi1> to vector<2x32xi1>
    %896 = vector.shape_cast %891 : vector<1x32xf32> to vector<1x32xf32>
    %897 = vector.broadcast %896 : vector<1x32xf32> to vector<2x32xf32>
    %898 = vector.broadcast %cst_230 : f32 to vector<2x32xf32>
    %899 = arith.select %895, %897, %898 : vector<2x32xi1>, vector<2x32xf32>
    %900 = arith.addf %478, %899 : vector<2x32xf32>
    %c0_231 = arith.constant 0 : index
    %c0_232 = arith.constant 0 : index
    %901 = vector.load %arg16[%c0_231, %c0_232] : memref<32x32xbf16, #tpu.memory_space<vmem>>, vector<32x32xbf16>
    %902 = arith.truncf %900 : vector<2x32xf32> to vector<2x32xbf16>
    %cst_233 = arith.constant dense<0.000000e+00> : vector<2x32xf32>
    %903 = tpu.matmul %902, %901, %cst_233 {dimension_numbers = #tpu.dot_dimension_numbers<[1], [0], [0], [1], [0, 0, 1, 1], [], []>} : vector<2x32xbf16>, vector<32x32xbf16>, vector<2x32xf32> -> vector<2x32xf32>
    %c0_234 = arith.constant 0 : index
    %c0_235 = arith.constant 0 : index
    %904 = vector.load %arg17[%c0_234, %c0_235] : memref<1x32xf32, #tpu.memory_space<vmem>>, vector<1x32xf32>
    %905 = vector.broadcast %904 : vector<1x32xf32> to vector<2x32xf32>
    %906 = arith.addf %903, %905 : vector<2x32xf32>
    %cst_236 = arith.constant 0.000000e+00 : f32
    %907 = vector.broadcast %cst_236 : f32 to vector<2x32xf32>
    %908 = arith.maximumf %906, %907 : vector<2x32xf32>
    %c0_237 = arith.constant 0 : index
    %c0_238 = arith.constant 0 : index
    %909 = vector.load %arg18[%c0_237, %c0_238] : memref<32x8xbf16, #tpu.memory_space<vmem>>, vector<32x8xbf16>
    %910 = arith.truncf %908 : vector<2x32xf32> to vector<2x32xbf16>
    %cst_239 = arith.constant dense<0.000000e+00> : vector<2x8xf32>
    %911 = tpu.matmul %910, %909, %cst_239 {dimension_numbers = #tpu.dot_dimension_numbers<[1], [0], [0], [1], [0, 0, 1, 1], [], []>} : vector<2x32xbf16>, vector<32x8xbf16>, vector<2x8xf32> -> vector<2x8xf32>
    %c0_240 = arith.constant 0 : index
    %c0_241 = arith.constant 0 : index
    %912 = vector.load %arg19[%c0_240, %c0_241] : memref<1x8xf32, #tpu.memory_space<vmem>>, vector<1x8xf32>
    %913 = vector.broadcast %912 : vector<1x8xf32> to vector<2x8xf32>
    %914 = arith.addf %911, %913 : vector<2x8xf32>
    %cst_242 = arith.constant dense<0xFF800000> : vector<2xf32>
    %915 = vector.multi_reduction <maximumf>, %914, %cst_242 [1] : vector<2x8xf32> to vector<2xf32>
    %916 = vector.shape_cast %915 : vector<2xf32> to vector<2x1xf32>
    %917 = vector.broadcast %916 : vector<2x1xf32> to vector<2x8xf32>
    %918 = arith.subf %914, %917 : vector<2x8xf32>
    %919 = math.exp %918 : vector<2x8xf32>
    %cst_243 = arith.constant dense<0.000000e+00> : vector<2xf32>
    %920 = vector.multi_reduction <add>, %919, %cst_243 [1] : vector<2x8xf32> to vector<2xf32>
    %921 = vector.shape_cast %920 : vector<2xf32> to vector<2x1xf32>
    %922 = math.log %921 : vector<2x1xf32>
    %923 = vector.broadcast %922 : vector<2x1xf32> to vector<2x8xf32>
    %924 = arith.subf %918, %923 : vector<2x8xf32>
    %c0_244 = arith.constant 0 : index
    %c0_245 = arith.constant 0 : index
    %925 = vector.load %arg20[%c0_244, %c0_245] : memref<2x8xf32, #tpu.memory_space<vmem>>, vector<2x8xf32>
    tpu.vector_store %arg20[%c0_244, %c0_245], %924 {strides = array<i32>} : memref<2x8xf32, #tpu.memory_space<vmem>>, vector<2x8xf32>,
    %cst_246 = arith.constant 5.000000e-01 : f32
    %926 = vector.broadcast %cst_246 : f32 to vector<1x1xf32>
    %927 = arith.mulf %841, %926 : vector<1x1xf32>
    %c0_247 = arith.constant 0 : index
    %c0_248 = arith.constant 0 : index
    %928 = vector.load %arg21[%c0_247, %c0_248] : memref<1x1xf32, #tpu.memory_space<vmem>>, vector<1x1xf32>
    tpu.vector_store %arg21[%c0_247, %c0_248], %927 {strides = array<i32>} : memref<1x1xf32, #tpu.memory_space<vmem>>, vector<1x1xf32>,
    %cst_249 = arith.constant 5.000000e-01 : f32
    %929 = vector.broadcast %cst_249 : f32 to vector<1x1xf32>
    %930 = arith.mulf %864, %929 : vector<1x1xf32>
    %c0_250 = arith.constant 0 : index
    %c0_251 = arith.constant 0 : index
    %931 = vector.load %arg22[%c0_250, %c0_251] : memref<1x1xf32, #tpu.memory_space<vmem>>, vector<1x1xf32>
    tpu.vector_store %arg22[%c0_250, %c0_251], %930 {strides = array<i32>} : memref<1x1xf32, #tpu.memory_space<vmem>>, vector<1x1xf32>,
    return
  }
}

</mosaic_0001>

<llo_original>
// kernel: tpu_custom_call.1
$region0: #{tpu_custom_call.1}
  #allocation0 [shape = 'u32[]', space=smem, size = 0x4, offset = 0x4, fixed_abs, tag = 'smem constant byte address 0x4 - core index']
  #allocation1 [shape = 'u32[144,128]{1,0:T(1,128)}', space=vmem, size = 0x12000, scoped, tag = 'internal scratch']
  %s0 = inlined_call_operand.vmem [shape: bf16[32,4], index: 0, kind: input, shape index: {}]
  %s1 = inlined_call_operand.vmem [shape: f32[2,16,16], index: 1, kind: input, shape index: {}]
  %s2 = inlined_call_operand.vmem [shape: f32[2,16,16], index: 2, kind: input, shape index: {}]
  %s3 = inlined_call_operand.vmem [shape: f32[2,16,1], index: 3, kind: input, shape index: {}]
  %s4 = inlined_call_operand.hbm [shape: bf16[4,32], index: 4, kind: input, shape index: {}]
  %s5 = inlined_call_operand.vmem [shape: f32[1,32], index: 5, kind: input, shape index: {}]
  %s6 = inlined_call_operand.vmem [shape: bf16[32,2], index: 6, kind: input, shape index: {}]
  %s7 = inlined_call_operand.vmem [shape: f32[1,2], index: 7, kind: input, shape index: {}]
  %s8 = inlined_call_operand.vmem [shape: bf16[32,32], index: 8, kind: input, shape index: {}]
  %s9 = inlined_call_operand.hbm [shape: f32[1,32], index: 9, kind: input, shape index: {}]
  %s10 = inlined_call_operand.vmem [shape: bf16[32,32], index: 10, kind: input, shape index: {}]
  %s11 = inlined_call_operand.vmem [shape: bf16[32,16], index: 11, kind: input, shape index: {}]
  %s12 = inlined_call_operand.hbm [shape: f32[1,16], index: 12, kind: input, shape index: {}]
  %s13 = inlined_call_operand.vmem [shape: bf16[32,32], index: 13, kind: input, shape index: {}]
  %s14 = inlined_call_operand.vmem [shape: f32[1,32], index: 14, kind: input, shape index: {}]
  %s15 = inlined_call_operand.vmem [shape: bf16[32,32], index: 15, kind: input, shape index: {}]
  %s16 = inlined_call_operand.vmem [shape: bf16[32,32], index: 16, kind: input, shape index: {}]
  %s17 = inlined_call_operand.vmem [shape: f32[1,32], index: 17, kind: input, shape index: {}]
  %s18 = inlined_call_operand.vmem [shape: bf16[32,8], index: 18, kind: input, shape index: {}]
  %s19 = inlined_call_operand.vmem [shape: f32[1,8], index: 19, kind: input, shape index: {}]
  %s20 = inlined_call_operand.hbm [shape: f32[2,8], index: 20, kind: output, shape index: {0}]
  %s21 = inlined_call_operand.hbm [shape: f32[1,1], index: 21, kind: output, shape index: {1}]
  %s22 = inlined_call_operand.hbm [shape: f32[1,1], index: 22, kind: output, shape index: {2}]
  %23 = xla_tuple %s20, %s21, %s22
  %s24 = sld [smem:[#allocation0]]
  $region118: #{tpu_custom_call.1} parent=0
    _
  %s26 = ssub.s32 1, %s24
  %s27 = scalar_select 0, %s26, %s24
  $region1: #{tpu_custom_call.1} parent=0
    #allocation2 [shape = 'u8[1024]{0}', space=vmem, size = 0x400, scoped, tag = 'input window, operand 4, single buffered']
    #allocation3 [shape = 's32[1]{0}', space=sflag, size = 0x4, scoped, tag = 'scoped memory for tpu_custom_call.1']
    #allocation4 [shape = 's32[1]{0}', space=sflag, size = 0x4, scoped, tag = 'scoped memory for tpu_custom_call.1']
    #allocation5 [shape = 'u8[512]{0}', space=vmem, size = 0x400, scoped, tag = 'input window, operand 9, single buffered']
    #allocation6 [shape = 's32[1]{0}', space=sflag, size = 0x4, scoped, tag = 'scoped memory for tpu_custom_call.1']
    #allocation7 [shape = 'u8[512]{0}', space=vmem, size = 0x400, scoped, tag = 'input window, operand 12, single buffered']
    #allocation8 [shape = 'u8[1024]{0}', space=vmem, size = 0x400, scoped, tag = 'output window, operand 0, single buffered']
    #allocation9 [shape = 'u8[512]{0}', space=vmem, size = 0x400, scoped, tag = 'output window, operand 1, single buffered']
    #allocation10 [shape = 's32[1]{0}', space=sflag, size = 0x4, scoped, tag = 'scoped memory for tpu_custom_call.1']
    #allocation11 [shape = 'u8[512]{0}', space=vmem, size = 0x400, scoped, tag = 'output window, operand 2, single buffered']
    %28 = vsyncpa [#allocation3], 0
    %29 = vsyncpa [#allocation6], 0
    %30 = vsyncpa [#allocation4], 0
    %31 = vsyncpa [#allocation10], 0
    // Predicated region
    $region2: #{tpu_custom_call.1} parent=1 // pred_check
      _
    $region3: #{tpu_custom_call.1} parent=1 // pred_check_branch
      %33 = sbr.rel (0) target = $region5
    $region4: #{tpu_custom_call.1} parent=1 // pred_region
      _
    $region5: #{tpu_custom_call.1} parent=1 // pred_fallthru
      _
    // Predicated region
    $region6: #{tpu_custom_call.1} parent=1 // pred_check
      _
    $region7: #{tpu_custom_call.1} parent=1 // pred_check_branch
      %35 = sbr.rel (0) target = $region9
    $region8: #{tpu_custom_call.1} parent=1 // pred_region
      _
    $region9: #{tpu_custom_call.1} parent=1 // pred_fallthru
      _
    // Predicated region
    $region10: #{tpu_custom_call.1} parent=1 // pred_check
      _
    $region11: #{tpu_custom_call.1} parent=1 // pred_check_branch
      %37 = sbr.rel (0) target = $region13
    $region12: #{tpu_custom_call.1} parent=1 // pred_region
      _
    $region13: #{tpu_custom_call.1} parent=1 // pred_fallthru
      _
    // Predicated region
    $region14: #{tpu_custom_call.1} parent=1 // pred_check
      _
    $region15: #{tpu_custom_call.1} parent=1 // pred_check_branch
      %39 = sbr.rel (0) target = $region17
    $region16: #{tpu_custom_call.1} parent=1 // pred_region
      _
    $region17: #{tpu_custom_call.1} parent=1 // pred_fallthru
      _
    // Predicated region
    $region18: #{tpu_custom_call.1} parent=1 // pred_check
      _
    $region19: #{tpu_custom_call.1} parent=1 // pred_check_branch
      %41 = sbr.rel (0) target = $region21
    $region20: #{tpu_custom_call.1} parent=1 // pred_region
      %s43 = ssub.s32 32, 32
      %44 = vsyncadd [#allocation3], %s43
      %s46 = sshll.u32 [#allocation2], 4
      %s47 = int_to_ptr.vmem [resolvable:$true] %s46
      %49 = dma.hbm_to_vmem [thread:$0]  %s4, 32, %s47, [#allocation3]
    $region21: #{tpu_custom_call.1} parent=1 // pred_fallthru
      _
    // Predicated region
    $region22: #{tpu_custom_call.1} parent=1 // pred_check
      _
    $region23: #{tpu_custom_call.1} parent=1 // pred_check_branch
      %51 = sbr.rel (0) target = $region25
    $region24: #{tpu_custom_call.1} parent=1 // pred_region
      _
    $region25: #{tpu_custom_call.1} parent=1 // pred_fallthru
      _
    // Predicated region
    $region26: #{tpu_custom_call.1} parent=1 // pred_check
      _
    $region27: #{tpu_custom_call.1} parent=1 // pred_check_branch
      %53 = sbr.rel (0) target = $region29
    $region28: #{tpu_custom_call.1} parent=1 // pred_region
      _
    $region29: #{tpu_custom_call.1} parent=1 // pred_fallthru
      _
    // Predicated region
    $region30: #{tpu_custom_call.1} parent=1 // pred_check
      _
    $region31: #{tpu_custom_call.1} parent=1 // pred_check_branch
      %55 = sbr.rel (0) target = $region33
    $region32: #{tpu_custom_call.1} parent=1 // pred_region
      _
    $region33: #{tpu_custom_call.1} parent=1 // pred_fallthru
      _
    // Predicated region
    $region34: #{tpu_custom_call.1} parent=1 // pred_check
      _
    $region35: #{tpu_custom_call.1} parent=1 // pred_check_branch
      %57 = sbr.rel (0) target = $region37
    $region36: #{tpu_custom_call.1} parent=1 // pred_region
      _
    $region37: #{tpu_custom_call.1} parent=1 // pred_fallthru
      _
    // Predicated region
    $region38: #{tpu_custom_call.1} parent=1 // pred_check
      _
    $region39: #{tpu_custom_call.1} parent=1 // pred_check_branch
      %59 = sbr.rel (0) target = $region41
    $region40: #{tpu_custom_call.1} parent=1 // pred_region
      %s61 = ssub.s32 16, 16
      %62 = vsyncadd [#allocation6], %s61
      %s64 = sshll.u32 [#allocation5], 4
      %s65 = int_to_ptr.vmem [resolvable:$true] %s64
      %67 = dma.hbm_to_vmem [thread:$0]  %s9, 16, %s65, [#allocation6]
    $region41: #{tpu_custom_call.1} parent=1 // pred_fallthru
      _
    // Predicated region
    $region42: #{tpu_custom_call.1} parent=1 // pred_check
      _
    $region43: #{tpu_custom_call.1} parent=1 // pred_check_branch
      %69 = sbr.rel (0) target = $region45
    $region44: #{tpu_custom_call.1} parent=1 // pred_region
      _
    $region45: #{tpu_custom_call.1} parent=1 // pred_fallthru
      _
    // Predicated region
    $region46: #{tpu_custom_call.1} parent=1 // pred_check
      _
    $region47: #{tpu_custom_call.1} parent=1 // pred_check_branch
      %71 = sbr.rel (0) target = $region49
    $region48: #{tpu_custom_call.1} parent=1 // pred_region
      _
    $region49: #{tpu_custom_call.1} parent=1 // pred_fallthru
      _
    // Predicated region
    $region50: #{tpu_custom_call.1} parent=1 // pred_check
      _
    $region51: #{tpu_custom_call.1} parent=1 // pred_check_branch
      %73 = sbr.rel (0) target = $region53
    $region52: #{tpu_custom_call.1} parent=1 // pred_region
      %s75 = ssub.s32 16, 16
      %76 = vsyncadd [#allocation6], %s75
      %s78 = sshll.u32 [#allocation7], 4
      %s79 = int_to_ptr.vmem [resolvable:$true] %s78
      %81 = dma.hbm_to_vmem [thread:$0]  %s12, 16, %s79, [#allocation6]
    $region53: #{tpu_custom_call.1} parent=1 // pred_fallthru
      _
    // Predicated region
    $region54: #{tpu_custom_call.1} parent=1 // pred_check
      _
    $region55: #{tpu_custom_call.1} parent=1 // pred_check_branch
      %83 = sbr.rel (0) target = $region57
    $region56: #{tpu_custom_call.1} parent=1 // pred_region
      _
    $region57: #{tpu_custom_call.1} parent=1 // pred_fallthru
      _
    // Predicated region
    $region58: #{tpu_custom_call.1} parent=1 // pred_check
      _
    $region59: #{tpu_custom_call.1} parent=1 // pred_check_branch
      %85 = sbr.rel (0) target = $region61
    $region60: #{tpu_custom_call.1} parent=1 // pred_region
      _
    $region61: #{tpu_custom_call.1} parent=1 // pred_fallthru
      _
    // Predicated region
    $region62: #{tpu_custom_call.1} parent=1 // pred_check
      _
    $region63: #{tpu_custom_call.1} parent=1 // pred_check_branch
      %87 = sbr.rel (0) target = $region65
    $region64: #{tpu_custom_call.1} parent=1 // pred_region
      _
    $region65: #{tpu_custom_call.1} parent=1 // pred_fallthru
      _
    // Predicated region
    $region66: #{tpu_custom_call.1} parent=1 // pred_check
      _
    $region67: #{tpu_custom_call.1} parent=1 // pred_check_branch
      %89 = sbr.rel (0) target = $region69
    $region68: #{tpu_custom_call.1} parent=1 // pred_region
      _
    $region69: #{tpu_custom_call.1} parent=1 // pred_fallthru
      _
    // Predicated region
    $region70: #{tpu_custom_call.1} parent=1 // pred_check
      _
    $region71: #{tpu_custom_call.1} parent=1 // pred_check_branch
      %91 = sbr.rel (0) target = $region73
    $region72: #{tpu_custom_call.1} parent=1 // pred_region
      _
    $region73: #{tpu_custom_call.1} parent=1 // pred_fallthru
      _
    // Predicated region
    $region74: #{tpu_custom_call.1} parent=1 // pred_check
      _
    $region75: #{tpu_custom_call.1} parent=1 // pred_check_branch
      %93 = sbr.rel (0) target = $region77
    $region76: #{tpu_custom_call.1} parent=1 // pred_region
      _
    $region77: #{tpu_custom_call.1} parent=1 // pred_fallthru
      _
    // Predicated region
    $region78: #{tpu_custom_call.1} parent=1 // pred_check
      _
    $region79: #{tpu_custom_call.1} parent=1 // pred_check_branch
      %95 = sbr.rel (0) target = $region81
    $region80: #{tpu_custom_call.1} parent=1 // pred_region
      _
    $region81: #{tpu_custom_call.1} parent=1 // pred_fallthru
      _
    // Predicated region
    $region82: #{tpu_custom_call.1} parent=1 // pred_check
      _
    $region83: #{tpu_custom_call.1} parent=1 // pred_check_branch
      %97 = sbr.rel (0) target = $region85
    $region84: #{tpu_custom_call.1} parent=1 // pred_region
      %98 = dma.done [#allocation3], 32
    $region85: #{tpu_custom_call.1} parent=1 // pred_fallthru
      _
    // Predicated region
    $region86: #{tpu_custom_call.1} parent=1 // pred_check
      _
    $region87: #{tpu_custom_call.1} parent=1 // pred_check_branch
      %100 = sbr.rel (0) target = $region89
    $region88: #{tpu_custom_call.1} parent=1 // pred_region
      %101 = dma.done [#allocation6], 16
    $region89: #{tpu_custom_call.1} parent=1 // pred_fallthru
      _
    // Predicated region
    $region90: #{tpu_custom_call.1} parent=1 // pred_check
      _
    $region91: #{tpu_custom_call.1} parent=1 // pred_check_branch
      %103 = sbr.rel (0) target = $region93
    $region92: #{tpu_custom_call.1} parent=1 // pred_region
      %104 = dma.done [#allocation6], 16
    $region93: #{tpu_custom_call.1} parent=1 // pred_fallthru
      _
    %v106 = vlaneseq
    %v107 = vshrl.u32 %v106, 7
    %v108 = vadd.s32 %v107, 8
    %v109 = vlaneseq
    %v110 = vand.u32 %v109, 127
    %vm111 = vcmp.eq.s32.totalorder %v107, %v110
    %vm112 = vcmp.eq.s32.totalorder %v108, %v110
    %v113 = vsel %vm111, 1, 0
    %v114 = vsel %vm112, 1, 0
    %v115 = vcvt.s32.f32 %v113
    %v116 = vcvt.s32.f32 %v114
    %v117 = vld [vmem:[%s0] sm:$0xf]
    %v118 = vld [vmem:[%s0 + $0x4] sm:$0xf]
    %v119 = vld [vmem:[%s0 + $0x8] sm:$0xf]
    %v120 = vld [vmem:[%s0 + $0xc] sm:$0xf]
    %v121 = vld [vmem:[#allocation2] sm:$0x3]
    %v122 = vld [vmem:[%s5] sm:$0x1]
    %v124 = vlaneseq
    %v125 = vshrl.u32 %v124, 7
    %v126 = vsub.s32 0, %v125
    %v127 = vrot.slane %v122, %v126
    %v133 = vunpack.c.l.b16 %v117
    %v134 = vunpack.c.l.b16 %v118
    %v135 = vunpack.c.l.b16 %v119
    %v136 = vunpack.c.l.b16 %v120
    %v137 = vpack.c.b16 %v134, %v133
    %v138 = vpack.c.b16 %v136, %v135
    %vm139 = vcmask 31744
    %v141 = vsel %vm139, %v137, 0
    %v144 = vsel %vm139, %v138, 0
    %vm146 = vcmask 1041408
    %v148 = vsel %vm146, %v121, 0
    %150 = vmatprep.subr.bf16.mxu0 0
    %151 = vmatpush1.bf16.msra.mxu0 %v148
    %152 = vmatprep.subr.bf16.mxu0 0
    %153 = vmatpush1.bf16.msra.mxu0 0
    %154 = vmatprep.subr.bf16.mxu0 0
    %155 = vmatpush1.bf16.msra.mxu0 0
    %156 = vmatprep.subr.bf16.mxu0 0
    %157 = vmatpush1.bf16.msra.mxu0 0
    %158 = vmatprep.subr.bf16.mxu0 0
    %159 = vmatpush1.bf16.msra.mxu0 0
    %160 = vmatprep.subr.bf16.mxu0 0
    %161 = vmatpush1.bf16.msra.mxu0 0
    %162 = vmatprep.subr.bf16.mxu0 0
    %163 = vmatpush1.bf16.msra.mxu0 0
    %164 = vmatprep.subr.bf16.mxu0 0
    %165 = vmatpush1.bf16.msra.mxu0 0
    %166 = vmatprep.subr.bf16.mxu0 0
    %167 = vmatpush1.bf16.msra.mxu0 0
    %168 = vmatprep.subr.bf16.mxu0 0
    %169 = vmatpush1.bf16.msra.mxu0 0
    %170 = vmatprep.subr.bf16.mxu0 0
    %171 = vmatpush1.bf16.msra.mxu0 0
    %172 = vmatprep.subr.bf16.mxu0 0
    %173 = vmatpush1.bf16.msra.mxu0 0
    %174 = vmatprep.subr.bf16.mxu0 0
    %175 = vmatpush1.bf16.msra.mxu0 0
    %176 = vmatprep.subr.bf16.mxu0 0
    %177 = vmatpush1.bf16.msra.mxu0 0
    %178 = vmatprep.subr.bf16.mxu0 0
    %179 = vmatpush1.bf16.msra.mxu0 0
    %180 = vmatprep.subr.bf16.mxu0 0
    %181 = vmatpush1.bf16.msra.mxu0 0
    %182 = vmatprep.mubr.bf16.mxu0 0
    %183 = vmatmul.mubr.bf16.gmra.mrb[0].mxu0 %v141
    %v184 = vpop.f32.mrb[0].mxu0
    %v185 = vadd.f32 %v127, %v184
    %v186 = vpop.f32.mrb[0].mxu0
    %v187 = vpop.f32.mrb[0].mxu0
    %v188 = vadd.f32 %v127, %v187
    %v189 = vpop.f32.mrb[0].mxu0
    %190 = vmatprep.mubr.bf16.mxu0 0
    %191 = vmatmul.mubr.bf16.gmra.mrb[0].mxu0 %v144
    %v192 = vpop.f32.mrb[0].mxu0
    %v193 = vadd.f32 %v127, %v192
    %v194 = vpop.f32.mrb[0].mxu0
    %v195 = vpop.f32.mrb[0].mxu0
    %v196 = vadd.f32 %v127, %v195
    %v197 = vpop.f32.mrb[0].mxu0
    %198 = vdwg.mxu0
    %v199 = vld [vmem:[%s6] sm:$0xf]
    %v200 = vld [vmem:[%s6 + $0x4] sm:$0xf]
    %v201 = vld [vmem:[%s6 + $0x8] sm:$0xf]
    %v202 = vld [vmem:[%s6 + $0xc] sm:$0xf]
    %v203 = vpack.c.bf16 %v188, %v185
    %v204 = vpack.c.bf16 %v196, %v193
    %v205 = vld [vmem:[%s7] sm:$0x1]
    %v207 = vlaneseq
    %v208 = vshrl.u32 %v207, 7
    %v209 = vsub.s32 0, %v208
    %v210 = vrot.slane %v205, %v209
    %v216 = vunpack.c.l.b16 %v199
    %v217 = vunpack.c.l.b16 %v200
    %v218 = vunpack.c.l.b16 %v201
    %v219 = vunpack.c.l.b16 %v202
    %v220 = vpack.c.b16 %v217, %v216
    %v221 = vpack.c.b16 %v219, %v218
    %vm224 = vcmask 261120
    %v226 = vsel %vm224, %v203, 0
    %v229 = vsel %vm224, %v204, 0
    %231 = vmatprep.subr.bf16.mxu0 0
    %232 = vmatpush1.bf16.msra.mxu0 %v220
    %233 = vmatprep.subr.bf16.mxu0 0
    %234 = vmatpush1.bf16.msra.mxu0 %v221
    %235 = vmatprep.subr.bf16.mxu0 0
    %236 = vmatpush1.bf16.msra.mxu0 0
    %237 = vmatprep.subr.bf16.mxu0 0
    %238 = vmatpush1.bf16.msra.mxu0 0
    %239 = vmatprep.subr.bf16.mxu0 0
    %240 = vmatpush1.bf16.msra.mxu0 0
    %241 = vmatprep.subr.bf16.mxu0 0
    %242 = vmatpush1.bf16.msra.mxu0 0
    %243 = vmatprep.subr.bf16.mxu0 0
    %244 = vmatpush1.bf16.msra.mxu0 0
    %245 = vmatprep.subr.bf16.mxu0 0
    %246 = vmatpush1.bf16.msra.mxu0 0
    %247 = vmatprep.subr.bf16.mxu0 0
    %248 = vmatpush1.bf16.msra.mxu0 0
    %249 = vmatprep.subr.bf16.mxu0 0
    %250 = vmatpush1.bf16.msra.mxu0 0
    %251 = vmatprep.subr.bf16.mxu0 0
    %252 = vmatpush1.bf16.msra.mxu0 0
    %253 = vmatprep.subr.bf16.mxu0 0
    %254 = vmatpush1.bf16.msra.mxu0 0
    %255 = vmatprep.subr.bf16.mxu0 0
    %256 = vmatpush1.bf16.msra.mxu0 0
    %257 = vmatprep.subr.bf16.mxu0 0
    %258 = vmatpush1.bf16.msra.mxu0 0
    %259 = vmatprep.subr.bf16.mxu0 0
    %260 = vmatpush1.bf16.msra.mxu0 0
    %261 = vmatprep.subr.bf16.mxu0 0
    %262 = vmatpush1.bf16.msra.mxu0 0
    %263 = vmatprep.mubr.bf16.mxu0 0
    %264 = vmatmul.mubr.bf16.gmra.mrb[0].mxu0 %v226
    %v265 = vpop.f32.mrb[0].mxu0
    %v266 = vadd.f32 %v210, %v265
    %v267 = vpop.f32.mrb[0].mxu0
    %v268 = vpop.f32.mrb[0].mxu0
    %v269 = vadd.f32 %v210, %v268
    %v270 = vpop.f32.mrb[0].mxu0
    %271 = vmatprep.mubr.bf16.mxu0 0
    %272 = vmatmul.mubr.bf16.gmra.mrb[0].mxu0 %v229
    %v273 = vpop.f32.mrb[0].mxu0
    %v274 = vadd.f32 %v210, %v273
    %v275 = vpop.f32.mrb[0].mxu0
    %v276 = vpop.f32.mrb[0].mxu0
    %v277 = vadd.f32 %v210, %v276
    %v278 = vpop.f32.mrb[0].mxu0
    %279 = vdwg.mxu0
    %vm280 = vcmask 15360
    %v281 = vsel %vm280, %v266, -inf
    %282 = vmax.xlane.f32.xlu0 %v281
    %v283 = vpop.xlane.xlu0 %282
    %v284 = vsel %vm280, %v269, -inf
    %285 = vmax.xlane.f32.xlu0 %v284
    %v286 = vpop.xlane.xlu0 %285
    %v287 = vsel %vm280, %v274, -inf
    %288 = vmax.xlane.f32.xlu0 %v287
    %v289 = vpop.xlane.xlu0 %288
    %v290 = vsel %vm280, %v277, -inf
    %291 = vmax.xlane.f32.xlu0 %v290
    %v292 = vpop.xlane.xlu0 %291
    %v293 = vsub.f32 %v266, %v283
    %v294 = vsub.f32 %v269, %v286
    %v295 = vsub.f32 %v274, %v289
    %v296 = vsub.f32 %v277, %v292
    %v297 = vmul.f32 %v293, 1.442695
    %v298 = vpow.pop %v297
    %v299 = vmul.f32 %v294, 1.442695
    %v300 = vpow.pop %v299
    %v301 = vmul.f32 %v295, 1.442695
    %v302 = vpow.pop %v301
    %v303 = vmul.f32 %v296, 1.442695
    %v304 = vpow.pop %v303
    %v305 = vsel %vm280, %v298, 0.0
    %306 = vadd.xlane.f32.xlu0 %v305
    %v307 = vpop.xlane.xlu0 %306
    %v308 = vsel %vm280, %v300, 0.0
    %309 = vadd.xlane.f32.xlu0 %v308
    %v310 = vpop.xlane.xlu0 %309
    %v311 = vsel %vm280, %v302, 0.0
    %312 = vadd.xlane.f32.xlu0 %v311
    %v313 = vpop.xlane.xlu0 %312
    %v314 = vsel %vm280, %v304, 0.0
    %315 = vadd.xlane.f32.xlu0 %v314
    %v316 = vpop.xlane.xlu0 %315
    %v317 = vrcp.pop %v307
    %v318 = vrcp.pop %v310
    %v319 = vrcp.pop %v313
    %v320 = vrcp.pop %v316
    %v321 = vmul.f32 %v298, %v317
    %v322 = vmul.f32 %v300, %v318
    %v323 = vmul.f32 %v302, %v319
    %v324 = vmul.f32 %v304, %v320
    %v325 = vld [vmem:[%s8] sm:$0xf]
    %v326 = vld [vmem:[%s8 + $0x4] sm:$0xf]
    %v327 = vld [vmem:[%s8 + $0x8] sm:$0xf]
    %v328 = vld [vmem:[%s8 + $0xc] sm:$0xf]
    %v333 = vunpack.c.l.b16 %v325
    %v334 = vunpack.c.l.b16 %v326
    %v335 = vunpack.c.l.b16 %v327
    %v336 = vunpack.c.l.b16 %v328
    %v337 = vpack.c.b16 %v334, %v333
    %v338 = vpack.c.b16 %v336, %v335
    %341 = vmatprep.subr.bf16.mxu0 0
    %342 = vmatpush1.bf16.msra.mxu0 %v337
    %343 = vmatprep.subr.bf16.mxu0 0
    %344 = vmatpush1.bf16.msra.mxu0 %v338
    %345 = vmatprep.subr.bf16.mxu0 0
    %346 = vmatpush1.bf16.msra.mxu0 0
    %347 = vmatprep.subr.bf16.mxu0 0
    %348 = vmatpush1.bf16.msra.mxu0 0
    %349 = vmatprep.subr.bf16.mxu0 0
    %350 = vmatpush1.bf16.msra.mxu0 0
    %351 = vmatprep.subr.bf16.mxu0 0
    %352 = vmatpush1.bf16.msra.mxu0 0
    %353 = vmatprep.subr.bf16.mxu0 0
    %354 = vmatpush1.bf16.msra.mxu0 0
    %355 = vmatprep.subr.bf16.mxu0 0
    %356 = vmatpush1.bf16.msra.mxu0 0
    %357 = vmatprep.subr.bf16.mxu0 0
    %358 = vmatpush1.bf16.msra.mxu0 0
    %359 = vmatprep.subr.bf16.mxu0 0
    %360 = vmatpush1.bf16.msra.mxu0 0
    %361 = vmatprep.subr.bf16.mxu0 0
    %362 = vmatpush1.bf16.msra.mxu0 0
    %363 = vmatprep.subr.bf16.mxu0 0
    %364 = vmatpush1.bf16.msra.mxu0 0
    %365 = vmatprep.subr.bf16.mxu0 0
    %366 = vmatpush1.bf16.msra.mxu0 0
    %367 = vmatprep.subr.bf16.mxu0 0
    %368 = vmatpush1.bf16.msra.mxu0 0
    %369 = vmatprep.subr.bf16.mxu0 0
    %370 = vmatpush1.bf16.msra.mxu0 0
    %371 = vmatprep.subr.bf16.mxu0 0
    %372 = vmatpush1.bf16.msra.mxu0 0
    %373 = vmatprep.mubr.bf16.mxu0 0
    %374 = vmatmul.mubr.bf16.gmra.mrb[0].mxu0 %v226
    %v375 = vpop.f32.mrb[0].mxu0
    %v376 = vadd.f32 0.0, %v375
    %v377 = vpop.f32.mrb[0].mxu0
    %v378 = vpop.f32.mrb[0].mxu0
    %v379 = vadd.f32 0.0, %v378
    %v380 = vpop.f32.mrb[0].mxu0
    %381 = vmatprep.mubr.bf16.mxu0 0
    %382 = vmatmul.mubr.bf16.gmra.mrb[0].mxu0 %v229
    %v383 = vpop.f32.mrb[0].mxu0
    %v384 = vadd.f32 0.0, %v383
    %v385 = vpop.f32.mrb[0].mxu0
    %v386 = vpop.f32.mrb[0].mxu0
    %v387 = vadd.f32 0.0, %v386
    %v388 = vpop.f32.mrb[0].mxu0
    %389 = vdwg.mxu0
    %v390 = vld [vmem:[%s10] sm:$0xf]
    %v391 = vld [vmem:[%s10 + $0x4] sm:$0xf]
    %v392 = vld [vmem:[%s10 + $0x8] sm:$0xf]
    %v393 = vld [vmem:[%s10 + $0xc] sm:$0xf]
    %v398 = vunpack.c.l.b16 %v390
    %v399 = vunpack.c.l.b16 %v391
    %v400 = vunpack.c.l.b16 %v392
    %v401 = vunpack.c.l.b16 %v393
    %v402 = vpack.c.b16 %v399, %v398
    %v403 = vpack.c.b16 %v401, %v400
    %406 = vmatprep.subr.bf16.mxu0 0
    %407 = vmatpush1.bf16.msra.mxu0 %v402
    %408 = vmatprep.subr.bf16.mxu0 0
    %409 = vmatpush1.bf16.msra.mxu0 %v403
    %410 = vmatprep.subr.bf16.mxu0 0
    %411 = vmatpush1.bf16.msra.mxu0 0
    %412 = vmatprep.subr.bf16.mxu0 0
    %413 = vmatpush1.bf16.msra.mxu0 0
    %414 = vmatprep.subr.bf16.mxu0 0
    %415 = vmatpush1.bf16.msra.mxu0 0
    %416 = vmatprep.subr.bf16.mxu0 0
    %417 = vmatpush1.bf16.msra.mxu0 0
    %418 = vmatprep.subr.bf16.mxu0 0
    %419 = vmatpush1.bf16.msra.mxu0 0
    %420 = vmatprep.subr.bf16.mxu0 0
    %421 = vmatpush1.bf16.msra.mxu0 0
    %422 = vmatprep.subr.bf16.mxu0 0
    %423 = vmatpush1.bf16.msra.mxu0 0
    %424 = vmatprep.subr.bf16.mxu0 0
    %425 = vmatpush1.bf16.msra.mxu0 0
    %426 = vmatprep.subr.bf16.mxu0 0
    %427 = vmatpush1.bf16.msra.mxu0 0
    %428 = vmatprep.subr.bf16.mxu0 0
    %429 = vmatpush1.bf16.msra.mxu0 0
    %430 = vmatprep.subr.bf16.mxu0 0
    %431 = vmatpush1.bf16.msra.mxu0 0
    %432 = vmatprep.subr.bf16.mxu0 0
    %433 = vmatpush1.bf16.msra.mxu0 0
    %434 = vmatprep.subr.bf16.mxu0 0
    %435 = vmatpush1.bf16.msra.mxu0 0
    %436 = vmatprep.subr.bf16.mxu0 0
    %437 = vmatpush1.bf16.msra.mxu0 0
    %438 = vmatprep.mubr.bf16.mxu0 0
    %439 = vmatmul.mubr.bf16.gmra.mrb[0].mxu0 %v226
    %v440 = vpop.f32.mrb[0].mxu0
    %v441 = vadd.f32 0.0, %v440
    %v442 = vpop.f32.mrb[0].mxu0
    %v443 = vpop.f32.mrb[0].mxu0
    %v444 = vadd.f32 0.0, %v443
    %v445 = vpop.f32.mrb[0].mxu0
    %446 = vmatprep.mubr.bf16.mxu0 0
    %447 = vmatmul.mubr.bf16.gmra.mrb[0].mxu0 %v229
    %v448 = vpop.f32.mrb[0].mxu0
    %v449 = vadd.f32 0.0, %v448
    %v450 = vpop.f32.mrb[0].mxu0
    %v451 = vpop.f32.mrb[0].mxu0
    %v452 = vadd.f32 0.0, %v451
    %v453 = vpop.f32.mrb[0].mxu0
    %454 = vdwg.mxu0
    %vm455 = vcmp.eq.s32.totalorder %v110, 0
    %v456 = vsel %vm455, 1.0, -1.0
    %v457 = vmul.f32 %v321, %v456
    %v458 = vmul.f32 %v322, %v456
    %v459 = vmul.f32 %v323, %v456
    %v460 = vmul.f32 %v324, %v456
    %v461 = vsel %vm280, %v457, 0.0
    %462 = vadd.xlane.f32.xlu0 %v461
    %v463 = vpop.xlane.xlu0 %462
    %v464 = vsel %vm280, %v458, 0.0
    %465 = vadd.xlane.f32.xlu0 %v464
    %v466 = vpop.xlane.xlu0 %465
    %v467 = vsel %vm280, %v459, 0.0
    %468 = vadd.xlane.f32.xlu0 %v467
    %v469 = vpop.xlane.xlu0 %468
    %v470 = vsel %vm280, %v460, 0.0
    %471 = vadd.xlane.f32.xlu0 %v470
    %v472 = vpop.xlane.xlu0 %471
    %vm473 = vcmp.ge.f32.partialorder %v463, 0.0
    %vm474 = vcmp.ge.f32.partialorder %v466, 0.0
    %vm475 = vcmp.ge.f32.partialorder %v469, 0.0
    %vm476 = vcmp.ge.f32.partialorder %v472, 0.0
    %v477 = vsel %vm473, 0.25, -0.25
    %v478 = vsel %vm474, 0.25, -0.25
    %v479 = vsel %vm475, 0.25, -0.25
    %v480 = vsel %vm476, 0.25, -0.25
    %v481 = vld [vmem:[%s1] sm:$0xff]
    %v482 = vld [vmem:[%s1 + $0x8] sm:$0xff]
    %v483 = vld [vmem:[%s2] sm:$0xff]
    %v484 = vld [vmem:[%s2 + $0x8] sm:$0xff]
    %v485 = vld [vmem:[%s3] sm:$0xff]
    %v486 = vld [vmem:[%s3 + $0x8] sm:$0xff]
    %v487 = vmul.f32 %v115, %v477
    %v488 = vmul.f32 %v116, %v478
    %vm489 = vcmask 130048
    %v490 = vsel %vm489, %v487, 0.0
    %v491 = vsel %vm489, %v488, 0.0
    %v492 = vadd.f32 %v490, %v491
    %v493 = vrot.slane %v492, 4
    %v494 = vadd.f32 %v492, %v493
    %v495 = vrot.slane %v494, 2
    %v496 = vadd.f32 %v494, %v495
    %v497 = vrot.slane %v496, 1
    %v498 = vadd.f32 %v496, %v497
    %v499 = vmul.f32 %v477, %v498
    %v500 = vmul.f32 %v478, %v498
    %v501 = vmul.f32 %v477, %v477
    %v502 = vmul.f32 %v478, %v478
    %v503 = vmul.f32 %v498, %v498
    %v504 = vsub.f32 %v501, %v499
    %v505 = vsub.f32 %v502, %v500
    %v506 = vsub.f32 %v503, %v499
    %v507 = vsub.f32 %v503, %v500
    %v508 = vsel %vm489, %v481, 0.0
    %509 = vadd.xlane.f32.xlu0 %v508
    %v510 = vpop.xlane.xlu0 %509
    %v511 = vsel %vm489, %v482, 0.0
    %512 = vadd.xlane.f32.xlu0 %v511
    %v513 = vpop.xlane.xlu0 %512
    %v514 = vmul.f32 %v510, %v501
    %v515 = vmul.f32 %v513, %v502
    %vm516 = vcmask 7168
    %v517 = vsel %vm516, %v514, 0.0
    %v518 = vsel %vm516, %v515, 0.0
    %v519 = vadd.f32 %v517, %v518
    %520 = vadd.xlane.f32.xlu0 %v519
    %v521 = vpop.xlane.xlu0 %520
    %v522 = vrot.slane %v521, 4
    %v523 = vadd.f32 %v521, %v522
    %v524 = vrot.slane %v523, 2
    %v525 = vadd.f32 %v523, %v524
    %v526 = vrot.slane %v525, 1
    %v527 = vadd.f32 %v525, %v526
    %s528 = vtos %v527
    %v529 = vstv %s528
    %v530 = vmul.f32 %v481, %v499
    %v531 = vmul.f32 %v482, %v500
    %v532 = vsel %vm489, %v530, 0.0
    %v533 = vsel %vm489, %v531, 0.0
    %v534 = vadd.f32 %v532, %v533
    %535 = vadd.xlane.f32.xlu0 %v534
    %v536 = vpop.xlane.xlu0 %535
    %v537 = vrot.slane %v536, 4
    %v538 = vadd.f32 %v536, %v537
    %v539 = vrot.slane %v538, 2
    %v540 = vadd.f32 %v538, %v539
    %v541 = vrot.slane %v540, 1
    %v542 = vadd.f32 %v540, %v541
    %s543 = vtos %v542
    %v544 = vstv %s543
    %v545 = vsub.f32 %v529, %v544
    %v546 = vsel %vm516, %v477, 0.0
    %v547 = vsel %vm516, %v478, 0.0
    %v548 = vadd.f32 %v546, %v547
    %549 = vadd.xlane.f32.xlu0 %v548
    %v550 = vpop.xlane.xlu0 %549
    %v551 = vrot.slane %v550, 4
    %v552 = vadd.f32 %v550, %v551
    %v553 = vrot.slane %v552, 2
    %v554 = vadd.f32 %v552, %v553
    %v555 = vrot.slane %v554, 1
    %v556 = vadd.f32 %v554, %v555
    %s557 = vtos %v556
    %v558 = vstv %s557
    %v559 = vsel %vm516, %v501, 0.0
    %v560 = vsel %vm516, %v502, 0.0
    %v561 = vadd.f32 %v559, %v560
    %562 = vadd.xlane.f32.xlu0 %v561
    %v563 = vpop.xlane.xlu0 %562
    %v564 = vrot.slane %v563, 4
    %v565 = vadd.f32 %v563, %v564
    %v566 = vrot.slane %v565, 2
    %v567 = vadd.f32 %v565, %v566
    %v568 = vrot.slane %v567, 1
    %v569 = vadd.f32 %v567, %v568
    %s570 = vtos %v569
    %v571 = vstv %s570
    %v572 = vmul.f32 %v571, 16.0
    %v573 = vmul.f32 %v558, %v558
    %v574 = vsub.f32 %v572, %v573
    %v575 = vadd.f32 %v574, 1e-15
    %v576 = vrcp.pop %v575
    %v577 = vmul.f32 %v545, %v576
    %v578 = vand.u32 2147483647, %v577
    %v579 = vmul.f32 %v578, 16.0
    %v580 = vmul.f32 %v579, 4.0
    %v581 = vsub.f32 %v481, %v481
    %v582 = vsub.f32 %v482, %v482
    %v583 = vmul.f32 %v581, 2.0
    %v584 = vmul.f32 %v582, 2.0
    %v585 = vmul.f32 %v580, %v504
    %v586 = vmul.f32 %v580, %v505
    %v587 = vadd.f32 %v583, %v585
    %v588 = vadd.f32 %v584, %v586
    %v589 = vsub.f32 %v483, %v483
    %v590 = vsub.f32 %v484, %v484
    %v591 = vmul.f32 %v589, 2.0
    %v592 = vmul.f32 %v590, 2.0
    %v593 = vmul.f32 %v580, %v506
    %v594 = vmul.f32 %v580, %v507
    %v595 = vadd.f32 %v591, %v593
    %v596 = vadd.f32 %v592, %v594
    %v597 = vadd.f32 %v587, %v595
    %v598 = vadd.f32 %v588, %v596
    %v599 = vmul.f32 %v587, %v115
    %v600 = vmul.f32 %v588, %v116
    %v601 = vsub.f32 %v597, %v599
    %v602 = vsub.f32 %v598, %v600
    %v603 = vmul.f32 %v601, 0.01
    %v604 = vmul.f32 %v602, 0.01
    %v605 = vsub.f32 %v481, %v603
    %v606 = vsub.f32 %v482, %v604
    %v607 = vsel %vm489, %v605, -inf
    %608 = vmax.xlane.f32.xlu0 %v607
    %v609 = vpop.xlane.xlu0 %608
    %v610 = vsel %vm489, %v606, -inf
    %611 = vmax.xlane.f32.xlu0 %v610
    %v612 = vpop.xlane.xlu0 %611
    %v613 = vsub.f32 %v605, %v609
    %v614 = vsub.f32 %v606, %v612
    %v615 = vmul.f32 %v613, 1.442695
    %v616 = vpow.pop %v615
    %v617 = vmul.f32 %v614, 1.442695
    %v618 = vpow.pop %v617
    %v619 = vsel %vm489, %v616, 0.0
    %620 = vadd.xlane.f32.xlu0 %v619
    %v621 = vpop.xlane.xlu0 %620
    %v622 = vsel %vm489, %v618, 0.0
    %623 = vadd.xlane.f32.xlu0 %v622
    %v624 = vpop.xlane.xlu0 %623
    %v625 = vrcp.pop %v621
    %v626 = vrcp.pop %v624
    %v627 = vmul.f32 %v616, %v625
    %v628 = vmul.f32 %v618, %v626
    %v629 = vmul.f32 %v627, %v481
    %v630 = vmul.f32 %v628, %v482
    %v631 = vsub.f32 %v483, %v603
    %v632 = vsub.f32 %v484, %v604
    %v633 = vsel %vm489, %v631, -inf
    %v634 = vsel %vm489, %v632, -inf
    %v635 = vmax.f32 %v633, %v634
    %v636 = vrot.slane %v635, 4
    %v637 = vmax.f32 %v635, %v636
    %v638 = vrot.slane %v637, 2
    %v639 = vmax.f32 %v637, %v638
    %v640 = vrot.slane %v639, 1
    %v641 = vmax.f32 %v639, %v640
    %v642 = vsub.f32 %v631, %v641
    %v643 = vsub.f32 %v632, %v641
    %v644 = vmul.f32 %v642, 1.442695
    %v645 = vpow.pop %v644
    %v646 = vmul.f32 %v643, 1.442695
    %v647 = vpow.pop %v646
    %v648 = vsel %vm489, %v645, 0.0
    %v649 = vsel %vm489, %v647, 0.0
    %v650 = vadd.f32 %v648, %v649
    %v651 = vrot.slane %v650, 4
    %v652 = vadd.f32 %v650, %v651
    %v653 = vrot.slane %v652, 2
    %v654 = vadd.f32 %v652, %v653
    %v655 = vrot.slane %v654, 1
    %v656 = vadd.f32 %v654, %v655
    %v657 = vrcp.pop %v656
    %v658 = vmul.f32 %v645, %v657
    %v659 = vmul.f32 %v647, %v657
    %v660 = vmul.f32 %v658, %v483
    %v661 = vmul.f32 %v659, %v484
    %v662 = vsub.f32 %v629, %v481
    %v663 = vsub.f32 %v630, %v482
    %v664 = vmul.f32 %v662, 2.0
    %v665 = vmul.f32 %v663, 2.0
    %v666 = vadd.f32 %v664, %v585
    %v667 = vadd.f32 %v665, %v586
    %v668 = vsub.f32 %v660, %v483
    %v669 = vsub.f32 %v661, %v484
    %v670 = vmul.f32 %v668, 2.0
    %v671 = vmul.f32 %v669, 2.0
    %v672 = vadd.f32 %v670, %v593
    %v673 = vadd.f32 %v671, %v594
    %v674 = vadd.f32 %v666, %v672
    %v675 = vadd.f32 %v667, %v673
    %v676 = vmul.f32 %v666, %v115
    %v677 = vmul.f32 %v667, %v116
    %v678 = vsub.f32 %v674, %v676
    %v679 = vsub.f32 %v675, %v677
    %v680 = vmul.f32 %v678, 0.01
    %v681 = vmul.f32 %v679, 0.01
    %v682 = vsub.f32 %v629, %v680
    %v683 = vsub.f32 %v630, %v681
    %v684 = vsel %vm489, %v682, -inf
    %685 = vmax.xlane.f32.xlu0 %v684
    %v686 = vpop.xlane.xlu0 %685
    %v687 = vsel %vm489, %v683, -inf
    %688 = vmax.xlane.f32.xlu0 %v687
    %v689 = vpop.xlane.xlu0 %688
    %v690 = vsub.f32 %v682, %v686
    %v691 = vsub.f32 %v683, %v689
    %v692 = vmul.f32 %v690, 1.442695
    %v693 = vpow.pop %v692
    %v694 = vmul.f32 %v691, 1.442695
    %v695 = vpow.pop %v694
    %v696 = vsel %vm489, %v693, 0.0
    %697 = vadd.xlane.f32.xlu0 %v696
    %v698 = vpop.xlane.xlu0 %697
    %v699 = vsel %vm489, %v695, 0.0
    %700 = vadd.xlane.f32.xlu0 %v699
    %v701 = vpop.xlane.xlu0 %700
    %v702 = vrcp.pop %v698
    %v703 = vrcp.pop %v701
    %v704 = vmul.f32 %v693, %v702
    %v705 = vmul.f32 %v695, %v703
    %v706 = vmul.f32 %v704, %v481
    %v707 = vmul.f32 %v705, %v482
    %v708 = vsub.f32 %v660, %v680
    %v709 = vsub.f32 %v661, %v681
    %v710 = vsel %vm489, %v708, -inf
    %v711 = vsel %vm489, %v709, -inf
    %v712 = vmax.f32 %v710, %v711
    %v713 = vrot.slane %v712, 4
    %v714 = vmax.f32 %v712, %v713
    %v715 = vrot.slane %v714, 2
    %v716 = vmax.f32 %v714, %v715
    %v717 = vrot.slane %v716, 1
    %v718 = vmax.f32 %v716, %v717
    %v719 = vsub.f32 %v708, %v718
    %v720 = vsub.f32 %v709, %v718
    %v721 = vmul.f32 %v719, 1.442695
    %v722 = vpow.pop %v721
    %v723 = vmul.f32 %v720, 1.442695
    %v724 = vpow.pop %v723
    %v725 = vsel %vm489, %v722, 0.0
    %v726 = vsel %vm489, %v724, 0.0
    %v727 = vadd.f32 %v725, %v726
    %v728 = vrot.slane %v727, 4
    %v729 = vadd.f32 %v727, %v728
    %v730 = vrot.slane %v729, 2
    %v731 = vadd.f32 %v729, %v730
    %v732 = vrot.slane %v731, 1
    %v733 = vadd.f32 %v731, %v732
    %v734 = vrcp.pop %v733
    %v735 = vmul.f32 %v722, %v734
    %v736 = vmul.f32 %v724, %v734
    %v737 = vmul.f32 %v735, %v483
    %v738 = vmul.f32 %v736, %v484
    %v739 = vsub.f32 %v706, %v481
    %v740 = vsub.f32 %v707, %v482
    %v741 = vmul.f32 %v739, 2.0
    %v742 = vmul.f32 %v740, 2.0
    %v743 = vadd.f32 %v741, %v585
    %v744 = vadd.f32 %v742, %v586
    %v745 = vsub.f32 %v737, %v483
    %v746 = vsub.f32 %v738, %v484
    %v747 = vmul.f32 %v745, 2.0
    %v748 = vmul.f32 %v746, 2.0
    %v749 = vadd.f32 %v747, %v593
    %v750 = vadd.f32 %v748, %v594
    %v751 = vadd.f32 %v743, %v749
    %v752 = vadd.f32 %v744, %v750
    %v753 = vmul.f32 %v743, %v115
    %v754 = vmul.f32 %v744, %v116
    %v755 = vsub.f32 %v751, %v753
    %v756 = vsub.f32 %v752, %v754
    %v757 = vmul.f32 %v755, 0.01
    %v758 = vmul.f32 %v756, 0.01
    %v759 = vsub.f32 %v706, %v757
    %v760 = vsub.f32 %v707, %v758
    %v761 = vsel %vm489, %v759, -inf
    %762 = vmax.xlane.f32.xlu0 %v761
    %v763 = vpop.xlane.xlu0 %762
    %v764 = vsel %vm489, %v760, -inf
    %765 = vmax.xlane.f32.xlu0 %v764
    %v766 = vpop.xlane.xlu0 %765
    %v767 = vsub.f32 %v759, %v763
    %v768 = vsub.f32 %v760, %v766
    %v769 = vmul.f32 %v767, 1.442695
    %v770 = vpow.pop %v769
    %v771 = vmul.f32 %v768, 1.442695
    %v772 = vpow.pop %v771
    %v773 = vsel %vm489, %v770, 0.0
    %774 = vadd.xlane.f32.xlu0 %v773
    %v775 = vpop.xlane.xlu0 %774
    %v776 = vsel %vm489, %v772, 0.0
    %777 = vadd.xlane.f32.xlu0 %v776
    %v778 = vpop.xlane.xlu0 %777
    %v779 = vrcp.pop %v775
    %v780 = vrcp.pop %v778
    %v781 = vmul.f32 %v770, %v779
    %v782 = vmul.f32 %v772, %v780
    %v783 = vmul.f32 %v781, %v481
    %v784 = vmul.f32 %v782, %v482
    %v785 = vsub.f32 %v737, %v757
    %v786 = vsub.f32 %v738, %v758
    %v787 = vsel %vm489, %v785, -inf
    %v788 = vsel %vm489, %v786, -inf
    %v789 = vmax.f32 %v787, %v788
    %v790 = vrot.slane %v789, 4
    %v791 = vmax.f32 %v789, %v790
    %v792 = vrot.slane %v791, 2
    %v793 = vmax.f32 %v791, %v792
    %v794 = vrot.slane %v793, 1
    %v795 = vmax.f32 %v793, %v794
    %v796 = vsub.f32 %v785, %v795
    %v797 = vsub.f32 %v786, %v795
    %v798 = vmul.f32 %v796, 1.442695
    %v799 = vpow.pop %v798
    %v800 = vmul.f32 %v797, 1.442695
    %v801 = vpow.pop %v800
    %v802 = vsel %vm489, %v799, 0.0
    %v803 = vsel %vm489, %v801, 0.0
    %v804 = vadd.f32 %v802, %v803
    %v805 = vrot.slane %v804, 4
    %v806 = vadd.f32 %v804, %v805
    %v807 = vrot.slane %v806, 2
    %v808 = vadd.f32 %v806, %v807
    %v809 = vrot.slane %v808, 1
    %v810 = vadd.f32 %v808, %v809
    %v811 = vrcp.pop %v810
    %v812 = vmul.f32 %v799, %v811
    %v813 = vmul.f32 %v801, %v811
    %v814 = vmul.f32 %v812, %v483
    %v815 = vmul.f32 %v813, %v484
    %v816 = vsub.f32 %v783, %v481
    %v817 = vsub.f32 %v784, %v482
    %v818 = vmul.f32 %v816, 2.0
    %v819 = vmul.f32 %v817, 2.0
    %v820 = vadd.f32 %v818, %v585
    %v821 = vadd.f32 %v819, %v586
    %v822 = vsub.f32 %v814, %v483
    %v823 = vsub.f32 %v815, %v484
    %v824 = vmul.f32 %v822, 2.0
    %v825 = vmul.f32 %v823, 2.0
    %v826 = vadd.f32 %v824, %v593
    %v827 = vadd.f32 %v825, %v594
    %v828 = vadd.f32 %v820, %v826
    %v829 = vadd.f32 %v821, %v827
    %v830 = vmul.f32 %v820, %v115
    %v831 = vmul.f32 %v821, %v116
    %v832 = vsub.f32 %v828, %v830
    %v833 = vsub.f32 %v829, %v831
    %v834 = vmul.f32 %v832, 0.01
    %v835 = vmul.f32 %v833, 0.01
    %v836 = vsub.f32 %v783, %v834
    %v837 = vsub.f32 %v784, %v835
    %v838 = vsel %vm489, %v836, -inf
    %839 = vmax.xlane.f32.xlu0 %v838
    %v840 = vpop.xlane.xlu0 %839
    %v841 = vsel %vm489, %v837, -inf
    %842 = vmax.xlane.f32.xlu0 %v841
    %v843 = vpop.xlane.xlu0 %842
    %v844 = vsub.f32 %v836, %v840
    %v845 = vsub.f32 %v837, %v843
    %v846 = vmul.f32 %v844, 1.442695
    %v847 = vpow.pop %v846
    %v848 = vmul.f32 %v845, 1.442695
    %v849 = vpow.pop %v848
    %v850 = vsel %vm489, %v847, 0.0
    %851 = vadd.xlane.f32.xlu0 %v850
    %v852 = vpop.xlane.xlu0 %851
    %v853 = vsel %vm489, %v849, 0.0
    %854 = vadd.xlane.f32.xlu0 %v853
    %v855 = vpop.xlane.xlu0 %854
    %v856 = vrcp.pop %v852
    %v857 = vrcp.pop %v855
    %v858 = vmul.f32 %v847, %v856
    %v859 = vmul.f32 %v849, %v857
    %v860 = vmul.f32 %v858, %v481
    %v861 = vmul.f32 %v859, %v482
    %v862 = vsub.f32 %v814, %v834
    %v863 = vsub.f32 %v815, %v835
    %v864 = vsel %vm489, %v862, -inf
    %v865 = vsel %vm489, %v863, -inf
    %v866 = vmax.f32 %v864, %v865
    %v867 = vrot.slane %v866, 4
    %v868 = vmax.f32 %v866, %v867
    %v869 = vrot.slane %v868, 2
    %v870 = vmax.f32 %v868, %v869
    %v871 = vrot.slane %v870, 1
    %v872 = vmax.f32 %v870, %v871
    %v873 = vsub.f32 %v862, %v872
    %v874 = vsub.f32 %v863, %v872
    %v875 = vmul.f32 %v873, 1.442695
    %v876 = vpow.pop %v875
    %v877 = vmul.f32 %v874, 1.442695
    %v878 = vpow.pop %v877
    %v879 = vsel %vm489, %v876, 0.0
    %v880 = vsel %vm489, %v878, 0.0
    %v881 = vadd.f32 %v879, %v880
    %v882 = vrot.slane %v881, 4
    %v883 = vadd.f32 %v881, %v882
    %v884 = vrot.slane %v883, 2
    %v885 = vadd.f32 %v883, %v884
    %v886 = vrot.slane %v885, 1
    %v887 = vadd.f32 %v885, %v886
    %v888 = vrcp.pop %v887
    %v889 = vmul.f32 %v876, %v888
    %v890 = vmul.f32 %v878, %v888
    %v891 = vmul.f32 %v889, %v483
    %v892 = vmul.f32 %v890, %v484
    %v893 = vsub.f32 %v860, %v481
    %v894 = vsub.f32 %v861, %v482
    %v895 = vmul.f32 %v893, 2.0
    %v896 = vmul.f32 %v894, 2.0
    %v897 = vadd.f32 %v895, %v585
    %v898 = vadd.f32 %v896, %v586
    %v899 = vsub.f32 %v891, %v483
    %v900 = vsub.f32 %v892, %v484
    %v901 = vmul.f32 %v899, 2.0
    %v902 = vmul.f32 %v900, 2.0
    %v903 = vadd.f32 %v901, %v593
    %v904 = vadd.f32 %v902, %v594
    %v905 = vadd.f32 %v897, %v903
    %v906 = vadd.f32 %v898, %v904
    %v907 = vmul.f32 %v897, %v115
    %v908 = vmul.f32 %v898, %v116
    %v909 = vsub.f32 %v905, %v907
    %v910 = vsub.f32 %v906, %v908
    %v911 = vmul.f32 %v909, 0.01
    %v912 = vmul.f32 %v910, 0.01
    %v913 = vsub.f32 %v860, %v911
    %v914 = vsub.f32 %v861, %v912
    %v915 = vsel %vm489, %v913, -inf
    %916 = vmax.xlane.f32.xlu0 %v915
    %v917 = vpop.xlane.xlu0 %916
    %v918 = vsel %vm489, %v914, -inf
    %919 = vmax.xlane.f32.xlu0 %v918
    %v920 = vpop.xlane.xlu0 %919
    %v921 = vsub.f32 %v913, %v917
    %v922 = vsub.f32 %v914, %v920
    %v923 = vmul.f32 %v921, 1.442695
    %v924 = vpow.pop %v923
    %v925 = vmul.f32 %v922, 1.442695
    %v926 = vpow.pop %v925
    %v927 = vsel %vm489, %v924, 0.0
    %928 = vadd.xlane.f32.xlu0 %v927
    %v929 = vpop.xlane.xlu0 %928
    %v930 = vsel %vm489, %v926, 0.0
    %931 = vadd.xlane.f32.xlu0 %v930
    %v932 = vpop.xlane.xlu0 %931
    %v933 = vrcp.pop %v929
    %v934 = vrcp.pop %v932
    %v935 = vmul.f32 %v924, %v933
    %v936 = vmul.f32 %v926, %v934
    %v937 = vmul.f32 %v935, %v481
    %v938 = vmul.f32 %v936, %v482
    %v939 = vpack.c.bf16 %v482, %v481
    %v940 = vpack.c.bf16 %v322, %v321
    %v942 = vsel %vm489, %v939, 0
    %944 = vmatprep.subr.bf16.mxu0 0
    %945 = vmatpush1.bf16.msra.mxu0 %v940
    %946 = vmatprep.subr.bf16.mxu0 0
    %947 = vmatpush1.bf16.msra.mxu0 0
    %948 = vmatprep.subr.bf16.mxu0 0
    %949 = vmatpush1.bf16.msra.mxu0 0
    %950 = vmatprep.subr.bf16.mxu0 0
    %951 = vmatpush1.bf16.msra.mxu0 0
    %952 = vmatprep.subr.bf16.mxu0 0
    %953 = vmatpush1.bf16.msra.mxu0 0
    %954 = vmatprep.subr.bf16.mxu0 0
    %955 = vmatpush1.bf16.msra.mxu0 0
    %956 = vmatprep.subr.bf16.mxu0 0
    %957 = vmatpush1.bf16.msra.mxu0 0
    %958 = vmatprep.subr.bf16.mxu0 0
    %959 = vmatpush1.bf16.msra.mxu0 0
    %960 = vmatprep.subr.bf16.mxu0 0
    %961 = vmatpush1.bf16.msra.mxu0 0
    %962 = vmatprep.subr.bf16.mxu0 0
    %963 = vmatpush1.bf16.msra.mxu0 0
    %964 = vmatprep.subr.bf16.mxu0 0
    %965 = vmatpush1.bf16.msra.mxu0 0
    %966 = vmatprep.subr.bf16.mxu0 0
    %967 = vmatpush1.bf16.msra.mxu0 0
    %968 = vmatprep.subr.bf16.mxu0 0
    %969 = vmatpush1.bf16.msra.mxu0 0
    %970 = vmatprep.subr.bf16.mxu0 0
    %971 = vmatpush1.bf16.msra.mxu0 0
    %972 = vmatprep.subr.bf16.mxu0 0
    %973 = vmatpush1.bf16.msra.mxu0 0
    %974 = vmatprep.subr.bf16.mxu0 0
    %975 = vmatpush1.bf16.msra.mxu0 0
    %976 = vmatprep.mubr.bf16.mxu0 0
    %977 = vmatmul.mubr.bf16.gmra.mrb[0].mxu0 %v942
    %v978 = vpop.f32.mrb[0].mxu0
    %v979 = vadd.f32 0.0, %v978
    %v980 = vpop.f32.mrb[0].mxu0
    %v981 = vpop.f32.mrb[0].mxu0
    %v982 = vadd.f32 0.0, %v981
    %v983 = vpop.f32.mrb[0].mxu0
    %984 = vdwg.mxu0
    %v985 = vmul.f32 %v979, %v321
    %v986 = vmul.f32 %v982, %v322
    %v987 = vsel %vm280, %v985, 0.0
    %v988 = vsel %vm280, %v986, 0.0
    %v989 = vadd.f32 %v987, %v988
    %990 = vadd.xlane.f32.xlu0 %v989
    %v991 = vpop.xlane.xlu0 %990
    %v992 = vrot.slane %v991, 4
    %v993 = vadd.f32 %v991, %v992
    %v994 = vrot.slane %v993, 2
    %v995 = vadd.f32 %v993, %v994
    %v996 = vrot.slane %v995, 1
    %v997 = vadd.f32 %v995, %v996
    %s998 = vtos %v997
    %v999 = vstv %s998
    %v1000 = vmul.f32 %v321, %v321
    %v1001 = vmul.f32 %v322, %v322
    %v1002 = vsel %vm280, %v1000, 0.0
    %1003 = vadd.xlane.f32.xlu0 %v1002
    %v1004 = vpop.xlane.xlu0 %1003
    %v1005 = vsel %vm280, %v1001, 0.0
    %1006 = vadd.xlane.f32.xlu0 %v1005
    %v1007 = vpop.xlane.xlu0 %1006
    %v1008 = vmul.f32 %v510, %v1004
    %v1009 = vmul.f32 %v513, %v1007
    %v1010 = vsel %vm516, %v1008, 0.0
    %v1011 = vsel %vm516, %v1009, 0.0
    %v1012 = vadd.f32 %v1010, %v1011
    %1013 = vadd.xlane.f32.xlu0 %v1012
    %v1014 = vpop.xlane.xlu0 %1013
    %v1015 = vrot.slane %v1014, 4
    %v1016 = vadd.f32 %v1014, %v1015
    %v1017 = vrot.slane %v1016, 2
    %v1018 = vadd.f32 %v1016, %v1017
    %v1019 = vrot.slane %v1018, 1
    %v1020 = vadd.f32 %v1018, %v1019
    %s1021 = vtos %v1020
    %v1022 = vstv %s1021
    %v1023 = vrcp.pop %v1022
    %v1024 = vmul.f32 %v999, %v1023
    %v1025 = vsub.f32 0.0, %v1024
    %1026 = vxpose.xlu0.c.b16.start [1/8] %v940, 128
    %1027 = vxpose.xlu0.c.b16.cont [2/8] 0, 128
    %1028 = vxpose.xlu0.c.b16.cont [3/8] 0, 128
    %1029 = vxpose.xlu0.c.b16.cont [4/8] 0, 128
    %1030 = vxpose.xlu0.c.b16.cont [5/8] 0, 128
    %1031 = vxpose.xlu0.c.b16.cont [6/8] 0, 128
    %1032 = vxpose.xlu0.c.b16.cont [7/8] 0, 128
    %1033 = vxpose.xlu0.c.b16.end [8/8] 0, 128
    %v1034 = vpop.trf.xlu0
    %v1035 = vpop.trf.xlu0
    %v1036 = vpop.trf.xlu0
    %v1037 = vpop.trf.xlu0
    %v1038 = vpop.trf.xlu0
    %v1039 = vpop.trf.xlu0
    %v1040 = vpop.trf.xlu0
    %v1041 = vpop.trf.xlu0
    %v1043 = vsel %vm489, %v1034, 0
    %1045 = vmatprep.subr.bf16.mxu0 0
    %1046 = vmatpush1.bf16.msra.mxu0 %v940
    %1047 = vmatprep.subr.bf16.mxu0 0
    %1048 = vmatpush1.bf16.msra.mxu0 0
    %1049 = vmatprep.subr.bf16.mxu0 0
    %1050 = vmatpush1.bf16.msra.mxu0 0
    %1051 = vmatprep.subr.bf16.mxu0 0
    %1052 = vmatpush1.bf16.msra.mxu0 0
    %1053 = vmatprep.subr.bf16.mxu0 0
    %1054 = vmatpush1.bf16.msra.mxu0 0
    %1055 = vmatprep.subr.bf16.mxu0 0
    %1056 = vmatpush1.bf16.msra.mxu0 0
    %1057 = vmatprep.subr.bf16.mxu0 0
    %1058 = vmatpush1.bf16.msra.mxu0 0
    %1059 = vmatprep.subr.bf16.mxu0 0
    %1060 = vmatpush1.bf16.msra.mxu0 0
    %1061 = vmatprep.subr.bf16.mxu0 0
    %1062 = vmatpush1.bf16.msra.mxu0 0
    %1063 = vmatprep.subr.bf16.mxu0 0
    %1064 = vmatpush1.bf16.msra.mxu0 0
    %1065 = vmatprep.subr.bf16.mxu0 0
    %1066 = vmatpush1.bf16.msra.mxu0 0
    %1067 = vmatprep.subr.bf16.mxu0 0
    %1068 = vmatpush1.bf16.msra.mxu0 0
    %1069 = vmatprep.subr.bf16.mxu0 0
    %1070 = vmatpush1.bf16.msra.mxu0 0
    %1071 = vmatprep.subr.bf16.mxu0 0
    %1072 = vmatpush1.bf16.msra.mxu0 0
    %1073 = vmatprep.subr.bf16.mxu0 0
    %1074 = vmatpush1.bf16.msra.mxu0 0
    %1075 = vmatprep.subr.bf16.mxu0 0
    %1076 = vmatpush1.bf16.msra.mxu0 0
    %1077 = vmatprep.mubr.bf16.mxu0 0
    %1078 = vmatmul.mubr.bf16.gmra.mrb[0].mxu0 %v1043
    %v1079 = vpop.f32.mrb[0].mxu0
    %v1080 = vadd.f32 0.0, %v1079
    %v1081 = vpop.f32.mrb[0].mxu0
    %v1082 = vpop.f32.mrb[0].mxu0
    %v1083 = vpop.f32.mrb[0].mxu0
    %1084 = vdwg.mxu0
    %v1085 = vadd.f32 %v1002, %v1005
    %1086 = vadd.xlane.f32.xlu0 %v1085
    %v1087 = vpop.xlane.xlu0 %1086
    %v1088 = vrot.slane %v1087, 4
    %v1089 = vadd.f32 %v1087, %v1088
    %v1090 = vrot.slane %v1089, 2
    %v1091 = vadd.f32 %v1089, %v1090
    %v1092 = vrot.slane %v1091, 1
    %v1093 = vadd.f32 %v1091, %v1092
    %s1094 = vtos %v1093
    %v1095 = vstv %s1094
    %v1096 = vmul.f32 %v1095, 1.4142135
    %v1097 = vmul.f32 %v1080, %v1080
    %vm1098 = vcmask 9216
    %v1099 = vsel %vm1098, %v1097, 0.0
    %1100 = vadd.xlane.f32.xlu0 %v1099
    %v1101 = vpop.xlane.xlu0 %1100
    %v1102 = vrot.slane %v1101, 4
    %v1103 = vadd.f32 %v1101, %v1102
    %v1104 = vrot.slane %v1103, 2
    %v1105 = vadd.f32 %v1103, %v1104
    %v1106 = vrot.slane %v1105, 1
    %v1107 = vadd.f32 %v1105, %v1106
    %s1108 = vtos %v1107
    %v1109 = vstv %s1108
    %v1110 = vrsqrt.pop %v1109
    %v1111 = vmul.f32 %v1096, %v1110
    %v1112 = vsub.f32 2.0, %v1111
    %v1113 = vmax.f32 %v1112, 0.0
    %v1114 = vrsqrt.pop %v1113
    %v1115 = vmul.f32 %v1113, %v1114
    %vm1116 = vcmp.eq.f32.partialorder %v1113, inf
    %v1117 = vsel %vm1116, %v1113, %v1115
    %vm1118 = vcmp.eq.f32.partialorder %v1113, 0.0
    %v1119 = vand.u32 %v1113, 2147483648
    %v1120 = vsel %vm1118, %v1119, %v1117
    %v1121 = vadd.f32 %v1120, 0.0
    %v1122 = vpack.c.bf16 %v938, %v937
    %v1123 = vpack.c.bf16 %v379, %v376
    %v1125 = vsel %vm489, %v1122, 0
    %1127 = vmatprep.subr.bf16.mxu0 0
    %1128 = vmatpush1.bf16.msra.mxu0 %v1123
    %1129 = vmatprep.subr.bf16.mxu0 0
    %1130 = vmatpush1.bf16.msra.mxu0 0
    %1131 = vmatprep.subr.bf16.mxu0 0
    %1132 = vmatpush1.bf16.msra.mxu0 0
    %1133 = vmatprep.subr.bf16.mxu0 0
    %1134 = vmatpush1.bf16.msra.mxu0 0
    %1135 = vmatprep.subr.bf16.mxu0 0
    %1136 = vmatpush1.bf16.msra.mxu0 0
    %1137 = vmatprep.subr.bf16.mxu0 0
    %1138 = vmatpush1.bf16.msra.mxu0 0
    %1139 = vmatprep.subr.bf16.mxu0 0
    %1140 = vmatpush1.bf16.msra.mxu0 0
    %1141 = vmatprep.subr.bf16.mxu0 0
    %1142 = vmatpush1.bf16.msra.mxu0 0
    %1143 = vmatprep.subr.bf16.mxu0 0
    %1144 = vmatpush1.bf16.msra.mxu0 0
    %1145 = vmatprep.subr.bf16.mxu0 0
    %1146 = vmatpush1.bf16.msra.mxu0 0
    %1147 = vmatprep.subr.bf16.mxu0 0
    %1148 = vmatpush1.bf16.msra.mxu0 0
    %1149 = vmatprep.subr.bf16.mxu0 0
    %1150 = vmatpush1.bf16.msra.mxu0 0
    %1151 = vmatprep.subr.bf16.mxu0 0
    %1152 = vmatpush1.bf16.msra.mxu0 0
    %1153 = vmatprep.subr.bf16.mxu0 0
    %1154 = vmatpush1.bf16.msra.mxu0 0
    %1155 = vmatprep.subr.bf16.mxu0 0
    %1156 = vmatpush1.bf16.msra.mxu0 0
    %1157 = vmatprep.subr.bf16.mxu0 0
    %1158 = vmatpush1.bf16.msra.mxu0 0
    %1159 = vmatprep.mubr.bf16.mxu0 0
    %1160 = vmatmul.mubr.bf16.gmra.mrb[0].mxu0 %v1125
    %v1161 = vpop.f32.mrb[0].mxu0
    %v1162 = vadd.f32 %v441, %v1161
    %v1163 = vpop.f32.mrb[0].mxu0
    %v1164 = vpop.f32.mrb[0].mxu0
    %v1165 = vadd.f32 %v444, %v1164
    %v1166 = vpop.f32.mrb[0].mxu0
    %1167 = vdwg.mxu0
    %v1168 = vld [vmem:[#allocation5] sm:$0x1]
    %v1170 = vlaneseq
    %v1171 = vshrl.u32 %v1170, 7
    %v1172 = vsub.s32 0, %v1171
    %v1173 = vrot.slane %v1168, %v1172
    %v1175 = vadd.f32 %v1162, %v1173
    %v1176 = vadd.f32 %v1165, %v1173
    %v1177 = vld [vmem:[%s11] sm:$0xf]
    %v1178 = vld [vmem:[%s11 + $0x4] sm:$0xf]
    %v1179 = vld [vmem:[%s11 + $0x8] sm:$0xf]
    %v1180 = vld [vmem:[%s11 + $0xc] sm:$0xf]
    %v1181 = vpack.c.bf16 %v1176, %v1175
    %v1182 = vld [vmem:[#allocation7] sm:$0x1]
    %v1184 = vlaneseq
    %v1185 = vshrl.u32 %v1184, 7
    %v1186 = vsub.s32 0, %v1185
    %v1187 = vrot.slane %v1182, %v1186
    %v1193 = vunpack.c.l.b16 %v1177
    %v1194 = vunpack.c.l.b16 %v1178
    %v1195 = vunpack.c.l.b16 %v1179
    %v1196 = vunpack.c.l.b16 %v1180
    %v1197 = vpack.c.b16 %v1194, %v1193
    %v1198 = vpack.c.b16 %v1196, %v1195
    %v1202 = vsel %vm224, %v1181, 0
    %1204 = vmatprep.subr.bf16.mxu0 0
    %1205 = vmatpush1.bf16.msra.mxu0 %v1197
    %1206 = vmatprep.subr.bf16.mxu0 0
    %1207 = vmatpush1.bf16.msra.mxu0 %v1198
    %1208 = vmatprep.subr.bf16.mxu0 0
    %1209 = vmatpush1.bf16.msra.mxu0 0
    %1210 = vmatprep.subr.bf16.mxu0 0
    %1211 = vmatpush1.bf16.msra.mxu0 0
    %1212 = vmatprep.subr.bf16.mxu0 0
    %1213 = vmatpush1.bf16.msra.mxu0 0
    %1214 = vmatprep.subr.bf16.mxu0 0
    %1215 = vmatpush1.bf16.msra.mxu0 0
    %1216 = vmatprep.subr.bf16.mxu0 0
    %1217 = vmatpush1.bf16.msra.mxu0 0
    %1218 = vmatprep.subr.bf16.mxu0 0
    %1219 = vmatpush1.bf16.msra.mxu0 0
    %1220 = vmatprep.subr.bf16.mxu0 0
    %1221 = vmatpush1.bf16.msra.mxu0 0
    %1222 = vmatprep.subr.bf16.mxu0 0
    %1223 = vmatpush1.bf16.msra.mxu0 0
    %1224 = vmatprep.subr.bf16.mxu0 0
    %1225 = vmatpush1.bf16.msra.mxu0 0
    %1226 = vmatprep.subr.bf16.mxu0 0
    %1227 = vmatpush1.bf16.msra.mxu0 0
    %1228 = vmatprep.subr.bf16.mxu0 0
    %1229 = vmatpush1.bf16.msra.mxu0 0
    %1230 = vmatprep.subr.bf16.mxu0 0
    %1231 = vmatpush1.bf16.msra.mxu0 0
    %1232 = vmatprep.subr.bf16.mxu0 0
    %1233 = vmatpush1.bf16.msra.mxu0 0
    %1234 = vmatprep.subr.bf16.mxu0 0
    %1235 = vmatpush1.bf16.msra.mxu0 0
    %1236 = vmatprep.mubr.bf16.mxu0 0
    %1237 = vmatmul.mubr.bf16.gmra.mrb[0].mxu0 %v1202
    %v1238 = vpop.f32.mrb[0].mxu0
    %v1239 = vadd.f32 %v1187, %v1238
    %v1240 = vpop.f32.mrb[0].mxu0
    %v1241 = vpop.f32.mrb[0].mxu0
    %v1242 = vadd.f32 %v1187, %v1241
    %v1243 = vpop.f32.mrb[0].mxu0
    %1244 = vdwg.mxu0
    %v1245 = vsel %vm489, %v1239, -inf
    %1246 = vmax.xlane.f32.xlu0 %v1245
    %v1247 = vpop.xlane.xlu0 %1246
    %v1248 = vsel %vm489, %v1242, -inf
    %1249 = vmax.xlane.f32.xlu0 %v1248
    %v1250 = vpop.xlane.xlu0 %1249
    %v1251 = vsub.f32 %v1239, %v1247
    %v1252 = vsub.f32 %v1242, %v1250
    %v1253 = vmul.f32 %v1251, 1.442695
    %v1254 = vpow.pop %v1253
    %v1255 = vmul.f32 %v1252, 1.442695
    %v1256 = vpow.pop %v1255
    %v1257 = vsel %vm489, %v1254, 0.0
    %1258 = vadd.xlane.f32.xlu0 %v1257
    %v1259 = vpop.xlane.xlu0 %1258
    %v1260 = vsel %vm489, %v1256, 0.0
    %1261 = vadd.xlane.f32.xlu0 %v1260
    %v1262 = vpop.xlane.xlu0 %1261
    %v1263 = vrcp.pop %v1259
    %v1264 = vrcp.pop %v1262
    %v1265 = vmul.f32 %v1254, %v1263
    %v1266 = vmul.f32 %v1256, %v1264
    %1268 = vset.pattern.permute.xlu0 0
    %1269 = vperm.xlu0 %1268, %v485
    %v1270 = vpop.permute.xlu0 %1269
    %1273 = vset.pattern.permute.xlu0 0
    %1274 = vperm.xlu0 %1273, %v486
    %v1275 = vpop.permute.xlu0 %1274
    %v1277 = vmul.f32 %v1175, %v1270
    %v1278 = vmul.f32 %v1176, %v1275
    %v1279 = vmul.f32 %v1265, %v1270
    %v1280 = vmul.f32 %v1266, %v1275
    %v1281 = vpack.c.bf16 %v1280, %v1279
    %v1282 = vpack.c.bf16 %v1278, %v1277
    %1283 = vxpose.xlu0.c.b16.start [1/8] %v1281, 128
    %1284 = vxpose.xlu0.c.b16.cont [2/8] 0, 128
    %1285 = vxpose.xlu0.c.b16.cont [3/8] 0, 128
    %1286 = vxpose.xlu0.c.b16.cont [4/8] 0, 128
    %1287 = vxpose.xlu0.c.b16.cont [5/8] 0, 128
    %1288 = vxpose.xlu0.c.b16.cont [6/8] 0, 128
    %1289 = vxpose.xlu0.c.b16.cont [7/8] 0, 128
    %1290 = vxpose.xlu0.c.b16.end [8/8] 0, 128
    %v1291 = vpop.trf.xlu0
    %v1292 = vpop.trf.xlu0
    %v1293 = vpop.trf.xlu0
    %v1294 = vpop.trf.xlu0
    %v1295 = vpop.trf.xlu0
    %v1296 = vpop.trf.xlu0
    %v1297 = vpop.trf.xlu0
    %v1298 = vpop.trf.xlu0
    %v1300 = vsel %vm489, %v1291, 0
    %1302 = vmatprep.subr.bf16.mxu0 0
    %1303 = vmatpush1.bf16.msra.mxu0 %v1282
    %1304 = vmatprep.subr.bf16.mxu0 0
    %1305 = vmatpush1.bf16.msra.mxu0 0
    %1306 = vmatprep.subr.bf16.mxu0 0
    %1307 = vmatpush1.bf16.msra.mxu0 0
    %1308 = vmatprep.subr.bf16.mxu0 0
    %1309 = vmatpush1.bf16.msra.mxu0 0
    %1310 = vmatprep.subr.bf16.mxu0 0
    %1311 = vmatpush1.bf16.msra.mxu0 0
    %1312 = vmatprep.subr.bf16.mxu0 0
    %1313 = vmatpush1.bf16.msra.mxu0 0
    %1314 = vmatprep.subr.bf16.mxu0 0
    %1315 = vmatpush1.bf16.msra.mxu0 0
    %1316 = vmatprep.subr.bf16.mxu0 0
    %1317 = vmatpush1.bf16.msra.mxu0 0
    %1318 = vmatprep.subr.bf16.mxu0 0
    %1319 = vmatpush1.bf16.msra.mxu0 0
    %1320 = vmatprep.subr.bf16.mxu0 0
    %1321 = vmatpush1.bf16.msra.mxu0 0
    %1322 = vmatprep.subr.bf16.mxu0 0
    %1323 = vmatpush1.bf16.msra.mxu0 0
    %1324 = vmatprep.subr.bf16.mxu0 0
    %1325 = vmatpush1.bf16.msra.mxu0 0
    %1326 = vmatprep.subr.bf16.mxu0 0
    %1327 = vmatpush1.bf16.msra.mxu0 0
    %1328 = vmatprep.subr.bf16.mxu0 0
    %1329 = vmatpush1.bf16.msra.mxu0 0
    %1330 = vmatprep.subr.bf16.mxu0 0
    %1331 = vmatpush1.bf16.msra.mxu0 0
    %1332 = vmatprep.subr.bf16.mxu0 0
    %1333 = vmatpush1.bf16.msra.mxu0 0
    %1334 = vmatprep.mubr.bf16.mxu0 0
    %1335 = vmatmul.mubr.bf16.gmra.mrb[0].mxu0 %v1300
    %v1336 = vpop.f32.mrb[0].mxu0
    %v1337 = vadd.f32 0.0, %v1336
    %v1338 = vpop.f32.mrb[0].mxu0
    %v1339 = vpop.f32.mrb[0].mxu0
    %v1340 = vadd.f32 0.0, %v1339
    %v1341 = vpop.f32.mrb[0].mxu0
    %1342 = vdwg.mxu0
    %1343 = vmatprep.subr.bf16.mxu0 0
    %1344 = vmatpush1.bf16.msra.mxu0 %v1122
    %1345 = vmatprep.subr.bf16.mxu0 0
    %1346 = vmatpush1.bf16.msra.mxu0 0
    %1347 = vmatprep.subr.bf16.mxu0 0
    %1348 = vmatpush1.bf16.msra.mxu0 0
    %1349 = vmatprep.subr.bf16.mxu0 0
    %1350 = vmatpush1.bf16.msra.mxu0 0
    %1351 = vmatprep.subr.bf16.mxu0 0
    %1352 = vmatpush1.bf16.msra.mxu0 0
    %1353 = vmatprep.subr.bf16.mxu0 0
    %1354 = vmatpush1.bf16.msra.mxu0 0
    %1355 = vmatprep.subr.bf16.mxu0 0
    %1356 = vmatpush1.bf16.msra.mxu0 0
    %1357 = vmatprep.subr.bf16.mxu0 0
    %1358 = vmatpush1.bf16.msra.mxu0 0
    %1359 = vmatprep.subr.bf16.mxu0 0
    %1360 = vmatpush1.bf16.msra.mxu0 0
    %1361 = vmatprep.subr.bf16.mxu0 0
    %1362 = vmatpush1.bf16.msra.mxu0 0
    %1363 = vmatprep.subr.bf16.mxu0 0
    %1364 = vmatpush1.bf16.msra.mxu0 0
    %1365 = vmatprep.subr.bf16.mxu0 0
    %1366 = vmatpush1.bf16.msra.mxu0 0
    %1367 = vmatprep.subr.bf16.mxu0 0
    %1368 = vmatpush1.bf16.msra.mxu0 0
    %1369 = vmatprep.subr.bf16.mxu0 0
    %1370 = vmatpush1.bf16.msra.mxu0 0
    %1371 = vmatprep.subr.bf16.mxu0 0
    %1372 = vmatpush1.bf16.msra.mxu0 0
    %1373 = vmatprep.subr.bf16.mxu0 0
    %1374 = vmatpush1.bf16.msra.mxu0 0
    %1375 = vmatprep.mubr.bf16.mxu0 0
    %1376 = vmatmul.mubr.bf16.gmra.mrb[0].mxu0 %v1300
    %v1377 = vpop.f32.mrb[0].mxu0
    %v1378 = vadd.f32 0.0, %v1377
    %v1379 = vpop.f32.mrb[0].mxu0
    %v1380 = vpop.f32.mrb[0].mxu0
    %v1381 = vadd.f32 0.0, %v1380
    %v1382 = vpop.f32.mrb[0].mxu0
    %1383 = vdwg.mxu0
    %v1384 = vpack.c.bf16 %v1381, %v1378
    %v1386 = vsel %vm489, %v1384, 0
    %1388 = vmatprep.subr.bf16.mxu0 0
    %1389 = vmatpush1.bf16.msra.mxu0 %v1281
    %1390 = vmatprep.subr.bf16.mxu0 0
    %1391 = vmatpush1.bf16.msra.mxu0 0
    %1392 = vmatprep.subr.bf16.mxu0 0
    %1393 = vmatpush1.bf16.msra.mxu0 0
    %1394 = vmatprep.subr.bf16.mxu0 0
    %1395 = vmatpush1.bf16.msra.mxu0 0
    %1396 = vmatprep.subr.bf16.mxu0 0
    %1397 = vmatpush1.bf16.msra.mxu0 0
    %1398 = vmatprep.subr.bf16.mxu0 0
    %1399 = vmatpush1.bf16.msra.mxu0 0
    %1400 = vmatprep.subr.bf16.mxu0 0
    %1401 = vmatpush1.bf16.msra.mxu0 0
    %1402 = vmatprep.subr.bf16.mxu0 0
    %1403 = vmatpush1.bf16.msra.mxu0 0
    %1404 = vmatprep.subr.bf16.mxu0 0
    %1405 = vmatpush1.bf16.msra.mxu0 0
    %1406 = vmatprep.subr.bf16.mxu0 0
    %1407 = vmatpush1.bf16.msra.mxu0 0
    %1408 = vmatprep.subr.bf16.mxu0 0
    %1409 = vmatpush1.bf16.msra.mxu0 0
    %1410 = vmatprep.subr.bf16.mxu0 0
    %1411 = vmatpush1.bf16.msra.mxu0 0
    %1412 = vmatprep.subr.bf16.mxu0 0
    %1413 = vmatpush1.bf16.msra.mxu0 0
    %1414 = vmatprep.subr.bf16.mxu0 0
    %1415 = vmatpush1.bf16.msra.mxu0 0
    %1416 = vmatprep.subr.bf16.mxu0 0
    %1417 = vmatpush1.bf16.msra.mxu0 0
    %1418 = vmatprep.subr.bf16.mxu0 0
    %1419 = vmatpush1.bf16.msra.mxu0 0
    %1420 = vmatprep.mubr.bf16.mxu0 0
    %1421 = vmatmul.mubr.bf16.gmra.mrb[0].mxu0 %v1386
    %v1422 = vpop.f32.mrb[0].mxu0
    %v1423 = vadd.f32 0.0, %v1422
    %v1424 = vpop.f32.mrb[0].mxu0
    %v1425 = vpop.f32.mrb[0].mxu0
    %v1426 = vadd.f32 0.0, %v1425
    %v1427 = vpop.f32.mrb[0].mxu0
    %1428 = vdwg.mxu0
    %v1429 = vmul.f32 %v1423, %v115
    %v1430 = vmul.f32 %v1426, %v116
    %v1431 = vsel %vm489, %v1429, 0.0
    %v1432 = vsel %vm489, %v1430, 0.0
    %v1433 = vadd.f32 %v1431, %v1432
    %1434 = vadd.xlane.f32.xlu0 %v1433
    %v1435 = vpop.xlane.xlu0 %1434
    %v1436 = vrot.slane %v1435, 4
    %v1437 = vadd.f32 %v1435, %v1436
    %v1438 = vrot.slane %v1437, 2
    %v1439 = vadd.f32 %v1437, %v1438
    %v1440 = vrot.slane %v1439, 1
    %v1441 = vadd.f32 %v1439, %v1440
    %s1442 = vtos %v1441
    %v1443 = vstv %s1442
    %v1444 = vsel %vm489, %v937, 0.0
    %1445 = vadd.xlane.f32.xlu0 %v1444
    %v1446 = vpop.xlane.xlu0 %1445
    %v1447 = vsel %vm489, %v938, 0.0
    %1448 = vadd.xlane.f32.xlu0 %v1447
    %v1449 = vpop.xlane.xlu0 %1448
    %v1450 = vadd.f32 %v1446, 1e-15
    %v1451 = vadd.f32 %v1449, 1e-15
    %v1452 = vmul.f32 %v1279, %v1279
    %v1453 = vmul.f32 %v1280, %v1280
    %v1454 = vsel %vm489, %v1452, 0.0
    %1455 = vadd.xlane.f32.xlu0 %v1454
    %v1456 = vpop.xlane.xlu0 %1455
    %v1457 = vsel %vm489, %v1453, 0.0
    %1458 = vadd.xlane.f32.xlu0 %v1457
    %v1459 = vpop.xlane.xlu0 %1458
    %v1460 = vmul.f32 %v1450, %v1456
    %v1461 = vmul.f32 %v1451, %v1459
    %v1462 = vsel %vm516, %v1460, 0.0
    %v1463 = vsel %vm516, %v1461, 0.0
    %v1464 = vadd.f32 %v1462, %v1463
    %1465 = vadd.xlane.f32.xlu0 %v1464
    %v1466 = vpop.xlane.xlu0 %1465
    %v1467 = vrot.slane %v1466, 4
    %v1468 = vadd.f32 %v1466, %v1467
    %v1469 = vrot.slane %v1468, 2
    %v1470 = vadd.f32 %v1468, %v1469
    %v1471 = vrot.slane %v1470, 1
    %v1472 = vadd.f32 %v1470, %v1471
    %s1473 = vtos %v1472
    %v1474 = vstv %s1473
    %v1475 = vrcp.pop %v1474
    %v1476 = vmul.f32 %v1443, %v1475
    %v1477 = vsub.f32 %v1025, %v1476
    %1478 = vmatprep.subr.bf16.mxu0 0
    %1479 = vmatpush1.bf16.msra.mxu0 %v1281
    %1480 = vmatprep.subr.bf16.mxu0 0
    %1481 = vmatpush1.bf16.msra.mxu0 0
    %1482 = vmatprep.subr.bf16.mxu0 0
    %1483 = vmatpush1.bf16.msra.mxu0 0
    %1484 = vmatprep.subr.bf16.mxu0 0
    %1485 = vmatpush1.bf16.msra.mxu0 0
    %1486 = vmatprep.subr.bf16.mxu0 0
    %1487 = vmatpush1.bf16.msra.mxu0 0
    %1488 = vmatprep.subr.bf16.mxu0 0
    %1489 = vmatpush1.bf16.msra.mxu0 0
    %1490 = vmatprep.subr.bf16.mxu0 0
    %1491 = vmatpush1.bf16.msra.mxu0 0
    %1492 = vmatprep.subr.bf16.mxu0 0
    %1493 = vmatpush1.bf16.msra.mxu0 0
    %1494 = vmatprep.subr.bf16.mxu0 0
    %1495 = vmatpush1.bf16.msra.mxu0 0
    %1496 = vmatprep.subr.bf16.mxu0 0
    %1497 = vmatpush1.bf16.msra.mxu0 0
    %1498 = vmatprep.subr.bf16.mxu0 0
    %1499 = vmatpush1.bf16.msra.mxu0 0
    %1500 = vmatprep.subr.bf16.mxu0 0
    %1501 = vmatpush1.bf16.msra.mxu0 0
    %1502 = vmatprep.subr.bf16.mxu0 0
    %1503 = vmatpush1.bf16.msra.mxu0 0
    %1504 = vmatprep.subr.bf16.mxu0 0
    %1505 = vmatpush1.bf16.msra.mxu0 0
    %1506 = vmatprep.subr.bf16.mxu0 0
    %1507 = vmatpush1.bf16.msra.mxu0 0
    %1508 = vmatprep.subr.bf16.mxu0 0
    %1509 = vmatpush1.bf16.msra.mxu0 0
    %1510 = vmatprep.mubr.bf16.mxu0 0
    %1511 = vmatmul.mubr.bf16.gmra.mrb[0].mxu0 %v1300
    %v1512 = vpop.f32.mrb[0].mxu0
    %v1513 = vadd.f32 0.0, %v1512
    %v1514 = vpop.f32.mrb[0].mxu0
    %v1515 = vpop.f32.mrb[0].mxu0
    %v1516 = vadd.f32 0.0, %v1515
    %v1517 = vpop.f32.mrb[0].mxu0
    %1518 = vdwg.mxu0
    %v1519 = vmul.f32 %v1513, %v1513
    %v1520 = vmul.f32 %v1516, %v1516
    %v1521 = vsel %vm489, %v1519, 0.0
    %v1522 = vsel %vm489, %v1520, 0.0
    %v1523 = vadd.f32 %v1521, %v1522
    %1524 = vadd.xlane.f32.xlu0 %v1523
    %v1525 = vpop.xlane.xlu0 %1524
    %v1526 = vrot.slane %v1525, 4
    %v1527 = vadd.f32 %v1525, %v1526
    %v1528 = vrot.slane %v1527, 2
    %v1529 = vadd.f32 %v1527, %v1528
    %v1530 = vrot.slane %v1529, 1
    %v1531 = vadd.f32 %v1529, %v1530
    %s1532 = vtos %v1531
    %v1533 = vstv %s1532
    %v1534 = vrsqrt.pop %v1533
    %v1535 = vmul.f32 %v1513, %v1534
    %v1536 = vmul.f32 %v1516, %v1534
    %v1537 = vmul.f32 %v115, 0.25
    %v1538 = vmul.f32 %v116, 0.25
    %v1539 = vsub.f32 %v1535, %v1537
    %v1540 = vsub.f32 %v1536, %v1538
    %v1541 = vmul.f32 %v1539, %v1539
    %v1542 = vmul.f32 %v1540, %v1540
    %v1543 = vsel %vm489, %v1541, 0.0
    %v1544 = vsel %vm489, %v1542, 0.0
    %v1545 = vadd.f32 %v1543, %v1544
    %1546 = vadd.xlane.f32.xlu0 %v1545
    %v1547 = vpop.xlane.xlu0 %1546
    %v1548 = vrot.slane %v1547, 4
    %v1549 = vadd.f32 %v1547, %v1548
    %v1550 = vrot.slane %v1549, 2
    %v1551 = vadd.f32 %v1549, %v1550
    %v1552 = vrot.slane %v1551, 1
    %v1553 = vadd.f32 %v1551, %v1552
    %s1554 = vtos %v1553
    %v1555 = vstv %s1554
    %v1556 = vrsqrt.pop %v1555
    %v1557 = vmul.f32 %v1555, %v1556
    %vm1558 = vcmp.eq.f32.partialorder %v1555, inf
    %v1559 = vsel %vm1558, %v1555, %v1557
    %vm1560 = vcmp.eq.f32.partialorder %v1555, 0.0
    %v1561 = vand.u32 %v1555, 2147483648
    %v1562 = vsel %vm1560, %v1561, %v1559
    %v1563 = vadd.f32 %v1121, %v1562
    %v1564 = vsub.f32 1.0, %v115
    %v1565 = vsub.f32 1.0, %v116
    %v1566 = vmul.f32 %v1423, %v1564
    %v1567 = vmul.f32 %v1426, %v1565
    %v1568 = vsel %vm489, %v1566, 0.0
    %1569 = vadd.xlane.f32.xlu0 %v1568
    %v1570 = vpop.xlane.xlu0 %1569
    %v1571 = vsel %vm489, %v1567, 0.0
    %1572 = vadd.xlane.f32.xlu0 %v1571
    %v1573 = vpop.xlane.xlu0 %1572
    %v1574 = vadd.f32 %v1570, 1e-15
    %v1575 = vadd.f32 %v1573, 1e-15
    %v1576 = vrsqrt.pop %v1574
    %v1577 = vrsqrt.pop %v1575
    %v1578 = vld [vmem:[%s13] sm:$0xf]
    %v1579 = vld [vmem:[%s13 + $0x4] sm:$0xf]
    %v1580 = vld [vmem:[%s13 + $0x8] sm:$0xf]
    %v1581 = vld [vmem:[%s13 + $0xc] sm:$0xf]
    %v1582 = vpack.c.bf16 %v1340, %v1337
    %v1587 = vunpack.c.l.b16 %v1578
    %v1588 = vunpack.c.l.b16 %v1579
    %v1589 = vunpack.c.l.b16 %v1580
    %v1590 = vunpack.c.l.b16 %v1581
    %v1591 = vpack.c.b16 %v1588, %v1587
    %v1592 = vpack.c.b16 %v1590, %v1589
    %v1596 = vsel %vm224, %v1582, 0
    %1598 = vmatprep.subr.bf16.mxu0 0
    %1599 = vmatpush1.bf16.msra.mxu0 %v1591
    %1600 = vmatprep.subr.bf16.mxu0 0
    %1601 = vmatpush1.bf16.msra.mxu0 %v1592
    %1602 = vmatprep.subr.bf16.mxu0 0
    %1603 = vmatpush1.bf16.msra.mxu0 0
    %1604 = vmatprep.subr.bf16.mxu0 0
    %1605 = vmatpush1.bf16.msra.mxu0 0
    %1606 = vmatprep.subr.bf16.mxu0 0
    %1607 = vmatpush1.bf16.msra.mxu0 0
    %1608 = vmatprep.subr.bf16.mxu0 0
    %1609 = vmatpush1.bf16.msra.mxu0 0
    %1610 = vmatprep.subr.bf16.mxu0 0
    %1611 = vmatpush1.bf16.msra.mxu0 0
    %1612 = vmatprep.subr.bf16.mxu0 0
    %1613 = vmatpush1.bf16.msra.mxu0 0
    %1614 = vmatprep.subr.bf16.mxu0 0
    %1615 = vmatpush1.bf16.msra.mxu0 0
    %1616 = vmatprep.subr.bf16.mxu0 0
    %1617 = vmatpush1.bf16.msra.mxu0 0
    %1618 = vmatprep.subr.bf16.mxu0 0
    %1619 = vmatpush1.bf16.msra.mxu0 0
    %1620 = vmatprep.subr.bf16.mxu0 0
    %1621 = vmatpush1.bf16.msra.mxu0 0
    %1622 = vmatprep.subr.bf16.mxu0 0
    %1623 = vmatpush1.bf16.msra.mxu0 0
    %1624 = vmatprep.subr.bf16.mxu0 0
    %1625 = vmatpush1.bf16.msra.mxu0 0
    %1626 = vmatprep.subr.bf16.mxu0 0
    %1627 = vmatpush1.bf16.msra.mxu0 0
    %1628 = vmatprep.subr.bf16.mxu0 0
    %1629 = vmatpush1.bf16.msra.mxu0 0
    %1630 = vmatprep.mubr.bf16.mxu0 0
    %1631 = vmatmul.mubr.bf16.gmra.mrb[0].mxu0 %v1596
    %v1632 = vpop.f32.mrb[0].mxu0
    %v1633 = vadd.f32 0.0, %v1632
    %v1634 = vpop.f32.mrb[0].mxu0
    %v1635 = vpop.f32.mrb[0].mxu0
    %v1636 = vadd.f32 0.0, %v1635
    %v1637 = vpop.f32.mrb[0].mxu0
    %1638 = vdwg.mxu0
    %v1639 = vld [vmem:[%s15] sm:$0xf]
    %v1640 = vld [vmem:[%s15 + $0x4] sm:$0xf]
    %v1641 = vld [vmem:[%s15 + $0x8] sm:$0xf]
    %v1642 = vld [vmem:[%s15 + $0xc] sm:$0xf]
    %v1647 = vunpack.c.l.b16 %v1639
    %v1648 = vunpack.c.l.b16 %v1640
    %v1649 = vunpack.c.l.b16 %v1641
    %v1650 = vunpack.c.l.b16 %v1642
    %v1651 = vpack.c.b16 %v1648, %v1647
    %v1652 = vpack.c.b16 %v1650, %v1649
    %1655 = vmatprep.subr.bf16.mxu0 0
    %1656 = vmatpush1.bf16.msra.mxu0 %v1651
    %1657 = vmatprep.subr.bf16.mxu0 0
    %1658 = vmatpush1.bf16.msra.mxu0 %v1652
    %1659 = vmatprep.subr.bf16.mxu0 0
    %1660 = vmatpush1.bf16.msra.mxu0 0
    %1661 = vmatprep.subr.bf16.mxu0 0
    %1662 = vmatpush1.bf16.msra.mxu0 0
    %1663 = vmatprep.subr.bf16.mxu0 0
    %1664 = vmatpush1.bf16.msra.mxu0 0
    %1665 = vmatprep.subr.bf16.mxu0 0
    %1666 = vmatpush1.bf16.msra.mxu0 0
    %1667 = vmatprep.subr.bf16.mxu0 0
    %1668 = vmatpush1.bf16.msra.mxu0 0
    %1669 = vmatprep.subr.bf16.mxu0 0
    %1670 = vmatpush1.bf16.msra.mxu0 0
    %1671 = vmatprep.subr.bf16.mxu0 0
    %1672 = vmatpush1.bf16.msra.mxu0 0
    %1673 = vmatprep.subr.bf16.mxu0 0
    %1674 = vmatpush1.bf16.msra.mxu0 0
    %1675 = vmatprep.subr.bf16.mxu0 0
    %1676 = vmatpush1.bf16.msra.mxu0 0
    %1677 = vmatprep.subr.bf16.mxu0 0
    %1678 = vmatpush1.bf16.msra.mxu0 0
    %1679 = vmatprep.subr.bf16.mxu0 0
    %1680 = vmatpush1.bf16.msra.mxu0 0
    %1681 = vmatprep.subr.bf16.mxu0 0
    %1682 = vmatpush1.bf16.msra.mxu0 0
    %1683 = vmatprep.subr.bf16.mxu0 0
    %1684 = vmatpush1.bf16.msra.mxu0 0
    %1685 = vmatprep.subr.bf16.mxu0 0
    %1686 = vmatpush1.bf16.msra.mxu0 0
    %1687 = vmatprep.mubr.bf16.mxu0 0
    %1688 = vmatmul.mubr.bf16.gmra.mrb[0].mxu0 %v1596
    %v1689 = vpop.f32.mrb[0].mxu0
    %v1690 = vadd.f32 0.0, %v1689
    %v1691 = vpop.f32.mrb[0].mxu0
    %v1692 = vpop.f32.mrb[0].mxu0
    %v1693 = vadd.f32 0.0, %v1692
    %v1694 = vpop.f32.mrb[0].mxu0
    %1695 = vdwg.mxu0
    %v1696 = vmul.f32 %v1566, %v1576
    %v1697 = vmul.f32 %v1567, %v1577
    %v1698 = vmul.f32 %v1633, %v1576
    %v1699 = vmul.f32 %v1636, %v1577
    %v1700 = vpack.c.bf16 %v1697, %v1696
    %v1701 = vpack.c.bf16 %v1699, %v1698
    %v1703 = vsel %vm489, %v1700, 0
    %1705 = vmatprep.subr.bf16.mxu0 0
    %1706 = vmatpush1.bf16.msra.mxu0 %v1701
    %1707 = vmatprep.subr.bf16.mxu0 0
    %1708 = vmatpush1.bf16.msra.mxu0 0
    %1709 = vmatprep.subr.bf16.mxu0 0
    %1710 = vmatpush1.bf16.msra.mxu0 0
    %1711 = vmatprep.subr.bf16.mxu0 0
    %1712 = vmatpush1.bf16.msra.mxu0 0
    %1713 = vmatprep.subr.bf16.mxu0 0
    %1714 = vmatpush1.bf16.msra.mxu0 0
    %1715 = vmatprep.subr.bf16.mxu0 0
    %1716 = vmatpush1.bf16.msra.mxu0 0
    %1717 = vmatprep.subr.bf16.mxu0 0
    %1718 = vmatpush1.bf16.msra.mxu0 0
    %1719 = vmatprep.subr.bf16.mxu0 0
    %1720 = vmatpush1.bf16.msra.mxu0 0
    %1721 = vmatprep.subr.bf16.mxu0 0
    %1722 = vmatpush1.bf16.msra.mxu0 0
    %1723 = vmatprep.subr.bf16.mxu0 0
    %1724 = vmatpush1.bf16.msra.mxu0 0
    %1725 = vmatprep.subr.bf16.mxu0 0
    %1726 = vmatpush1.bf16.msra.mxu0 0
    %1727 = vmatprep.subr.bf16.mxu0 0
    %1728 = vmatpush1.bf16.msra.mxu0 0
    %1729 = vmatprep.subr.bf16.mxu0 0
    %1730 = vmatpush1.bf16.msra.mxu0 0
    %1731 = vmatprep.subr.bf16.mxu0 0
    %1732 = vmatpush1.bf16.msra.mxu0 0
    %1733 = vmatprep.subr.bf16.mxu0 0
    %1734 = vmatpush1.bf16.msra.mxu0 0
    %1735 = vmatprep.subr.bf16.mxu0 0
    %1736 = vmatpush1.bf16.msra.mxu0 0
    %1737 = vmatprep.mubr.bf16.mxu0 0
    %1738 = vmatmul.mubr.bf16.gmra.mrb[0].mxu0 %v1703
    %v1739 = vpop.f32.mrb[0].mxu0
    %v1740 = vadd.f32 %v1690, %v1739
    %v1741 = vpop.f32.mrb[0].mxu0
    %v1742 = vpop.f32.mrb[0].mxu0
    %v1743 = vadd.f32 %v1693, %v1742
    %v1744 = vpop.f32.mrb[0].mxu0
    %1745 = vdwg.mxu0
    %v1746 = vld [vmem:[%s14] sm:$0x1]
    %v1748 = vlaneseq
    %v1749 = vshrl.u32 %v1748, 7
    %v1750 = vsub.s32 0, %v1749
    %v1751 = vrot.slane %v1746, %v1750
    %v1753 = vadd.f32 %v1740, %v1751
    %v1754 = vadd.f32 %v1743, %v1751
    %v1755 = vsel %vm224, %v1753, 0.0
    %v1756 = vsel %vm224, %v1754, 0.0
    %v1757 = vadd.f32 %v1755, %v1756
    %v1758 = vrot.slane %v1757, 4
    %v1759 = vadd.f32 %v1757, %v1758
    %v1760 = vrot.slane %v1759, 2
    %v1761 = vadd.f32 %v1759, %v1760
    %v1762 = vrot.slane %v1761, 1
    %v1763 = vadd.f32 %v1761, %v1762
    %vm1764 = vcmp.eq.s32.totalorder %v107, 0
    %v1765 = vsel %vm1764, 1, 0
    %vm1766 = vcmp.eq.s32.totalorder %v1765, 1
    %v1767 = vsel %vm1766, %v1763, 0.0
    %v1768 = vadd.f32 %v1767, 0.0
    %s1769 = scalar_lea.vmem %s1, 16
    %v1770 = vld [vmem:[%s1769] sm:$0xff]
    %v1771 = vld [vmem:[%s1769 + $0x8] sm:$0xff]
    %s1772 = scalar_lea.vmem %s2, 16
    %v1773 = vld [vmem:[%s1772] sm:$0xff]
    %v1774 = vld [vmem:[%s1772 + $0x8] sm:$0xff]
    %s1775 = scalar_lea.vmem %s3, 16
    %v1776 = vld [vmem:[%s1775] sm:$0xff]
    %v1777 = vld [vmem:[%s1775 + $0x8] sm:$0xff]
    %v1778 = vmul.f32 %v115, %v479
    %v1779 = vmul.f32 %v116, %v480
    %v1780 = vsel %vm489, %v1778, 0.0
    %v1781 = vsel %vm489, %v1779, 0.0
    %v1782 = vadd.f32 %v1780, %v1781
    %v1783 = vrot.slane %v1782, 4
    %v1784 = vadd.f32 %v1782, %v1783
    %v1785 = vrot.slane %v1784, 2
    %v1786 = vadd.f32 %v1784, %v1785
    %v1787 = vrot.slane %v1786, 1
    %v1788 = vadd.f32 %v1786, %v1787
    %v1789 = vmul.f32 %v479, %v1788
    %v1790 = vmul.f32 %v480, %v1788
    %v1791 = vmul.f32 %v479, %v479
    %v1792 = vmul.f32 %v480, %v480
    %v1793 = vmul.f32 %v1788, %v1788
    %v1794 = vsub.f32 %v1791, %v1789
    %v1795 = vsub.f32 %v1792, %v1790
    %v1796 = vsub.f32 %v1793, %v1789
    %v1797 = vsub.f32 %v1793, %v1790
    %v1798 = vsel %vm489, %v1770, 0.0
    %1799 = vadd.xlane.f32.xlu0 %v1798
    %v1800 = vpop.xlane.xlu0 %1799
    %v1801 = vsel %vm489, %v1771, 0.0
    %1802 = vadd.xlane.f32.xlu0 %v1801
    %v1803 = vpop.xlane.xlu0 %1802
    %v1804 = vmul.f32 %v1800, %v1791
    %v1805 = vmul.f32 %v1803, %v1792
    %v1806 = vsel %vm516, %v1804, 0.0
    %v1807 = vsel %vm516, %v1805, 0.0
    %v1808 = vadd.f32 %v1806, %v1807
    %1809 = vadd.xlane.f32.xlu0 %v1808
    %v1810 = vpop.xlane.xlu0 %1809
    %v1811 = vrot.slane %v1810, 4
    %v1812 = vadd.f32 %v1810, %v1811
    %v1813 = vrot.slane %v1812, 2
    %v1814 = vadd.f32 %v1812, %v1813
    %v1815 = vrot.slane %v1814, 1
    %v1816 = vadd.f32 %v1814, %v1815
    %s1817 = vtos %v1816
    %v1818 = vstv %s1817
    %v1819 = vmul.f32 %v1770, %v1789
    %v1820 = vmul.f32 %v1771, %v1790
    %v1821 = vsel %vm489, %v1819, 0.0
    %v1822 = vsel %vm489, %v1820, 0.0
    %v1823 = vadd.f32 %v1821, %v1822
    %1824 = vadd.xlane.f32.xlu0 %v1823
    %v1825 = vpop.xlane.xlu0 %1824
    %v1826 = vrot.slane %v1825, 4
    %v1827 = vadd.f32 %v1825, %v1826
    %v1828 = vrot.slane %v1827, 2
    %v1829 = vadd.f32 %v1827, %v1828
    %v1830 = vrot.slane %v1829, 1
    %v1831 = vadd.f32 %v1829, %v1830
    %s1832 = vtos %v1831
    %v1833 = vstv %s1832
    %v1834 = vsub.f32 %v1818, %v1833
    %v1835 = vsel %vm516, %v479, 0.0
    %v1836 = vsel %vm516, %v480, 0.0
    %v1837 = vadd.f32 %v1835, %v1836
    %1838 = vadd.xlane.f32.xlu0 %v1837
    %v1839 = vpop.xlane.xlu0 %1838
    %v1840 = vrot.slane %v1839, 4
    %v1841 = vadd.f32 %v1839, %v1840
    %v1842 = vrot.slane %v1841, 2
    %v1843 = vadd.f32 %v1841, %v1842
    %v1844 = vrot.slane %v1843, 1
    %v1845 = vadd.f32 %v1843, %v1844
    %s1846 = vtos %v1845
    %v1847 = vstv %s1846
    %v1848 = vsel %vm516, %v1791, 0.0
    %v1849 = vsel %vm516, %v1792, 0.0
    %v1850 = vadd.f32 %v1848, %v1849
    %1851 = vadd.xlane.f32.xlu0 %v1850
    %v1852 = vpop.xlane.xlu0 %1851
    %v1853 = vrot.slane %v1852, 4
    %v1854 = vadd.f32 %v1852, %v1853
    %v1855 = vrot.slane %v1854, 2
    %v1856 = vadd.f32 %v1854, %v1855
    %v1857 = vrot.slane %v1856, 1
    %v1858 = vadd.f32 %v1856, %v1857
    %s1859 = vtos %v1858
    %v1860 = vstv %s1859
    %v1861 = vmul.f32 %v1860, 16.0
    %v1862 = vmul.f32 %v1847, %v1847
    %v1863 = vsub.f32 %v1861, %v1862
    %v1864 = vadd.f32 %v1863, 1e-15
    %v1865 = vrcp.pop %v1864
    %v1866 = vmul.f32 %v1834, %v1865
    %v1867 = vand.u32 2147483647, %v1866
    %v1868 = vmul.f32 %v1867, 16.0
    %v1869 = vmul.f32 %v1868, 4.0
    %v1870 = vsub.f32 %v1770, %v1770
    %v1871 = vsub.f32 %v1771, %v1771
    %v1872 = vmul.f32 %v1870, 2.0
    %v1873 = vmul.f32 %v1871, 2.0
    %v1874 = vmul.f32 %v1869, %v1794
    %v1875 = vmul.f32 %v1869, %v1795
    %v1876 = vadd.f32 %v1872, %v1874
    %v1877 = vadd.f32 %v1873, %v1875
    %v1878 = vsub.f32 %v1773, %v1773
    %v1879 = vsub.f32 %v1774, %v1774
    %v1880 = vmul.f32 %v1878, 2.0
    %v1881 = vmul.f32 %v1879, 2.0
    %v1882 = vmul.f32 %v1869, %v1796
    %v1883 = vmul.f32 %v1869, %v1797
    %v1884 = vadd.f32 %v1880, %v1882
    %v1885 = vadd.f32 %v1881, %v1883
    %v1886 = vadd.f32 %v1876, %v1884
    %v1887 = vadd.f32 %v1877, %v1885
    %v1888 = vmul.f32 %v1876, %v115
    %v1889 = vmul.f32 %v1877, %v116
    %v1890 = vsub.f32 %v1886, %v1888
    %v1891 = vsub.f32 %v1887, %v1889
    %v1892 = vmul.f32 %v1890, 0.01
    %v1893 = vmul.f32 %v1891, 0.01
    %v1894 = vsub.f32 %v1770, %v1892
    %v1895 = vsub.f32 %v1771, %v1893
    %v1896 = vsel %vm489, %v1894, -inf
    %1897 = vmax.xlane.f32.xlu0 %v1896
    %v1898 = vpop.xlane.xlu0 %1897
    %v1899 = vsel %vm489, %v1895, -inf
    %1900 = vmax.xlane.f32.xlu0 %v1899
    %v1901 = vpop.xlane.xlu0 %1900
    %v1902 = vsub.f32 %v1894, %v1898
    %v1903 = vsub.f32 %v1895, %v1901
    %v1904 = vmul.f32 %v1902, 1.442695
    %v1905 = vpow.pop %v1904
    %v1906 = vmul.f32 %v1903, 1.442695
    %v1907 = vpow.pop %v1906
    %v1908 = vsel %vm489, %v1905, 0.0
    %1909 = vadd.xlane.f32.xlu0 %v1908
    %v1910 = vpop.xlane.xlu0 %1909
    %v1911 = vsel %vm489, %v1907, 0.0
    %1912 = vadd.xlane.f32.xlu0 %v1911
    %v1913 = vpop.xlane.xlu0 %1912
    %v1914 = vrcp.pop %v1910
    %v1915 = vrcp.pop %v1913
    %v1916 = vmul.f32 %v1905, %v1914
    %v1917 = vmul.f32 %v1907, %v1915
    %v1918 = vmul.f32 %v1916, %v1770
    %v1919 = vmul.f32 %v1917, %v1771
    %v1920 = vsub.f32 %v1773, %v1892
    %v1921 = vsub.f32 %v1774, %v1893
    %v1922 = vsel %vm489, %v1920, -inf
    %v1923 = vsel %vm489, %v1921, -inf
    %v1924 = vmax.f32 %v1922, %v1923
    %v1925 = vrot.slane %v1924, 4
    %v1926 = vmax.f32 %v1924, %v1925
    %v1927 = vrot.slane %v1926, 2
    %v1928 = vmax.f32 %v1926, %v1927
    %v1929 = vrot.slane %v1928, 1
    %v1930 = vmax.f32 %v1928, %v1929
    %v1931 = vsub.f32 %v1920, %v1930
    %v1932 = vsub.f32 %v1921, %v1930
    %v1933 = vmul.f32 %v1931, 1.442695
    %v1934 = vpow.pop %v1933
    %v1935 = vmul.f32 %v1932, 1.442695
    %v1936 = vpow.pop %v1935
    %v1937 = vsel %vm489, %v1934, 0.0
    %v1938 = vsel %vm489, %v1936, 0.0
    %v1939 = vadd.f32 %v1937, %v1938
    %v1940 = vrot.slane %v1939, 4
    %v1941 = vadd.f32 %v1939, %v1940
    %v1942 = vrot.slane %v1941, 2
    %v1943 = vadd.f32 %v1941, %v1942
    %v1944 = vrot.slane %v1943, 1
    %v1945 = vadd.f32 %v1943, %v1944
    %v1946 = vrcp.pop %v1945
    %v1947 = vmul.f32 %v1934, %v1946
    %v1948 = vmul.f32 %v1936, %v1946
    %v1949 = vmul.f32 %v1947, %v1773
    %v1950 = vmul.f32 %v1948, %v1774
    %v1951 = vsub.f32 %v1918, %v1770
    %v1952 = vsub.f32 %v1919, %v1771
    %v1953 = vmul.f32 %v1951, 2.0
    %v1954 = vmul.f32 %v1952, 2.0
    %v1955 = vadd.f32 %v1953, %v1874
    %v1956 = vadd.f32 %v1954, %v1875
    %v1957 = vsub.f32 %v1949, %v1773
    %v1958 = vsub.f32 %v1950, %v1774
    %v1959 = vmul.f32 %v1957, 2.0
    %v1960 = vmul.f32 %v1958, 2.0
    %v1961 = vadd.f32 %v1959, %v1882
    %v1962 = vadd.f32 %v1960, %v1883
    %v1963 = vadd.f32 %v1955, %v1961
    %v1964 = vadd.f32 %v1956, %v1962
    %v1965 = vmul.f32 %v1955, %v115
    %v1966 = vmul.f32 %v1956, %v116
    %v1967 = vsub.f32 %v1963, %v1965
    %v1968 = vsub.f32 %v1964, %v1966
    %v1969 = vmul.f32 %v1967, 0.01
    %v1970 = vmul.f32 %v1968, 0.01
    %v1971 = vsub.f32 %v1918, %v1969
    %v1972 = vsub.f32 %v1919, %v1970
    %v1973 = vsel %vm489, %v1971, -inf
    %1974 = vmax.xlane.f32.xlu0 %v1973
    %v1975 = vpop.xlane.xlu0 %1974
    %v1976 = vsel %vm489, %v1972, -inf
    %1977 = vmax.xlane.f32.xlu0 %v1976
    %v1978 = vpop.xlane.xlu0 %1977
    %v1979 = vsub.f32 %v1971, %v1975
    %v1980 = vsub.f32 %v1972, %v1978
    %v1981 = vmul.f32 %v1979, 1.442695
    %v1982 = vpow.pop %v1981
    %v1983 = vmul.f32 %v1980, 1.442695
    %v1984 = vpow.pop %v1983
    %v1985 = vsel %vm489, %v1982, 0.0
    %1986 = vadd.xlane.f32.xlu0 %v1985
    %v1987 = vpop.xlane.xlu0 %1986
    %v1988 = vsel %vm489, %v1984, 0.0
    %1989 = vadd.xlane.f32.xlu0 %v1988
    %v1990 = vpop.xlane.xlu0 %1989
    %v1991 = vrcp.pop %v1987
    %v1992 = vrcp.pop %v1990
    %v1993 = vmul.f32 %v1982, %v1991
    %v1994 = vmul.f32 %v1984, %v1992
    %v1995 = vmul.f32 %v1993, %v1770
    %v1996 = vmul.f32 %v1994, %v1771
    %v1997 = vsub.f32 %v1949, %v1969
    %v1998 = vsub.f32 %v1950, %v1970
    %v1999 = vsel %vm489, %v1997, -inf
    %v2000 = vsel %vm489, %v1998, -inf
    %v2001 = vmax.f32 %v1999, %v2000
    %v2002 = vrot.slane %v2001, 4
    %v2003 = vmax.f32 %v2001, %v2002
    %v2004 = vrot.slane %v2003, 2
    %v2005 = vmax.f32 %v2003, %v2004
    %v2006 = vrot.slane %v2005, 1
    %v2007 = vmax.f32 %v2005, %v2006
    %v2008 = vsub.f32 %v1997, %v2007
    %v2009 = vsub.f32 %v1998, %v2007
    %v2010 = vmul.f32 %v2008, 1.442695
    %v2011 = vpow.pop %v2010
    %v2012 = vmul.f32 %v2009, 1.442695
    %v2013 = vpow.pop %v2012
    %v2014 = vsel %vm489, %v2011, 0.0
    %v2015 = vsel %vm489, %v2013, 0.0
    %v2016 = vadd.f32 %v2014, %v2015
    %v2017 = vrot.slane %v2016, 4
    %v2018 = vadd.f32 %v2016, %v2017
    %v2019 = vrot.slane %v2018, 2
    %v2020 = vadd.f32 %v2018, %v2019
    %v2021 = vrot.slane %v2020, 1
    %v2022 = vadd.f32 %v2020, %v2021
    %v2023 = vrcp.pop %v2022
    %v2024 = vmul.f32 %v2011, %v2023
    %v2025 = vmul.f32 %v2013, %v2023
    %v2026 = vmul.f32 %v2024, %v1773
    %v2027 = vmul.f32 %v2025, %v1774
    %v2028 = vsub.f32 %v1995, %v1770
    %v2029 = vsub.f32 %v1996, %v1771
    %v2030 = vmul.f32 %v2028, 2.0
    %v2031 = vmul.f32 %v2029, 2.0
    %v2032 = vadd.f32 %v2030, %v1874
    %v2033 = vadd.f32 %v2031, %v1875
    %v2034 = vsub.f32 %v2026, %v1773
    %v2035 = vsub.f32 %v2027, %v1774
    %v2036 = vmul.f32 %v2034, 2.0
    %v2037 = vmul.f32 %v2035, 2.0
    %v2038 = vadd.f32 %v2036, %v1882
    %v2039 = vadd.f32 %v2037, %v1883
    %v2040 = vadd.f32 %v2032, %v2038
    %v2041 = vadd.f32 %v2033, %v2039
    %v2042 = vmul.f32 %v2032, %v115
    %v2043 = vmul.f32 %v2033, %v116
    %v2044 = vsub.f32 %v2040, %v2042
    %v2045 = vsub.f32 %v2041, %v2043
    %v2046 = vmul.f32 %v2044, 0.01
    %v2047 = vmul.f32 %v2045, 0.01
    %v2048 = vsub.f32 %v1995, %v2046
    %v2049 = vsub.f32 %v1996, %v2047
    %v2050 = vsel %vm489, %v2048, -inf
    %2051 = vmax.xlane.f32.xlu0 %v2050
    %v2052 = vpop.xlane.xlu0 %2051
    %v2053 = vsel %vm489, %v2049, -inf
    %2054 = vmax.xlane.f32.xlu0 %v2053
    %v2055 = vpop.xlane.xlu0 %2054
    %v2056 = vsub.f32 %v2048, %v2052
    %v2057 = vsub.f32 %v2049, %v2055
    %v2058 = vmul.f32 %v2056, 1.442695
    %v2059 = vpow.pop %v2058
    %v2060 = vmul.f32 %v2057, 1.442695
    %v2061 = vpow.pop %v2060
    %v2062 = vsel %vm489, %v2059, 0.0
    %2063 = vadd.xlane.f32.xlu0 %v2062
    %v2064 = vpop.xlane.xlu0 %2063
    %v2065 = vsel %vm489, %v2061, 0.0
    %2066 = vadd.xlane.f32.xlu0 %v2065
    %v2067 = vpop.xlane.xlu0 %2066
    %v2068 = vrcp.pop %v2064
    %v2069 = vrcp.pop %v2067
    %v2070 = vmul.f32 %v2059, %v2068
    %v2071 = vmul.f32 %v2061, %v2069
    %v2072 = vmul.f32 %v2070, %v1770
    %v2073 = vmul.f32 %v2071, %v1771
    %v2074 = vsub.f32 %v2026, %v2046
    %v2075 = vsub.f32 %v2027, %v2047
    %v2076 = vsel %vm489, %v2074, -inf
    %v2077 = vsel %vm489, %v2075, -inf
    %v2078 = vmax.f32 %v2076, %v2077
    %v2079 = vrot.slane %v2078, 4
    %v2080 = vmax.f32 %v2078, %v2079
    %v2081 = vrot.slane %v2080, 2
    %v2082 = vmax.f32 %v2080, %v2081
    %v2083 = vrot.slane %v2082, 1
    %v2084 = vmax.f32 %v2082, %v2083
    %v2085 = vsub.f32 %v2074, %v2084
    %v2086 = vsub.f32 %v2075, %v2084
    %v2087 = vmul.f32 %v2085, 1.442695
    %v2088 = vpow.pop %v2087
    %v2089 = vmul.f32 %v2086, 1.442695
    %v2090 = vpow.pop %v2089
    %v2091 = vsel %vm489, %v2088, 0.0
    %v2092 = vsel %vm489, %v2090, 0.0
    %v2093 = vadd.f32 %v2091, %v2092
    %v2094 = vrot.slane %v2093, 4
    %v2095 = vadd.f32 %v2093, %v2094
    %v2096 = vrot.slane %v2095, 2
    %v2097 = vadd.f32 %v2095, %v2096
    %v2098 = vrot.slane %v2097, 1
    %v2099 = vadd.f32 %v2097, %v2098
    %v2100 = vrcp.pop %v2099
    %v2101 = vmul.f32 %v2088, %v2100
    %v2102 = vmul.f32 %v2090, %v2100
    %v2103 = vmul.f32 %v2101, %v1773
    %v2104 = vmul.f32 %v2102, %v1774
    %v2105 = vsub.f32 %v2072, %v1770
    %v2106 = vsub.f32 %v2073, %v1771
    %v2107 = vmul.f32 %v2105, 2.0
    %v2108 = vmul.f32 %v2106, 2.0
    %v2109 = vadd.f32 %v2107, %v1874
    %v2110 = vadd.f32 %v2108, %v1875
    %v2111 = vsub.f32 %v2103, %v1773
    %v2112 = vsub.f32 %v2104, %v1774
    %v2113 = vmul.f32 %v2111, 2.0
    %v2114 = vmul.f32 %v2112, 2.0
    %v2115 = vadd.f32 %v2113, %v1882
    %v2116 = vadd.f32 %v2114, %v1883
    %v2117 = vadd.f32 %v2109, %v2115
    %v2118 = vadd.f32 %v2110, %v2116
    %v2119 = vmul.f32 %v2109, %v115
    %v2120 = vmul.f32 %v2110, %v116
    %v2121 = vsub.f32 %v2117, %v2119
    %v2122 = vsub.f32 %v2118, %v2120
    %v2123 = vmul.f32 %v2121, 0.01
    %v2124 = vmul.f32 %v2122, 0.01
    %v2125 = vsub.f32 %v2072, %v2123
    %v2126 = vsub.f32 %v2073, %v2124
    %v2127 = vsel %vm489, %v2125, -inf
    %2128 = vmax.xlane.f32.xlu0 %v2127
    %v2129 = vpop.xlane.xlu0 %2128
    %v2130 = vsel %vm489, %v2126, -inf
    %2131 = vmax.xlane.f32.xlu0 %v2130
    %v2132 = vpop.xlane.xlu0 %2131
    %v2133 = vsub.f32 %v2125, %v2129
    %v2134 = vsub.f32 %v2126, %v2132
    %v2135 = vmul.f32 %v2133, 1.442695
    %v2136 = vpow.pop %v2135
    %v2137 = vmul.f32 %v2134, 1.442695
    %v2138 = vpow.pop %v2137
    %v2139 = vsel %vm489, %v2136, 0.0
    %2140 = vadd.xlane.f32.xlu0 %v2139
    %v2141 = vpop.xlane.xlu0 %2140
    %v2142 = vsel %vm489, %v2138, 0.0
    %2143 = vadd.xlane.f32.xlu0 %v2142
    %v2144 = vpop.xlane.xlu0 %2143
    %v2145 = vrcp.pop %v2141
    %v2146 = vrcp.pop %v2144
    %v2147 = vmul.f32 %v2136, %v2145
    %v2148 = vmul.f32 %v2138, %v2146
    %v2149 = vmul.f32 %v2147, %v1770
    %v2150 = vmul.f32 %v2148, %v1771
    %v2151 = vsub.f32 %v2103, %v2123
    %v2152 = vsub.f32 %v2104, %v2124
    %v2153 = vsel %vm489, %v2151, -inf
    %v2154 = vsel %vm489, %v2152, -inf
    %v2155 = vmax.f32 %v2153, %v2154
    %v2156 = vrot.slane %v2155, 4
    %v2157 = vmax.f32 %v2155, %v2156
    %v2158 = vrot.slane %v2157, 2
    %v2159 = vmax.f32 %v2157, %v2158
    %v2160 = vrot.slane %v2159, 1
    %v2161 = vmax.f32 %v2159, %v2160
    %v2162 = vsub.f32 %v2151, %v2161
    %v2163 = vsub.f32 %v2152, %v2161
    %v2164 = vmul.f32 %v2162, 1.442695
    %v2165 = vpow.pop %v2164
    %v2166 = vmul.f32 %v2163, 1.442695
    %v2167 = vpow.pop %v2166
    %v2168 = vsel %vm489, %v2165, 0.0
    %v2169 = vsel %vm489, %v2167, 0.0
    %v2170 = vadd.f32 %v2168, %v2169
    %v2171 = vrot.slane %v2170, 4
    %v2172 = vadd.f32 %v2170, %v2171
    %v2173 = vrot.slane %v2172, 2
    %v2174 = vadd.f32 %v2172, %v2173
    %v2175 = vrot.slane %v2174, 1
    %v2176 = vadd.f32 %v2174, %v2175
    %v2177 = vrcp.pop %v2176
    %v2178 = vmul.f32 %v2165, %v2177
    %v2179 = vmul.f32 %v2167, %v2177
    %v2180 = vmul.f32 %v2178, %v1773
    %v2181 = vmul.f32 %v2179, %v1774
    %v2182 = vsub.f32 %v2149, %v1770
    %v2183 = vsub.f32 %v2150, %v1771
    %v2184 = vmul.f32 %v2182, 2.0
    %v2185 = vmul.f32 %v2183, 2.0
    %v2186 = vadd.f32 %v2184, %v1874
    %v2187 = vadd.f32 %v2185, %v1875
    %v2188 = vsub.f32 %v2180, %v1773
    %v2189 = vsub.f32 %v2181, %v1774
    %v2190 = vmul.f32 %v2188, 2.0
    %v2191 = vmul.f32 %v2189, 2.0
    %v2192 = vadd.f32 %v2190, %v1882
    %v2193 = vadd.f32 %v2191, %v1883
    %v2194 = vadd.f32 %v2186, %v2192
    %v2195 = vadd.f32 %v2187, %v2193
    %v2196 = vmul.f32 %v2186, %v115
    %v2197 = vmul.f32 %v2187, %v116
    %v2198 = vsub.f32 %v2194, %v2196
    %v2199 = vsub.f32 %v2195, %v2197
    %v2200 = vmul.f32 %v2198, 0.01
    %v2201 = vmul.f32 %v2199, 0.01
    %v2202 = vsub.f32 %v2149, %v2200
    %v2203 = vsub.f32 %v2150, %v2201
    %v2204 = vsel %vm489, %v2202, -inf
    %2205 = vmax.xlane.f32.xlu0 %v2204
    %v2206 = vpop.xlane.xlu0 %2205
    %v2207 = vsel %vm489, %v2203, -inf
    %2208 = vmax.xlane.f32.xlu0 %v2207
    %v2209 = vpop.xlane.xlu0 %2208
    %v2210 = vsub.f32 %v2202, %v2206
    %v2211 = vsub.f32 %v2203, %v2209
    %v2212 = vmul.f32 %v2210, 1.442695
    %v2213 = vpow.pop %v2212
    %v2214 = vmul.f32 %v2211, 1.442695
    %v2215 = vpow.pop %v2214
    %v2216 = vsel %vm489, %v2213, 0.0
    %2217 = vadd.xlane.f32.xlu0 %v2216
    %v2218 = vpop.xlane.xlu0 %2217
    %v2219 = vsel %vm489, %v2215, 0.0
    %2220 = vadd.xlane.f32.xlu0 %v2219
    %v2221 = vpop.xlane.xlu0 %2220
    %v2222 = vrcp.pop %v2218
    %v2223 = vrcp.pop %v2221
    %v2224 = vmul.f32 %v2213, %v2222
    %v2225 = vmul.f32 %v2215, %v2223
    %v2226 = vmul.f32 %v2224, %v1770
    %v2227 = vmul.f32 %v2225, %v1771
    %v2228 = vpack.c.bf16 %v1771, %v1770
    %v2229 = vpack.c.bf16 %v324, %v323
    %v2231 = vsel %vm489, %v2228, 0
    %2233 = vmatprep.subr.bf16.mxu0 0
    %2234 = vmatpush1.bf16.msra.mxu0 %v2229
    %2235 = vmatprep.subr.bf16.mxu0 0
    %2236 = vmatpush1.bf16.msra.mxu0 0
    %2237 = vmatprep.subr.bf16.mxu0 0
    %2238 = vmatpush1.bf16.msra.mxu0 0
    %2239 = vmatprep.subr.bf16.mxu0 0
    %2240 = vmatpush1.bf16.msra.mxu0 0
    %2241 = vmatprep.subr.bf16.mxu0 0
    %2242 = vmatpush1.bf16.msra.mxu0 0
    %2243 = vmatprep.subr.bf16.mxu0 0
    %2244 = vmatpush1.bf16.msra.mxu0 0
    %2245 = vmatprep.subr.bf16.mxu0 0
    %2246 = vmatpush1.bf16.msra.mxu0 0
    %2247 = vmatprep.subr.bf16.mxu0 0
    %2248 = vmatpush1.bf16.msra.mxu0 0
    %2249 = vmatprep.subr.bf16.mxu0 0
    %2250 = vmatpush1.bf16.msra.mxu0 0
    %2251 = vmatprep.subr.bf16.mxu0 0
    %2252 = vmatpush1.bf16.msra.mxu0 0
    %2253 = vmatprep.subr.bf16.mxu0 0
    %2254 = vmatpush1.bf16.msra.mxu0 0
    %2255 = vmatprep.subr.bf16.mxu0 0
    %2256 = vmatpush1.bf16.msra.mxu0 0
    %2257 = vmatprep.subr.bf16.mxu0 0
    %2258 = vmatpush1.bf16.msra.mxu0 0
    %2259 = vmatprep.subr.bf16.mxu0 0
    %2260 = vmatpush1.bf16.msra.mxu0 0
    %2261 = vmatprep.subr.bf16.mxu0 0
    %2262 = vmatpush1.bf16.msra.mxu0 0
    %2263 = vmatprep.subr.bf16.mxu0 0
    %2264 = vmatpush1.bf16.msra.mxu0 0
    %2265 = vmatprep.mubr.bf16.mxu0 0
    %2266 = vmatmul.mubr.bf16.gmra.mrb[0].mxu0 %v2231
    %v2267 = vpop.f32.mrb[0].mxu0
    %v2268 = vadd.f32 0.0, %v2267
    %v2269 = vpop.f32.mrb[0].mxu0
    %v2270 = vpop.f32.mrb[0].mxu0
    %v2271 = vadd.f32 0.0, %v2270
    %v2272 = vpop.f32.mrb[0].mxu0
    %2273 = vdwg.mxu0
    %v2274 = vmul.f32 %v2268, %v323
    %v2275 = vmul.f32 %v2271, %v324
    %v2276 = vsel %vm280, %v2274, 0.0
    %v2277 = vsel %vm280, %v2275, 0.0
    %v2278 = vadd.f32 %v2276, %v2277
    %2279 = vadd.xlane.f32.xlu0 %v2278
    %v2280 = vpop.xlane.xlu0 %2279
    %v2281 = vrot.slane %v2280, 4
    %v2282 = vadd.f32 %v2280, %v2281
    %v2283 = vrot.slane %v2282, 2
    %v2284 = vadd.f32 %v2282, %v2283
    %v2285 = vrot.slane %v2284, 1
    %v2286 = vadd.f32 %v2284, %v2285
    %s2287 = vtos %v2286
    %v2288 = vstv %s2287
    %v2289 = vmul.f32 %v323, %v323
    %v2290 = vmul.f32 %v324, %v324
    %v2291 = vsel %vm280, %v2289, 0.0
    %2292 = vadd.xlane.f32.xlu0 %v2291
    %v2293 = vpop.xlane.xlu0 %2292
    %v2294 = vsel %vm280, %v2290, 0.0
    %2295 = vadd.xlane.f32.xlu0 %v2294
    %v2296 = vpop.xlane.xlu0 %2295
    %v2297 = vmul.f32 %v1800, %v2293
    %v2298 = vmul.f32 %v1803, %v2296
    %v2299 = vsel %vm516, %v2297, 0.0
    %v2300 = vsel %vm516, %v2298, 0.0
    %v2301 = vadd.f32 %v2299, %v2300
    %2302 = vadd.xlane.f32.xlu0 %v2301
    %v2303 = vpop.xlane.xlu0 %2302
    %v2304 = vrot.slane %v2303, 4
    %v2305 = vadd.f32 %v2303, %v2304
    %v2306 = vrot.slane %v2305, 2
    %v2307 = vadd.f32 %v2305, %v2306
    %v2308 = vrot.slane %v2307, 1
    %v2309 = vadd.f32 %v2307, %v2308
    %s2310 = vtos %v2309
    %v2311 = vstv %s2310
    %v2312 = vrcp.pop %v2311
    %v2313 = vmul.f32 %v2288, %v2312
    %v2314 = vsub.f32 %v1477, %v2313
    %2315 = vxpose.xlu0.c.b16.start [1/8] %v2229, 128
    %2316 = vxpose.xlu0.c.b16.cont [2/8] 0, 128
    %2317 = vxpose.xlu0.c.b16.cont [3/8] 0, 128
    %2318 = vxpose.xlu0.c.b16.cont [4/8] 0, 128
    %2319 = vxpose.xlu0.c.b16.cont [5/8] 0, 128
    %2320 = vxpose.xlu0.c.b16.cont [6/8] 0, 128
    %2321 = vxpose.xlu0.c.b16.cont [7/8] 0, 128
    %2322 = vxpose.xlu0.c.b16.end [8/8] 0, 128
    %v2323 = vpop.trf.xlu0
    %v2324 = vpop.trf.xlu0
    %v2325 = vpop.trf.xlu0
    %v2326 = vpop.trf.xlu0
    %v2327 = vpop.trf.xlu0
    %v2328 = vpop.trf.xlu0
    %v2329 = vpop.trf.xlu0
    %v2330 = vpop.trf.xlu0
    %v2332 = vsel %vm489, %v2323, 0
    %2334 = vmatprep.subr.bf16.mxu0 0
    %2335 = vmatpush1.bf16.msra.mxu0 %v2229
    %2336 = vmatprep.subr.bf16.mxu0 0
    %2337 = vmatpush1.bf16.msra.mxu0 0
    %2338 = vmatprep.subr.bf16.mxu0 0
    %2339 = vmatpush1.bf16.msra.mxu0 0
    %2340 = vmatprep.subr.bf16.mxu0 0
    %2341 = vmatpush1.bf16.msra.mxu0 0
    %2342 = vmatprep.subr.bf16.mxu0 0
    %2343 = vmatpush1.bf16.msra.mxu0 0
    %2344 = vmatprep.subr.bf16.mxu0 0
    %2345 = vmatpush1.bf16.msra.mxu0 0
    %2346 = vmatprep.subr.bf16.mxu0 0
    %2347 = vmatpush1.bf16.msra.mxu0 0
    %2348 = vmatprep.subr.bf16.mxu0 0
    %2349 = vmatpush1.bf16.msra.mxu0 0
    %2350 = vmatprep.subr.bf16.mxu0 0
    %2351 = vmatpush1.bf16.msra.mxu0 0
    %2352 = vmatprep.subr.bf16.mxu0 0
    %2353 = vmatpush1.bf16.msra.mxu0 0
    %2354 = vmatprep.subr.bf16.mxu0 0
    %2355 = vmatpush1.bf16.msra.mxu0 0
    %2356 = vmatprep.subr.bf16.mxu0 0
    %2357 = vmatpush1.bf16.msra.mxu0 0
    %2358 = vmatprep.subr.bf16.mxu0 0
    %2359 = vmatpush1.bf16.msra.mxu0 0
    %2360 = vmatprep.subr.bf16.mxu0 0
    %2361 = vmatpush1.bf16.msra.mxu0 0
    %2362 = vmatprep.subr.bf16.mxu0 0
    %2363 = vmatpush1.bf16.msra.mxu0 0
    %2364 = vmatprep.subr.bf16.mxu0 0
    %2365 = vmatpush1.bf16.msra.mxu0 0
    %2366 = vmatprep.mubr.bf16.mxu0 0
    %2367 = vmatmul.mubr.bf16.gmra.mrb[0].mxu0 %v2332
    %v2368 = vpop.f32.mrb[0].mxu0
    %v2369 = vadd.f32 0.0, %v2368
    %v2370 = vpop.f32.mrb[0].mxu0
    %v2371 = vpop.f32.mrb[0].mxu0
    %v2372 = vpop.f32.mrb[0].mxu0
    %2373 = vdwg.mxu0
    %v2374 = vadd.f32 %v2291, %v2294
    %2375 = vadd.xlane.f32.xlu0 %v2374
    %v2376 = vpop.xlane.xlu0 %2375
    %v2377 = vrot.slane %v2376, 4
    %v2378 = vadd.f32 %v2376, %v2377
    %v2379 = vrot.slane %v2378, 2
    %v2380 = vadd.f32 %v2378, %v2379
    %v2381 = vrot.slane %v2380, 1
    %v2382 = vadd.f32 %v2380, %v2381
    %s2383 = vtos %v2382
    %v2384 = vstv %s2383
    %v2385 = vmul.f32 %v2384, 1.4142135
    %v2386 = vmul.f32 %v2369, %v2369
    %v2387 = vsel %vm1098, %v2386, 0.0
    %2388 = vadd.xlane.f32.xlu0 %v2387
    %v2389 = vpop.xlane.xlu0 %2388
    %v2390 = vrot.slane %v2389, 4
    %v2391 = vadd.f32 %v2389, %v2390
    %v2392 = vrot.slane %v2391, 2
    %v2393 = vadd.f32 %v2391, %v2392
    %v2394 = vrot.slane %v2393, 1
    %v2395 = vadd.f32 %v2393, %v2394
    %s2396 = vtos %v2395
    %v2397 = vstv %s2396
    %v2398 = vrsqrt.pop %v2397
    %v2399 = vmul.f32 %v2385, %v2398
    %v2400 = vsub.f32 2.0, %v2399
    %v2401 = vmax.f32 %v2400, 0.0
    %v2402 = vrsqrt.pop %v2401
    %v2403 = vmul.f32 %v2401, %v2402
    %vm2404 = vcmp.eq.f32.partialorder %v2401, inf
    %v2405 = vsel %vm2404, %v2401, %v2403
    %vm2406 = vcmp.eq.f32.partialorder %v2401, 0.0
    %v2407 = vand.u32 %v2401, 2147483648
    %v2408 = vsel %vm2406, %v2407, %v2405
    %v2409 = vadd.f32 %v1563, %v2408
    %v2410 = vpack.c.bf16 %v2227, %v2226
    %v2411 = vpack.c.bf16 %v387, %v384
    %v2413 = vsel %vm489, %v2410, 0
    %2415 = vmatprep.subr.bf16.mxu0 0
    %2416 = vmatpush1.bf16.msra.mxu0 %v2411
    %2417 = vmatprep.subr.bf16.mxu0 0
    %2418 = vmatpush1.bf16.msra.mxu0 0
    %2419 = vmatprep.subr.bf16.mxu0 0
    %2420 = vmatpush1.bf16.msra.mxu0 0
    %2421 = vmatprep.subr.bf16.mxu0 0
    %2422 = vmatpush1.bf16.msra.mxu0 0
    %2423 = vmatprep.subr.bf16.mxu0 0
    %2424 = vmatpush1.bf16.msra.mxu0 0
    %2425 = vmatprep.subr.bf16.mxu0 0
    %2426 = vmatpush1.bf16.msra.mxu0 0
    %2427 = vmatprep.subr.bf16.mxu0 0
    %2428 = vmatpush1.bf16.msra.mxu0 0
    %2429 = vmatprep.subr.bf16.mxu0 0
    %2430 = vmatpush1.bf16.msra.mxu0 0
    %2431 = vmatprep.subr.bf16.mxu0 0
    %2432 = vmatpush1.bf16.msra.mxu0 0
    %2433 = vmatprep.subr.bf16.mxu0 0
    %2434 = vmatpush1.bf16.msra.mxu0 0
    %2435 = vmatprep.subr.bf16.mxu0 0
    %2436 = vmatpush1.bf16.msra.mxu0 0
    %2437 = vmatprep.subr.bf16.mxu0 0
    %2438 = vmatpush1.bf16.msra.mxu0 0
    %2439 = vmatprep.subr.bf16.mxu0 0
    %2440 = vmatpush1.bf16.msra.mxu0 0
    %2441 = vmatprep.subr.bf16.mxu0 0
    %2442 = vmatpush1.bf16.msra.mxu0 0
    %2443 = vmatprep.subr.bf16.mxu0 0
    %2444 = vmatpush1.bf16.msra.mxu0 0
    %2445 = vmatprep.subr.bf16.mxu0 0
    %2446 = vmatpush1.bf16.msra.mxu0 0
    %2447 = vmatprep.mubr.bf16.mxu0 0
    %2448 = vmatmul.mubr.bf16.gmra.mrb[0].mxu0 %v2413
    %v2449 = vpop.f32.mrb[0].mxu0
    %v2450 = vadd.f32 %v449, %v2449
    %v2451 = vpop.f32.mrb[0].mxu0
    %v2452 = vpop.f32.mrb[0].mxu0
    %v2453 = vadd.f32 %v452, %v2452
    %v2454 = vpop.f32.mrb[0].mxu0
    %2455 = vdwg.mxu0
    %v2456 = vadd.f32 %v2450, %v1173
    %v2457 = vadd.f32 %v2453, %v1173
    %v2458 = vpack.c.bf16 %v2457, %v2456
    %v2460 = vsel %vm224, %v2458, 0
    %2462 = vmatprep.subr.bf16.mxu0 0
    %2463 = vmatpush1.bf16.msra.mxu0 %v1197
    %2464 = vmatprep.subr.bf16.mxu0 0
    %2465 = vmatpush1.bf16.msra.mxu0 %v1198
    %2466 = vmatprep.subr.bf16.mxu0 0
    %2467 = vmatpush1.bf16.msra.mxu0 0
    %2468 = vmatprep.subr.bf16.mxu0 0
    %2469 = vmatpush1.bf16.msra.mxu0 0
    %2470 = vmatprep.subr.bf16.mxu0 0
    %2471 = vmatpush1.bf16.msra.mxu0 0
    %2472 = vmatprep.subr.bf16.mxu0 0
    %2473 = vmatpush1.bf16.msra.mxu0 0
    %2474 = vmatprep.subr.bf16.mxu0 0
    %2475 = vmatpush1.bf16.msra.mxu0 0
    %2476 = vmatprep.subr.bf16.mxu0 0
    %2477 = vmatpush1.bf16.msra.mxu0 0
    %2478 = vmatprep.subr.bf16.mxu0 0
    %2479 = vmatpush1.bf16.msra.mxu0 0
    %2480 = vmatprep.subr.bf16.mxu0 0
    %2481 = vmatpush1.bf16.msra.mxu0 0
    %2482 = vmatprep.subr.bf16.mxu0 0
    %2483 = vmatpush1.bf16.msra.mxu0 0
    %2484 = vmatprep.subr.bf16.mxu0 0
    %2485 = vmatpush1.bf16.msra.mxu0 0
    %2486 = vmatprep.subr.bf16.mxu0 0
    %2487 = vmatpush1.bf16.msra.mxu0 0
    %2488 = vmatprep.subr.bf16.mxu0 0
    %2489 = vmatpush1.bf16.msra.mxu0 0
    %2490 = vmatprep.subr.bf16.mxu0 0
    %2491 = vmatpush1.bf16.msra.mxu0 0
    %2492 = vmatprep.subr.bf16.mxu0 0
    %2493 = vmatpush1.bf16.msra.mxu0 0
    %2494 = vmatprep.mubr.bf16.mxu0 0
    %2495 = vmatmul.mubr.bf16.gmra.mrb[0].mxu0 %v2460
    %v2496 = vpop.f32.mrb[0].mxu0
    %v2497 = vadd.f32 %v1187, %v2496
    %v2498 = vpop.f32.mrb[0].mxu0
    %v2499 = vpop.f32.mrb[0].mxu0
    %v2500 = vadd.f32 %v1187, %v2499
    %v2501 = vpop.f32.mrb[0].mxu0
    %2502 = vdwg.mxu0
    %v2503 = vsel %vm489, %v2497, -inf
    %2504 = vmax.xlane.f32.xlu0 %v2503
    %v2505 = vpop.xlane.xlu0 %2504
    %v2506 = vsel %vm489, %v2500, -inf
    %2507 = vmax.xlane.f32.xlu0 %v2506
    %v2508 = vpop.xlane.xlu0 %2507
    %v2509 = vsub.f32 %v2497, %v2505
    %v2510 = vsub.f32 %v2500, %v2508
    %v2511 = vmul.f32 %v2509, 1.442695
    %v2512 = vpow.pop %v2511
    %v2513 = vmul.f32 %v2510, 1.442695
    %v2514 = vpow.pop %v2513
    %v2515 = vsel %vm489, %v2512, 0.0
    %2516 = vadd.xlane.f32.xlu0 %v2515
    %v2517 = vpop.xlane.xlu0 %2516
    %v2518 = vsel %vm489, %v2514, 0.0
    %2519 = vadd.xlane.f32.xlu0 %v2518
    %v2520 = vpop.xlane.xlu0 %2519
    %v2521 = vrcp.pop %v2517
    %v2522 = vrcp.pop %v2520
    %v2523 = vmul.f32 %v2512, %v2521
    %v2524 = vmul.f32 %v2514, %v2522
    %2526 = vset.pattern.permute.xlu0 0
    %2527 = vperm.xlu0 %2526, %v1776
    %v2528 = vpop.permute.xlu0 %2527
    %2531 = vset.pattern.permute.xlu0 0
    %2532 = vperm.xlu0 %2531, %v1777
    %v2533 = vpop.permute.xlu0 %2532
    %v2535 = vmul.f32 %v2456, %v2528
    %v2536 = vmul.f32 %v2457, %v2533
    %v2537 = vmul.f32 %v2523, %v2528
    %v2538 = vmul.f32 %v2524, %v2533
    %v2539 = vpack.c.bf16 %v2538, %v2537
    %v2540 = vpack.c.bf16 %v2536, %v2535
    %2541 = vxpose.xlu0.c.b16.start [1/8] %v2539, 128
    %2542 = vxpose.xlu0.c.b16.cont [2/8] 0, 128
    %2543 = vxpose.xlu0.c.b16.cont [3/8] 0, 128
    %2544 = vxpose.xlu0.c.b16.cont [4/8] 0, 128
    %2545 = vxpose.xlu0.c.b16.cont [5/8] 0, 128
    %2546 = vxpose.xlu0.c.b16.cont [6/8] 0, 128
    %2547 = vxpose.xlu0.c.b16.cont [7/8] 0, 128
    %2548 = vxpose.xlu0.c.b16.end [8/8] 0, 128
    %v2549 = vpop.trf.xlu0
    %v2550 = vpop.trf.xlu0
    %v2551 = vpop.trf.xlu0
    %v2552 = vpop.trf.xlu0
    %v2553 = vpop.trf.xlu0
    %v2554 = vpop.trf.xlu0
    %v2555 = vpop.trf.xlu0
    %v2556 = vpop.trf.xlu0
    %v2558 = vsel %vm489, %v2549, 0
    %2560 = vmatprep.subr.bf16.mxu0 0
    %2561 = vmatpush1.bf16.msra.mxu0 %v2540
    %2562 = vmatprep.subr.bf16.mxu0 0
    %2563 = vmatpush1.bf16.msra.mxu0 0
    %2564 = vmatprep.subr.bf16.mxu0 0
    %2565 = vmatpush1.bf16.msra.mxu0 0
    %2566 = vmatprep.subr.bf16.mxu0 0
    %2567 = vmatpush1.bf16.msra.mxu0 0
    %2568 = vmatprep.subr.bf16.mxu0 0
    %2569 = vmatpush1.bf16.msra.mxu0 0
    %2570 = vmatprep.subr.bf16.mxu0 0
    %2571 = vmatpush1.bf16.msra.mxu0 0
    %2572 = vmatprep.subr.bf16.mxu0 0
    %2573 = vmatpush1.bf16.msra.mxu0 0
    %2574 = vmatprep.subr.bf16.mxu0 0
    %2575 = vmatpush1.bf16.msra.mxu0 0
    %2576 = vmatprep.subr.bf16.mxu0 0
    %2577 = vmatpush1.bf16.msra.mxu0 0
    %2578 = vmatprep.subr.bf16.mxu0 0
    %2579 = vmatpush1.bf16.msra.mxu0 0
    %2580 = vmatprep.subr.bf16.mxu0 0
    %2581 = vmatpush1.bf16.msra.mxu0 0
    %2582 = vmatprep.subr.bf16.mxu0 0
    %2583 = vmatpush1.bf16.msra.mxu0 0
    %2584 = vmatprep.subr.bf16.mxu0 0
    %2585 = vmatpush1.bf16.msra.mxu0 0
    %2586 = vmatprep.subr.bf16.mxu0 0
    %2587 = vmatpush1.bf16.msra.mxu0 0
    %2588 = vmatprep.subr.bf16.mxu0 0
    %2589 = vmatpush1.bf16.msra.mxu0 0
    %2590 = vmatprep.subr.bf16.mxu0 0
    %2591 = vmatpush1.bf16.msra.mxu0 0
    %2592 = vmatprep.mubr.bf16.mxu0 0
    %2593 = vmatmul.mubr.bf16.gmra.mrb[0].mxu0 %v2558
    %v2594 = vpop.f32.mrb[0].mxu0
    %v2595 = vadd.f32 0.0, %v2594
    %v2596 = vpop.f32.mrb[0].mxu0
    %v2597 = vpop.f32.mrb[0].mxu0
    %v2598 = vadd.f32 0.0, %v2597
    %v2599 = vpop.f32.mrb[0].mxu0
    %2600 = vdwg.mxu0
    %2601 = vmatprep.subr.bf16.mxu0 0
    %2602 = vmatpush1.bf16.msra.mxu0 %v2410
    %2603 = vmatprep.subr.bf16.mxu0 0
    %2604 = vmatpush1.bf16.msra.mxu0 0
    %2605 = vmatprep.subr.bf16.mxu0 0
    %2606 = vmatpush1.bf16.msra.mxu0 0
    %2607 = vmatprep.subr.bf16.mxu0 0
    %2608 = vmatpush1.bf16.msra.mxu0 0
    %2609 = vmatprep.subr.bf16.mxu0 0
    %2610 = vmatpush1.bf16.msra.mxu0 0
    %2611 = vmatprep.subr.bf16.mxu0 0
    %2612 = vmatpush1.bf16.msra.mxu0 0
    %2613 = vmatprep.subr.bf16.mxu0 0
    %2614 = vmatpush1.bf16.msra.mxu0 0
    %2615 = vmatprep.subr.bf16.mxu0 0
    %2616 = vmatpush1.bf16.msra.mxu0 0
    %2617 = vmatprep.subr.bf16.mxu0 0
    %2618 = vmatpush1.bf16.msra.mxu0 0
    %2619 = vmatprep.subr.bf16.mxu0 0
    %2620 = vmatpush1.bf16.msra.mxu0 0
    %2621 = vmatprep.subr.bf16.mxu0 0
    %2622 = vmatpush1.bf16.msra.mxu0 0
    %2623 = vmatprep.subr.bf16.mxu0 0
    %2624 = vmatpush1.bf16.msra.mxu0 0
    %2625 = vmatprep.subr.bf16.mxu0 0
    %2626 = vmatpush1.bf16.msra.mxu0 0
    %2627 = vmatprep.subr.bf16.mxu0 0
    %2628 = vmatpush1.bf16.msra.mxu0 0
    %2629 = vmatprep.subr.bf16.mxu0 0
    %2630 = vmatpush1.bf16.msra.mxu0 0
    %2631 = vmatprep.subr.bf16.mxu0 0
    %2632 = vmatpush1.bf16.msra.mxu0 0
    %2633 = vmatprep.mubr.bf16.mxu0 0
    %2634 = vmatmul.mubr.bf16.gmra.mrb[0].mxu0 %v2558
    %v2635 = vpop.f32.mrb[0].mxu0
    %v2636 = vadd.f32 0.0, %v2635
    %v2637 = vpop.f32.mrb[0].mxu0
    %v2638 = vpop.f32.mrb[0].mxu0
    %v2639 = vadd.f32 0.0, %v2638
    %v2640 = vpop.f32.mrb[0].mxu0
    %2641 = vdwg.mxu0
    %v2642 = vpack.c.bf16 %v2639, %v2636
    %v2644 = vsel %vm489, %v2642, 0
    %2646 = vmatprep.subr.bf16.mxu0 0
    %2647 = vmatpush1.bf16.msra.mxu0 %v2539
    %2648 = vmatprep.subr.bf16.mxu0 0
    %2649 = vmatpush1.bf16.msra.mxu0 0
    %2650 = vmatprep.subr.bf16.mxu0 0
    %2651 = vmatpush1.bf16.msra.mxu0 0
    %2652 = vmatprep.subr.bf16.mxu0 0
    %2653 = vmatpush1.bf16.msra.mxu0 0
    %2654 = vmatprep.subr.bf16.mxu0 0
    %2655 = vmatpush1.bf16.msra.mxu0 0
    %2656 = vmatprep.subr.bf16.mxu0 0
    %2657 = vmatpush1.bf16.msra.mxu0 0
    %2658 = vmatprep.subr.bf16.mxu0 0
    %2659 = vmatpush1.bf16.msra.mxu0 0
    %2660 = vmatprep.subr.bf16.mxu0 0
    %2661 = vmatpush1.bf16.msra.mxu0 0
    %2662 = vmatprep.subr.bf16.mxu0 0
    %2663 = vmatpush1.bf16.msra.mxu0 0
    %2664 = vmatprep.subr.bf16.mxu0 0
    %2665 = vmatpush1.bf16.msra.mxu0 0
    %2666 = vmatprep.subr.bf16.mxu0 0
    %2667 = vmatpush1.bf16.msra.mxu0 0
    %2668 = vmatprep.subr.bf16.mxu0 0
    %2669 = vmatpush1.bf16.msra.mxu0 0
    %2670 = vmatprep.subr.bf16.mxu0 0
    %2671 = vmatpush1.bf16.msra.mxu0 0
    %2672 = vmatprep.subr.bf16.mxu0 0
    %2673 = vmatpush1.bf16.msra.mxu0 0
    %2674 = vmatprep.subr.bf16.mxu0 0
    %2675 = vmatpush1.bf16.msra.mxu0 0
    %2676 = vmatprep.subr.bf16.mxu0 0
    %2677 = vmatpush1.bf16.msra.mxu0 0
    %2678 = vmatprep.mubr.bf16.mxu0 0
    %2679 = vmatmul.mubr.bf16.gmra.mrb[0].mxu0 %v2644
    %v2680 = vpop.f32.mrb[0].mxu0
    %v2681 = vadd.f32 0.0, %v2680
    %v2682 = vpop.f32.mrb[0].mxu0
    %v2683 = vpop.f32.mrb[0].mxu0
    %v2684 = vadd.f32 0.0, %v2683
    %v2685 = vpop.f32.mrb[0].mxu0
    %2686 = vdwg.mxu0
    %v2687 = vmul.f32 %v2681, %v115
    %v2688 = vmul.f32 %v2684, %v116
    %v2689 = vsel %vm489, %v2687, 0.0
    %v2690 = vsel %vm489, %v2688, 0.0
    %v2691 = vadd.f32 %v2689, %v2690
    %2692 = vadd.xlane.f32.xlu0 %v2691
    %v2693 = vpop.xlane.xlu0 %2692
    %v2694 = vrot.slane %v2693, 4
    %v2695 = vadd.f32 %v2693, %v2694
    %v2696 = vrot.slane %v2695, 2
    %v2697 = vadd.f32 %v2695, %v2696
    %v2698 = vrot.slane %v2697, 1
    %v2699 = vadd.f32 %v2697, %v2698
    %s2700 = vtos %v2699
    %v2701 = vstv %s2700
    %v2702 = vsel %vm489, %v2226, 0.0
    %2703 = vadd.xlane.f32.xlu0 %v2702
    %v2704 = vpop.xlane.xlu0 %2703
    %v2705 = vsel %vm489, %v2227, 0.0
    %2706 = vadd.xlane.f32.xlu0 %v2705
    %v2707 = vpop.xlane.xlu0 %2706
    %v2708 = vadd.f32 %v2704, 1e-15
    %v2709 = vadd.f32 %v2707, 1e-15
    %v2710 = vmul.f32 %v2537, %v2537
    %v2711 = vmul.f32 %v2538, %v2538
    %v2712 = vsel %vm489, %v2710, 0.0
    %2713 = vadd.xlane.f32.xlu0 %v2712
    %v2714 = vpop.xlane.xlu0 %2713
    %v2715 = vsel %vm489, %v2711, 0.0
    %2716 = vadd.xlane.f32.xlu0 %v2715
    %v2717 = vpop.xlane.xlu0 %2716
    %v2718 = vmul.f32 %v2708, %v2714
    %v2719 = vmul.f32 %v2709, %v2717
    %v2720 = vsel %vm516, %v2718, 0.0
    %v2721 = vsel %vm516, %v2719, 0.0
    %v2722 = vadd.f32 %v2720, %v2721
    %2723 = vadd.xlane.f32.xlu0 %v2722
    %v2724 = vpop.xlane.xlu0 %2723
    %v2725 = vrot.slane %v2724, 4
    %v2726 = vadd.f32 %v2724, %v2725
    %v2727 = vrot.slane %v2726, 2
    %v2728 = vadd.f32 %v2726, %v2727
    %v2729 = vrot.slane %v2728, 1
    %v2730 = vadd.f32 %v2728, %v2729
    %s2731 = vtos %v2730
    %v2732 = vstv %s2731
    %v2733 = vrcp.pop %v2732
    %v2734 = vmul.f32 %v2701, %v2733
    %v2735 = vsub.f32 %v2314, %v2734
    %2736 = vmatprep.subr.bf16.mxu0 0
    %2737 = vmatpush1.bf16.msra.mxu0 %v2539
    %2738 = vmatprep.subr.bf16.mxu0 0
    %2739 = vmatpush1.bf16.msra.mxu0 0
    %2740 = vmatprep.subr.bf16.mxu0 0
    %2741 = vmatpush1.bf16.msra.mxu0 0
    %2742 = vmatprep.subr.bf16.mxu0 0
    %2743 = vmatpush1.bf16.msra.mxu0 0
    %2744 = vmatprep.subr.bf16.mxu0 0
    %2745 = vmatpush1.bf16.msra.mxu0 0
    %2746 = vmatprep.subr.bf16.mxu0 0
    %2747 = vmatpush1.bf16.msra.mxu0 0
    %2748 = vmatprep.subr.bf16.mxu0 0
    %2749 = vmatpush1.bf16.msra.mxu0 0
    %2750 = vmatprep.subr.bf16.mxu0 0
    %2751 = vmatpush1.bf16.msra.mxu0 0
    %2752 = vmatprep.subr.bf16.mxu0 0
    %2753 = vmatpush1.bf16.msra.mxu0 0
    %2754 = vmatprep.subr.bf16.mxu0 0
    %2755 = vmatpush1.bf16.msra.mxu0 0
    %2756 = vmatprep.subr.bf16.mxu0 0
    %2757 = vmatpush1.bf16.msra.mxu0 0
    %2758 = vmatprep.subr.bf16.mxu0 0
    %2759 = vmatpush1.bf16.msra.mxu0 0
    %2760 = vmatprep.subr.bf16.mxu0 0
    %2761 = vmatpush1.bf16.msra.mxu0 0
    %2762 = vmatprep.subr.bf16.mxu0 0
    %2763 = vmatpush1.bf16.msra.mxu0 0
    %2764 = vmatprep.subr.bf16.mxu0 0
    %2765 = vmatpush1.bf16.msra.mxu0 0
    %2766 = vmatprep.subr.bf16.mxu0 0
    %2767 = vmatpush1.bf16.msra.mxu0 0
    %2768 = vmatprep.mubr.bf16.mxu0 0
    %2769 = vmatmul.mubr.bf16.gmra.mrb[0].mxu0 %v2558
    %v2770 = vpop.f32.mrb[0].mxu0
    %v2771 = vadd.f32 0.0, %v2770
    %v2772 = vpop.f32.mrb[0].mxu0
    %v2773 = vpop.f32.mrb[0].mxu0
    %v2774 = vadd.f32 0.0, %v2773
    %v2775 = vpop.f32.mrb[0].mxu0
    %2776 = vdwg.mxu0
    %v2777 = vmul.f32 %v2771, %v2771
    %v2778 = vmul.f32 %v2774, %v2774
    %v2779 = vsel %vm489, %v2777, 0.0
    %v2780 = vsel %vm489, %v2778, 0.0
    %v2781 = vadd.f32 %v2779, %v2780
    %2782 = vadd.xlane.f32.xlu0 %v2781
    %v2783 = vpop.xlane.xlu0 %2782
    %v2784 = vrot.slane %v2783, 4
    %v2785 = vadd.f32 %v2783, %v2784
    %v2786 = vrot.slane %v2785, 2
    %v2787 = vadd.f32 %v2785, %v2786
    %v2788 = vrot.slane %v2787, 1
    %v2789 = vadd.f32 %v2787, %v2788
    %s2790 = vtos %v2789
    %v2791 = vstv %s2790
    %v2792 = vrsqrt.pop %v2791
    %v2793 = vmul.f32 %v2771, %v2792
    %v2794 = vmul.f32 %v2774, %v2792
    %v2795 = vsub.f32 %v2793, %v1537
    %v2796 = vsub.f32 %v2794, %v1538
    %v2797 = vmul.f32 %v2795, %v2795
    %v2798 = vmul.f32 %v2796, %v2796
    %v2799 = vsel %vm489, %v2797, 0.0
    %v2800 = vsel %vm489, %v2798, 0.0
    %v2801 = vadd.f32 %v2799, %v2800
    %2802 = vadd.xlane.f32.xlu0 %v2801
    %v2803 = vpop.xlane.xlu0 %2802
    %v2804 = vrot.slane %v2803, 4
    %v2805 = vadd.f32 %v2803, %v2804
    %v2806 = vrot.slane %v2805, 2
    %v2807 = vadd.f32 %v2805, %v2806
    %v2808 = vrot.slane %v2807, 1
    %v2809 = vadd.f32 %v2807, %v2808
    %s2810 = vtos %v2809
    %v2811 = vstv %s2810
    %v2812 = vrsqrt.pop %v2811
    %v2813 = vmul.f32 %v2811, %v2812
    %vm2814 = vcmp.eq.f32.partialorder %v2811, inf
    %v2815 = vsel %vm2814, %v2811, %v2813
    %vm2816 = vcmp.eq.f32.partialorder %v2811, 0.0
    %v2817 = vand.u32 %v2811, 2147483648
    %v2818 = vsel %vm2816, %v2817, %v2815
    %v2819 = vadd.f32 %v2409, %v2818
    %v2820 = vmul.f32 %v2681, %v1564
    %v2821 = vmul.f32 %v2684, %v1565
    %v2822 = vsel %vm489, %v2820, 0.0
    %2823 = vadd.xlane.f32.xlu0 %v2822
    %v2824 = vpop.xlane.xlu0 %2823
    %v2825 = vsel %vm489, %v2821, 0.0
    %2826 = vadd.xlane.f32.xlu0 %v2825
    %v2827 = vpop.xlane.xlu0 %2826
    %v2828 = vadd.f32 %v2824, 1e-15
    %v2829 = vadd.f32 %v2827, 1e-15
    %v2830 = vrsqrt.pop %v2828
    %v2831 = vrsqrt.pop %v2829
    %v2832 = vpack.c.bf16 %v2598, %v2595
    %v2834 = vsel %vm224, %v2832, 0
    %2836 = vmatprep.subr.bf16.mxu0 0
    %2837 = vmatpush1.bf16.msra.mxu0 %v1591
    %2838 = vmatprep.subr.bf16.mxu0 0
    %2839 = vmatpush1.bf16.msra.mxu0 %v1592
    %2840 = vmatprep.subr.bf16.mxu0 0
    %2841 = vmatpush1.bf16.msra.mxu0 0
    %2842 = vmatprep.subr.bf16.mxu0 0
    %2843 = vmatpush1.bf16.msra.mxu0 0
    %2844 = vmatprep.subr.bf16.mxu0 0
    %2845 = vmatpush1.bf16.msra.mxu0 0
    %2846 = vmatprep.subr.bf16.mxu0 0
    %2847 = vmatpush1.bf16.msra.mxu0 0
    %2848 = vmatprep.subr.bf16.mxu0 0
    %2849 = vmatpush1.bf16.msra.mxu0 0
    %2850 = vmatprep.subr.bf16.mxu0 0
    %2851 = vmatpush1.bf16.msra.mxu0 0
    %2852 = vmatprep.subr.bf16.mxu0 0
    %2853 = vmatpush1.bf16.msra.mxu0 0
    %2854 = vmatprep.subr.bf16.mxu0 0
    %2855 = vmatpush1.bf16.msra.mxu0 0
    %2856 = vmatprep.subr.bf16.mxu0 0
    %2857 = vmatpush1.bf16.msra.mxu0 0
    %2858 = vmatprep.subr.bf16.mxu0 0
    %2859 = vmatpush1.bf16.msra.mxu0 0
    %2860 = vmatprep.subr.bf16.mxu0 0
    %2861 = vmatpush1.bf16.msra.mxu0 0
    %2862 = vmatprep.subr.bf16.mxu0 0
    %2863 = vmatpush1.bf16.msra.mxu0 0
    %2864 = vmatprep.subr.bf16.mxu0 0
    %2865 = vmatpush1.bf16.msra.mxu0 0
    %2866 = vmatprep.subr.bf16.mxu0 0
    %2867 = vmatpush1.bf16.msra.mxu0 0
    %2868 = vmatprep.mubr.bf16.mxu0 0
    %2869 = vmatmul.mubr.bf16.gmra.mrb[0].mxu0 %v2834
    %v2870 = vpop.f32.mrb[0].mxu0
    %v2871 = vadd.f32 0.0, %v2870
    %v2872 = vpop.f32.mrb[0].mxu0
    %v2873 = vpop.f32.mrb[0].mxu0
    %v2874 = vadd.f32 0.0, %v2873
    %v2875 = vpop.f32.mrb[0].mxu0
    %2876 = vdwg.mxu0
    %2877 = vmatprep.subr.bf16.mxu0 0
    %2878 = vmatpush1.bf16.msra.mxu0 %v1651
    %2879 = vmatprep.subr.bf16.mxu0 0
    %2880 = vmatpush1.bf16.msra.mxu0 %v1652
    %2881 = vmatprep.subr.bf16.mxu0 0
    %2882 = vmatpush1.bf16.msra.mxu0 0
    %2883 = vmatprep.subr.bf16.mxu0 0
    %2884 = vmatpush1.bf16.msra.mxu0 0
    %2885 = vmatprep.subr.bf16.mxu0 0
    %2886 = vmatpush1.bf16.msra.mxu0 0
    %2887 = vmatprep.subr.bf16.mxu0 0
    %2888 = vmatpush1.bf16.msra.mxu0 0
    %2889 = vmatprep.subr.bf16.mxu0 0
    %2890 = vmatpush1.bf16.msra.mxu0 0
    %2891 = vmatprep.subr.bf16.mxu0 0
    %2892 = vmatpush1.bf16.msra.mxu0 0
    %2893 = vmatprep.subr.bf16.mxu0 0
    %2894 = vmatpush1.bf16.msra.mxu0 0
    %2895 = vmatprep.subr.bf16.mxu0 0
    %2896 = vmatpush1.bf16.msra.mxu0 0
    %2897 = vmatprep.subr.bf16.mxu0 0
    %2898 = vmatpush1.bf16.msra.mxu0 0
    %2899 = vmatprep.subr.bf16.mxu0 0
    %2900 = vmatpush1.bf16.msra.mxu0 0
    %2901 = vmatprep.subr.bf16.mxu0 0
    %2902 = vmatpush1.bf16.msra.mxu0 0
    %2903 = vmatprep.subr.bf16.mxu0 0
    %2904 = vmatpush1.bf16.msra.mxu0 0
    %2905 = vmatprep.subr.bf16.mxu0 0
    %2906 = vmatpush1.bf16.msra.mxu0 0
    %2907 = vmatprep.subr.bf16.mxu0 0
    %2908 = vmatpush1.bf16.msra.mxu0 0
    %2909 = vmatprep.mubr.bf16.mxu0 0
    %2910 = vmatmul.mubr.bf16.gmra.mrb[0].mxu0 %v2834
    %v2911 = vpop.f32.mrb[0].mxu0
    %v2912 = vadd.f32 0.0, %v2911
    %v2913 = vpop.f32.mrb[0].mxu0
    %v2914 = vpop.f32.mrb[0].mxu0
    %v2915 = vadd.f32 0.0, %v2914
    %v2916 = vpop.f32.mrb[0].mxu0
    %2917 = vdwg.mxu0
    %v2918 = vmul.f32 %v2820, %v2830
    %v2919 = vmul.f32 %v2821, %v2831
    %v2920 = vmul.f32 %v2871, %v2830
    %v2921 = vmul.f32 %v2874, %v2831
    %v2922 = vpack.c.bf16 %v2919, %v2918
    %v2923 = vpack.c.bf16 %v2921, %v2920
    %v2925 = vsel %vm489, %v2922, 0
    %2927 = vmatprep.subr.bf16.mxu0 0
    %2928 = vmatpush1.bf16.msra.mxu0 %v2923
    %2929 = vmatprep.subr.bf16.mxu0 0
    %2930 = vmatpush1.bf16.msra.mxu0 0
    %2931 = vmatprep.subr.bf16.mxu0 0
    %2932 = vmatpush1.bf16.msra.mxu0 0
    %2933 = vmatprep.subr.bf16.mxu0 0
    %2934 = vmatpush1.bf16.msra.mxu0 0
    %2935 = vmatprep.subr.bf16.mxu0 0
    %2936 = vmatpush1.bf16.msra.mxu0 0
    %2937 = vmatprep.subr.bf16.mxu0 0
    %2938 = vmatpush1.bf16.msra.mxu0 0
    %2939 = vmatprep.subr.bf16.mxu0 0
    %2940 = vmatpush1.bf16.msra.mxu0 0
    %2941 = vmatprep.subr.bf16.mxu0 0
    %2942 = vmatpush1.bf16.msra.mxu0 0
    %2943 = vmatprep.subr.bf16.mxu0 0
    %2944 = vmatpush1.bf16.msra.mxu0 0
    %2945 = vmatprep.subr.bf16.mxu0 0
    %2946 = vmatpush1.bf16.msra.mxu0 0
    %2947 = vmatprep.subr.bf16.mxu0 0
    %2948 = vmatpush1.bf16.msra.mxu0 0
    %2949 = vmatprep.subr.bf16.mxu0 0
    %2950 = vmatpush1.bf16.msra.mxu0 0
    %2951 = vmatprep.subr.bf16.mxu0 0
    %2952 = vmatpush1.bf16.msra.mxu0 0
    %2953 = vmatprep.subr.bf16.mxu0 0
    %2954 = vmatpush1.bf16.msra.mxu0 0
    %2955 = vmatprep.subr.bf16.mxu0 0
    %2956 = vmatpush1.bf16.msra.mxu0 0
    %2957 = vmatprep.subr.bf16.mxu0 0
    %2958 = vmatpush1.bf16.msra.mxu0 0
    %2959 = vmatprep.mubr.bf16.mxu0 0
    %2960 = vmatmul.mubr.bf16.gmra.mrb[0].mxu0 %v2925
    %v2961 = vpop.f32.mrb[0].mxu0
    %v2962 = vadd.f32 %v2912, %v2961
    %v2963 = vpop.f32.mrb[0].mxu0
    %v2964 = vpop.f32.mrb[0].mxu0
    %v2965 = vadd.f32 %v2915, %v2964
    %v2966 = vpop.f32.mrb[0].mxu0
    %2967 = vdwg.mxu0
    %v2968 = vadd.f32 %v2962, %v1751
    %v2969 = vadd.f32 %v2965, %v1751
    %v2970 = vsel %vm224, %v2968, 0.0
    %v2971 = vsel %vm224, %v2969, 0.0
    %v2972 = vadd.f32 %v2970, %v2971
    %v2973 = vrot.slane %v2972, 4
    %v2974 = vadd.f32 %v2972, %v2973
    %v2975 = vrot.slane %v2974, 2
    %v2976 = vadd.f32 %v2974, %v2975
    %v2977 = vrot.slane %v2976, 1
    %v2978 = vadd.f32 %v2976, %v2977
    %vm2979 = vcmp.eq.s32.totalorder %v107, 1
    %v2980 = vsel %vm2979, 1, 0
    %vm2981 = vcmp.eq.s32.totalorder %v2980, 1
    %v2982 = vsel %vm2981, %v2978, 0.0
    %v2983 = vadd.f32 %v1768, %v2982
    %v2984 = vld [vmem:[%s16] sm:$0xf]
    %v2985 = vld [vmem:[%s16 + $0x4] sm:$0xf]
    %v2986 = vld [vmem:[%s16 + $0x8] sm:$0xf]
    %v2987 = vld [vmem:[%s16 + $0xc] sm:$0xf]
    %v2988 = vpack.c.bf16 %v2983, %v2983
    %v2989 = vld [vmem:[%s17] sm:$0x1]
    %v2991 = vlaneseq
    %v2992 = vshrl.u32 %v2991, 7
    %v2993 = vsub.s32 0, %v2992
    %v2994 = vrot.slane %v2989, %v2993
    %v3000 = vunpack.c.l.b16 %v2984
    %v3001 = vunpack.c.l.b16 %v2985
    %v3002 = vunpack.c.l.b16 %v2986
    %v3003 = vunpack.c.l.b16 %v2987
    %v3004 = vpack.c.b16 %v3001, %v3000
    %v3005 = vpack.c.b16 %v3003, %v3002
    %v3009 = vsel %vm224, %v2988, 0
    %3011 = vmatprep.subr.bf16.mxu0 0
    %3012 = vmatpush1.bf16.msra.mxu0 %v3004
    %3013 = vmatprep.subr.bf16.mxu0 0
    %3014 = vmatpush1.bf16.msra.mxu0 %v3005
    %3015 = vmatprep.subr.bf16.mxu0 0
    %3016 = vmatpush1.bf16.msra.mxu0 0
    %3017 = vmatprep.subr.bf16.mxu0 0
    %3018 = vmatpush1.bf16.msra.mxu0 0
    %3019 = vmatprep.subr.bf16.mxu0 0
    %3020 = vmatpush1.bf16.msra.mxu0 0
    %3021 = vmatprep.subr.bf16.mxu0 0
    %3022 = vmatpush1.bf16.msra.mxu0 0
    %3023 = vmatprep.subr.bf16.mxu0 0
    %3024 = vmatpush1.bf16.msra.mxu0 0
    %3025 = vmatprep.subr.bf16.mxu0 0
    %3026 = vmatpush1.bf16.msra.mxu0 0
    %3027 = vmatprep.subr.bf16.mxu0 0
    %3028 = vmatpush1.bf16.msra.mxu0 0
    %3029 = vmatprep.subr.bf16.mxu0 0
    %3030 = vmatpush1.bf16.msra.mxu0 0
    %3031 = vmatprep.subr.bf16.mxu0 0
    %3032 = vmatpush1.bf16.msra.mxu0 0
    %3033 = vmatprep.subr.bf16.mxu0 0
    %3034 = vmatpush1.bf16.msra.mxu0 0
    %3035 = vmatprep.subr.bf16.mxu0 0
    %3036 = vmatpush1.bf16.msra.mxu0 0
    %3037 = vmatprep.subr.bf16.mxu0 0
    %3038 = vmatpush1.bf16.msra.mxu0 0
    %3039 = vmatprep.subr.bf16.mxu0 0
    %3040 = vmatpush1.bf16.msra.mxu0 0
    %3041 = vmatprep.subr.bf16.mxu0 0
    %3042 = vmatpush1.bf16.msra.mxu0 0
    %3043 = vmatprep.mubr.bf16.mxu0 0
    %3044 = vmatmul.mubr.bf16.gmra.mrb[0].mxu0 %v3009
    %v3045 = vpop.f32.mrb[0].mxu0
    %v3046 = vadd.f32 %v2994, %v3045
    %v3047 = vpop.f32.mrb[0].mxu0
    %v3048 = vpop.f32.mrb[0].mxu0
    %v3049 = vpop.f32.mrb[0].mxu0
    %3050 = vdwg.mxu0
    %v3051 = vmax.f32 %v3046, 0.0
    %v3052 = vld [vmem:[%s18] sm:$0xf]
    %v3053 = vld [vmem:[%s18 + $0x4] sm:$0xf]
    %v3054 = vld [vmem:[%s18 + $0x8] sm:$0xf]
    %v3055 = vld [vmem:[%s18 + $0xc] sm:$0xf]
    %v3056 = vpack.c.bf16 %v3051, %v3051
    %v3057 = vld [vmem:[%s19] sm:$0x1]
    %v3059 = vlaneseq
    %v3060 = vshrl.u32 %v3059, 7
    %v3061 = vsub.s32 0, %v3060
    %v3062 = vrot.slane %v3057, %v3061
    %v3068 = vunpack.c.l.b16 %v3052
    %v3069 = vunpack.c.l.b16 %v3053
    %v3070 = vunpack.c.l.b16 %v3054
    %v3071 = vunpack.c.l.b16 %v3055
    %v3072 = vpack.c.b16 %v3069, %v3068
    %v3073 = vpack.c.b16 %v3071, %v3070
    %v3077 = vsel %vm224, %v3056, 0
    %3079 = vmatprep.subr.bf16.mxu0 0
    %3080 = vmatpush1.bf16.msra.mxu0 %v3072
    %3081 = vmatprep.subr.bf16.mxu0 0
    %3082 = vmatpush1.bf16.msra.mxu0 %v3073
    %3083 = vmatprep.subr.bf16.mxu0 0
    %3084 = vmatpush1.bf16.msra.mxu0 0
    %3085 = vmatprep.subr.bf16.mxu0 0
    %3086 = vmatpush1.bf16.msra.mxu0 0
    %3087 = vmatprep.subr.bf16.mxu0 0
    %3088 = vmatpush1.bf16.msra.mxu0 0
    %3089 = vmatprep.subr.bf16.mxu0 0
    %3090 = vmatpush1.bf16.msra.mxu0 0
    %3091 = vmatprep.subr.bf16.mxu0 0
    %3092 = vmatpush1.bf16.msra.mxu0 0
    %3093 = vmatprep.subr.bf16.mxu0 0
    %3094 = vmatpush1.bf16.msra.mxu0 0
    %3095 = vmatprep.subr.bf16.mxu0 0
    %3096 = vmatpush1.bf16.msra.mxu0 0
    %3097 = vmatprep.subr.bf16.mxu0 0
    %3098 = vmatpush1.bf16.msra.mxu0 0
    %3099 = vmatprep.subr.bf16.mxu0 0
    %3100 = vmatpush1.bf16.msra.mxu0 0
    %3101 = vmatprep.subr.bf16.mxu0 0
    %3102 = vmatpush1.bf16.msra.mxu0 0
    %3103 = vmatprep.subr.bf16.mxu0 0
    %3104 = vmatpush1.bf16.msra.mxu0 0
    %3105 = vmatprep.subr.bf16.mxu0 0
    %3106 = vmatpush1.bf16.msra.mxu0 0
    %3107 = vmatprep.subr.bf16.mxu0 0
    %3108 = vmatpush1.bf16.msra.mxu0 0
    %3109 = vmatprep.subr.bf16.mxu0 0
    %3110 = vmatpush1.bf16.msra.mxu0 0
    %3111 = vmatprep.mubr.bf16.mxu0 0
    %3112 = vmatmul.mubr.bf16.gmra.mrb[0].mxu0 %v3077
    %v3113 = vpop.f32.mrb[0].mxu0
    %v3114 = vadd.f32 %v3062, %v3113
    %v3115 = vpop.f32.mrb[0].mxu0
    %v3116 = vpop.f32.mrb[0].mxu0
    %v3117 = vpop.f32.mrb[0].mxu0
    %3118 = vdwg.mxu0
    %vm3119 = vcmask 58368
    %v3120 = vsel %vm3119, %v3114, -inf
    %3121 = vmax.xlane.f32.xlu0 %v3120
    %v3122 = vpop.xlane.xlu0 %3121
    %v3123 = vsub.f32 %v3114, %v3122
    %v3124 = vmul.f32 %v3123, 1.442695
    %v3125 = vpow.pop %v3124
    %v3126 = vsel %vm3119, %v3125, 0.0
    %3127 = vadd.xlane.f32.xlu0 %v3126
    %v3128 = vpop.xlane.xlu0 %3127
    %v3129 = vlog2.pop %v3128
    %v3130 = vmul.f32 %v3129, 0.6931472
    %v3131 = vsub.f32 %v3123, %v3130
    %3132 = vst.msk [vmem:[#allocation8] sm:$0x3] %vm3119, %v3131
    %v3133 = vmul.f32 %v2735, 0.5
    %vm3134 = vcmask 0
    %3135 = vst.msk [vmem:[#allocation9] sm:$0x1] %vm3134, %v3133
    %v3136 = vmul.f32 %v2819, 0.5
    %3137 = vst.msk [vmem:[#allocation11] sm:$0x1] %vm3134, %v3136
    // Predicated region
    $region94: #{tpu_custom_call.1} parent=1 // pred_check
      _
    $region95: #{tpu_custom_call.1} parent=1 // pred_check_branch
      %3139 = sbr.rel (0) target = $region97
    $region96: #{tpu_custom_call.1} parent=1 // pred_region
      %s3141 = ssub.s32 32, 32
      %3142 = vsyncadd [#allocation4], %s3141
      %s3144 = sshll.u32 [#allocation8], 4
      %s3145 = int_to_ptr.vmem [resolvable:$true] %s3144
      %3147 = dma.vmem_to_hbm [thread:$0]  %s3145, 32, %s20, [#allocation4]
    $region97: #{tpu_custom_call.1} parent=1 // pred_fallthru
      _
    // Predicated region
    $region98: #{tpu_custom_call.1} parent=1 // pred_check
      _
    $region99: #{tpu_custom_call.1} parent=1 // pred_check_branch
      %3149 = sbr.rel (0) target = $region101
    $region100: #{tpu_custom_call.1} parent=1 // pred_region
      %s3151 = ssub.s32 16, 16
      %3152 = vsyncadd [#allocation10], %s3151
      %s3154 = sshll.u32 [#allocation9], 4
      %s3155 = int_to_ptr.vmem [resolvable:$true] %s3154
      %3157 = dma.vmem_to_hbm [thread:$0]  %s3155, 16, %s21, [#allocation10]
    $region101: #{tpu_custom_call.1} parent=1 // pred_fallthru
      _
    // Predicated region
    $region102: #{tpu_custom_call.1} parent=1 // pred_check
      _
    $region103: #{tpu_custom_call.1} parent=1 // pred_check_branch
      %3159 = sbr.rel (0) target = $region105
    $region104: #{tpu_custom_call.1} parent=1 // pred_region
      %s3161 = ssub.s32 16, 16
      %3162 = vsyncadd [#allocation10], %s3161
      %s3164 = sshll.u32 [#allocation11], 4
      %s3165 = int_to_ptr.vmem [resolvable:$true] %s3164
      %3167 = dma.vmem_to_hbm [thread:$0]  %s3165, 16, %s22, [#allocation10]
    $region105: #{tpu_custom_call.1} parent=1 // pred_fallthru
      _
    // Predicated region
    $region106: #{tpu_custom_call.1} parent=1 // pred_check
      _
    $region107: #{tpu_custom_call.1} parent=1 // pred_check_branch
      %3169 = sbr.rel (0) target = $region109
    $region108: #{tpu_custom_call.1} parent=1 // pred_region
      %3170 = dma.done [#allocation4], 32
    $region109: #{tpu_custom_call.1} parent=1 // pred_fallthru
      _
    // Predicated region
    $region110: #{tpu_custom_call.1} parent=1 // pred_check
      _
    $region111: #{tpu_custom_call.1} parent=1 // pred_check_branch
      %3172 = sbr.rel (0) target = $region113
    $region112: #{tpu_custom_call.1} parent=1 // pred_region
      %3173 = dma.done [#allocation10], 16
    $region113: #{tpu_custom_call.1} parent=1 // pred_fallthru
      _
    // Predicated region
    $region114: #{tpu_custom_call.1} parent=1 // pred_check
      _
    $region115: #{tpu_custom_call.1} parent=1 // pred_check_branch
      %3175 = sbr.rel (0) target = $region117
    $region116: #{tpu_custom_call.1} parent=1 // pred_region
      %3176 = dma.done [#allocation10], 16
    $region117: #{tpu_custom_call.1} parent=1 // pred_fallthru
      _
    %3177 = vsyncpa [#allocation3], 1
    %3178 = vsyncpa [#allocation6], 1
    %3179 = vsyncpa [#allocation4], 1
    %3180 = vsyncpa [#allocation10], 1

</llo_original>
